<compile_context>
chip_gen: v5e
topology: v5e:2x2
jax: 0.10.0
libtpu: 0.0.40
codegen_flags: <defaults>
</compile_context>

<pallas_src>
import functools
import math

import jax
import jax.numpy as jnp
import numpy as np
from jax import lax
from jax.experimental import pallas as pl
from jax.experimental.pallas import tpu as pltpu


# ----------------------------- RoPE tables (plain JAX glue) -------------------
def precompute_rope_params(head_dim, theta_base=10000.0, context_length=4096):
    assert head_dim % 2 == 0, "Head dimension must be even"
    inv_freq = 1.0 / theta_base ** (
        jnp.arange(0, head_dim, 2)[: head_dim // 2].astype(jnp.float32) / head_dim
    )
    positions = jnp.arange(context_length, dtype=jnp.float32)
    angles = positions[:, None] * inv_freq[None, :]
    angles = jnp.concatenate([angles, angles], axis=1)
    return jnp.cos(angles), jnp.sin(angles)


# ----------------------------- Kernel 1: fused QKV + RoPE ---------------------
def qkv_rope_kernel(x_ref, w_ref, cos_ref, sinp_ref, sinn_ref, qkv_ref,
                    *, half, width):
    x = x_ref[0]                                   # (rows, d_in)   bf16
    qkv = jnp.dot(x, w_ref[...],
                  preferred_element_type=jnp.float32)  # (rows, 3*d_out) f32

    cos = cos_ref[...]                             # q-section pre-scaled, v-section = 1
    sin_p = sinp_ref[...]                          # sin on each head's 2nd half, else 0
    sin_n = sinn_ref[...]                          # -sin on each head's 1st half, else 0

    # rotate-half per head expressed as two full-width XLU rolls; cross-head /
    # cross-section wraparound positions are zeroed by the sign-folded sins,
    # and the V section has sin == 0, cos == 1 (RoPE is a no-op there).
    fwd = pltpu.roll(qkv, shift=half, axis=1)          # qkv[:, i - half]
    bwd = pltpu.roll(qkv, shift=width - half, axis=1)  # qkv[:, i + half]
    out = qkv * cos + fwd * sin_p + bwd * sin_n

    qkv_ref[0] = out.astype(qkv_ref.dtype)


# ----------------------------- Kernel 2: flash attention ----------------------
def flash_attn_kernel(q_ref, k_ref, v_ref, o_ref, m_sc, l_sc, acc_sc,
                      *, block_q, block_k):
    qi = pl.program_id(2)
    ki = pl.program_id(3)

    q_first = qi * block_q
    q_last = q_first + (block_q - 1)
    k_first = ki * block_k
    k_last = k_first + (block_k - 1)

    @pl.when(ki == 0)
    def _init():
        m_sc[...] = jnp.full(m_sc.shape, -jnp.inf, jnp.float32)
        l_sc[...] = jnp.zeros(l_sc.shape, jnp.float32)
        acc_sc[...] = jnp.zeros(acc_sc.shape, jnp.float32)

    def update(masked):
        q = q_ref[0]                   # (bq, hd) bf16, pre-scaled by 1/sqrt(hd)
        k = k_ref[0]                   # (bk, hd) bf16
        v = v_ref[0]                   # (bk, hd) bf16

        # q @ k^T without an explicit transpose.
        s = lax.dot_general(q, k, (((1,), (1,)), ((), ())),
                            preferred_element_type=jnp.float32)   # (bq, bk) f32
        if masked:
            row = q_first + lax.broadcasted_iota(jnp.int32, s.shape, 0)
            col = k_first + lax.broadcasted_iota(jnp.int32, s.shape, 1)
            s = s + jnp.where(col > row, -1e30, 0.0)   # additive finite mask

        m_prev = m_sc[...]
        m_new = jnp.maximum(m_prev, s.max(axis=-1, keepdims=True))
        alpha = jnp.exp(m_prev - m_new)
        p = jnp.exp(s - m_new)
        l_sc[...] = alpha * l_sc[...] + p.sum(axis=-1, keepdims=True)
        acc_sc[...] = alpha * acc_sc[...] + jnp.dot(
            p.astype(v.dtype), v, preferred_element_type=jnp.float32)
        m_sc[...] = m_new

    # Tiles that intersect the causal diagonal need the mask arithmetic.
    @pl.when(jnp.logical_and(k_first <= q_last, k_last > q_first))
    def _diag():
        update(masked=True)

    # Tiles fully below the diagonal: skip the iota/compare/select entirely.
    @pl.when(k_last <= q_first)
    def _below():
        update(masked=False)

    # Tiles fully above the diagonal contribute nothing (and their K/V DMAs
    # are elided by the clamped index_maps in the wrapper).

    @pl.when(ki == pl.num_programs(3) - 1)
    def _finalize():
        inv_l = pl.reciprocal(l_sc[...], approx=True)
        o_ref[0] = (acc_sc[...] * inv_l).astype(o_ref.dtype)


# ----------------------------- Kernel 3: output projection --------------------
def out_proj_kernel(ctx_ref, wo_ref, o_ref):
    o_ref[0] = jnp.dot(ctx_ref[0], wo_ref[...],
                       preferred_element_type=jnp.float32).astype(o_ref.dtype)


# ----------------------------- wrapper ----------------------------------------
def multi_headed_attention(x, wq_t, wk_t, wv_t, wo_t, cos, sin, *, num_heads,
                           block_q=256, block_k=256, proj_rows=256,
                           compute_dtype=jnp.bfloat16,
                           vmem_limit_bytes=48 * 1024 * 1024):
    """x: (B, S, d_in); w*_t: (d_in, d_out) pre-transposed Linear weights."""
    B, S, d_in = x.shape
    d_out = wq_t.shape[1]
    head_dim = d_out // num_heads
    half = head_dim // 2
    width = 3 * d_out

    # Per-head lane-aligned windows into the fused QKV buffer require a
    # 128-multiple head_dim (true for llama-style models).
    assert head_dim % 128 == 0, "head_dim must be a multiple of 128"

    block_q = min(block_q, S)
    block_k = min(block_k, S)
    proj_rows = min(proj_rows, S)
    assert S % block_q == 0 and S % block_k == 0 and S % proj_rows == 0, \
        "S must divide the tile sizes"
    nq, nk, nr = S // block_q, S // block_k, S // proj_rows

    scale = 1.0 / math.sqrt(head_dim)

    # RoPE tables extended to the fused (q|k|v) width with the rotate-half sign
    # folded in; the 1/sqrt(head_dim) scale is folded into the q section and
    # the v section is the identity (cos=1, sin=0).
    cos_s = cos[:S].astype(jnp.float32)
    sin_s = sin[:S].astype(jnp.float32)
    first = (jnp.arange(head_dim) < half)[None, :]
    sinp_h = jnp.where(first, 0.0, sin_s)       # sin on second half of each head
    sinn_h = jnp.where(first, -sin_s, 0.0)      # -sin on first half of each head
    tile_h = lambda t: jnp.tile(t, (1, num_heads))
    ones_v = jnp.ones((S, d_out), jnp.float32)
    zeros_v = jnp.zeros((S, d_out), jnp.float32)
    cos_full = jnp.concatenate([tile_h(cos_s) * scale, tile_h(cos_s), ones_v], axis=1)
    sinp_full = jnp.concatenate([tile_h(sinp_h) * scale, tile_h(sinp_h), zeros_v], axis=1)
    sinn_full = jnp.concatenate([tile_h(sinn_h) * scale, tile_h(sinn_h), zeros_v], axis=1)

    # bf16 MXU operands; RoPE / softmax / accumulation stay f32.
    xc = x.astype(compute_dtype)
    w_qkv = jnp.concatenate([wq_t, wk_t, wv_t], axis=1).astype(compute_dtype)
    wo = wo_t.astype(compute_dtype)

    cparams = lambda sem: pltpu.CompilerParams(
        dimension_semantics=sem, vmem_limit_bytes=vmem_limit_bytes)

    # ---- Stage A: fused QKV projection + RoPE ---------------------------------
    # Grid is (row_tiles, batch) so the RoPE tables (block index (i, 0)) keep
    # the same block across the inner batch axis -> their DMA is elided.
    qkv = pl.pallas_call(
        functools.partial(qkv_rope_kernel, half=half, width=width),
        out_shape=jax.ShapeDtypeStruct((B, S, width), compute_dtype),
        grid=(nr, B),
        in_specs=[
            pl.BlockSpec((1, proj_rows, d_in), lambda i, b: (b, i, 0)),
            pl.BlockSpec((d_in, width), lambda i, b: (0, 0),
                         pipeline_mode=pl.Buffered(1)),       # resident weight
            pl.BlockSpec((proj_rows, width), lambda i, b: (i, 0)),
            pl.BlockSpec((proj_rows, width), lambda i, b: (i, 0)),
            pl.BlockSpec((proj_rows, width), lambda i, b: (i, 0)),
        ],
        out_specs=pl.BlockSpec((1, proj_rows, width), lambda i, b: (b, i, 0)),
        compiler_params=cparams(("parallel", "parallel")),
    )(xc, w_qkv, cos_full, sinp_full, sinn_full)

    # ---- Stage B: tiled causal flash attention --------------------------------
    # Q/K/V are read directly from the (B, S, 3*d_out) buffer as per-head
    # 128-lane windows; output is written directly in (B, S, d_out) layout.
    # K/V block indices are clamped to the causal diagonal so above-diagonal
    # tiles repeat the previous block index and their DMA is elided.
    def q_map(b, h, i, j):
        return (b, i, h)

    def kv_max(i):
        return (i * block_q + block_q - 1) // block_k

    def k_map(b, h, i, j):
        return (b, jnp.minimum(j, kv_max(i)), num_heads + h)

    def v_map(b, h, i, j):
        return (b, jnp.minimum(j, kv_max(i)), 2 * num_heads + h)

    ctx = pl.pallas_call(
        functools.partial(flash_attn_kernel, block_q=block_q, block_k=block_k),
        out_shape=jax.ShapeDtypeStruct((B, S, d_out), compute_dtype),
        grid=(B, num_heads, nq, nk),
        in_specs=[
            pl.BlockSpec((1, block_q, head_dim), q_map),
            pl.BlockSpec((1, block_k, head_dim), k_map),
            pl.BlockSpec((1, block_k, head_dim), v_map),
        ],
        out_specs=pl.BlockSpec((1, block_q, head_dim),
                               lambda b, h, i, j: (b, i, h)),
        scratch_shapes=[
            pltpu.VMEM((block_q, 1), jnp.float32),          # running max m
            pltpu.VMEM((block_q, 1), jnp.float32),          # running sum l
            pltpu.VMEM((block_q, head_dim), jnp.float32),   # accumulator
        ],
        compiler_params=cparams(("parallel", "parallel", "parallel", "arbitrary")),
    )(qkv, qkv, qkv)

    # ---- Stage C: output projection -------------------------------------------
    out = pl.pallas_call(
        out_proj_kernel,
        out_shape=jax.ShapeDtypeStruct((B, S, d_out), x.dtype),
        grid=(nr, B),
        in_specs=[
            pl.BlockSpec((1, proj_rows, d_out), lambda i, b: (b, i, 0)),
            pl.BlockSpec((d_out, d_out), lambda i, b: (0, 0),
                         pipeline_mode=pl.Buffered(1)),       # resident weight
        ],
        out_specs=pl.BlockSpec((1, proj_rows, d_out), lambda i, b: (b, i, 0)),
        compiler_params=cparams(("parallel", "parallel")),
    )(ctx, wo)

    return out


# ----------------------------- pure-JAX reference (f32) -----------------------
def ref_forward(x, wq_t, wk_t, wv_t, wo_t, cos, sin, *, num_heads):
    B, S, d_in = x.shape
    d_out = wq_t.shape[1]
    hd = d_out // num_heads

    def rope4(t):
        x1 = t[..., : hd // 2]
        x2 = t[..., hd // 2:]
        rot = jnp.concatenate([-x2, x1], axis=-1)
        c = cos[:S, :][None, None]
        s = sin[:S, :][None, None]
        return t * c + rot * s

    q = (x @ wq_t).reshape(B, S, num_heads, hd).transpose(0, 2, 1, 3)
    k = (x @ wk_t).reshape(B, S, num_heads, hd).transpose(0, 2, 1, 3)
    v = (x @ wv_t).reshape(B, S, num_heads, hd).transpose(0, 2, 1, 3)
    q = rope4(q)
    k = rope4(k)
    scores = jnp.einsum("bhqd,bhkd->bhqk", q, k)
    mask = jnp.triu(jnp.ones((S, S), dtype=bool), k=1)
    scores = jnp.where(mask[None, None], -jnp.inf, scores)
    w = jax.nn.softmax(scores / jnp.sqrt(jnp.float32(hd)), axis=-1)
    ctx = jnp.einsum("bhqk,bhkd->bhqd", w, v).transpose(0, 2, 1, 3).reshape(B, S, d_out)
    return ctx @ wo_t


# ----------------------------- main --------------------------------------------
if __name__ == "__main__":
    # Lane/sublane-aligned small shapes (head_dim = 128, S a multiple of the
    # 256-wide tiles) so the kernel exercises real TPU layouts and the
    # multi-tile causal paths (nq = nk = 2 with 256-wide attention tiles).
    B, S, d_in, d_out, num_heads = 2, 512, 128, 256, 2
    context_length = 1024

    key = jax.random.PRNGKey(0)
    kx, kq, kk, kv, ko = jax.random.split(key, 5)
    x = jax.random.normal(kx, (B, S, d_in), dtype=jnp.float32)
    # nn.Linear(d_in, d_out) weights are (d_out, d_in); store them transposed.
    wq_t = (0.02 * jax.random.normal(kq, (d_out, d_in), dtype=jnp.float32)).T
    wk_t = (0.02 * jax.random.normal(kk, (d_out, d_in), dtype=jnp.float32)).T
    wv_t = (0.02 * jax.random.normal(kv, (d_out, d_in), dtype=jnp.float32)).T
    wo_t = (0.02 * jax.random.normal(ko, (d_out, d_out), dtype=jnp.float32)).T

    cos, sin = precompute_rope_params(head_dim=d_out // num_heads,
                                      context_length=context_length)

    out = multi_headed_attention(x, wq_t, wk_t, wv_t, wo_t, cos, sin,
                                 num_heads=num_heads)
    out = jax.block_until_ready(out)

    ref = jax.block_until_ready(
        ref_forward(x, wq_t, wk_t, wv_t, wo_t, cos, sin, num_heads=num_heads))
    # bf16 MXU operands -> compare against the f32 reference with bf16 tolerance.
    np.testing.assert_allclose(np.asarray(out), np.asarray(ref),
                               rtol=5e-2, atol=2e-3)

    print("KERNEL_OK")
</pallas_src>

<mosaic_0001>
module attributes {stable_mosaic.version = 11 : i64} {
  func.func @qkv_rope_kernel(%arg0: i32, %arg1: i32, %arg2: memref<1x256x128xbf16, #tpu.memory_space<vmem>>, %arg3: memref<128x768xbf16, #tpu.memory_space<vmem>>, %arg4: memref<256x768xf32, #tpu.memory_space<vmem>>, %arg5: memref<256x768xf32, #tpu.memory_space<vmem>>, %arg6: memref<256x768xf32, #tpu.memory_space<vmem>>, %arg7: memref<1x256x768xbf16, #tpu.memory_space<vmem>>) attributes {dimension_semantics = [#tpu.dimension_semantics<parallel>, #tpu.dimension_semantics<parallel>], iteration_bounds = array<i64: 2, 2>, scalar_prefetch = 0 : i64, scratch_operands = 0 : i64, tpu.core_type = #tpu.core_type<tc>, window_params = [{transform_indices = @transform_0, window_bounds = array<i64: 1, 256, 128>}, {pipeline_mode = #tpu.pipeline_mode<synchronous>, transform_indices = @transform_1, window_bounds = array<i64: 128, 768>}, {transform_indices = @transform_2, window_bounds = array<i64: 256, 768>}, {transform_indices = @transform_3, window_bounds = array<i64: 256, 768>}, {transform_indices = @transform_4, window_bounds = array<i64: 256, 768>}, {transform_indices = @transform_5, window_bounds = array<i64: 1, 256, 768>}]} {
    %c0 = arith.constant 0 : index
    %c0_0 = arith.constant 0 : index
    %c0_1 = arith.constant 0 : index
    %0 = vector.load %arg2[%c0, %c0_0, %c0_1] : memref<1x256x128xbf16, #tpu.memory_space<vmem>>, vector<1x256x128xbf16>
    %1 = vector.shape_cast %0 : vector<1x256x128xbf16> to vector<256x128xbf16>
    %c0_2 = arith.constant 0 : index
    %c0_3 = arith.constant 0 : index
    %2 = vector.load %arg3[%c0_2, %c0_3] : memref<128x768xbf16, #tpu.memory_space<vmem>>, vector<128x768xbf16>
    %cst = arith.constant dense<0.000000e+00> : vector<256x768xf32>
    %3 = tpu.matmul %1, %2, %cst {dimension_numbers = #tpu.dot_dimension_numbers<[1], [0], [0], [1], [0, 0, 1, 1], [], []>} : vector<256x128xbf16>, vector<128x768xbf16>, vector<256x768xf32> -> vector<256x768xf32>
    %c0_4 = arith.constant 0 : index
    %c0_5 = arith.constant 0 : index
    %4 = vector.load %arg4[%c0_4, %c0_5] : memref<256x768xf32, #tpu.memory_space<vmem>>, vector<256x768xf32>
    %c0_6 = arith.constant 0 : index
    %c0_7 = arith.constant 0 : index
    %5 = vector.load %arg5[%c0_6, %c0_7] : memref<256x768xf32, #tpu.memory_space<vmem>>, vector<256x768xf32>
    %c0_8 = arith.constant 0 : index
    %c0_9 = arith.constant 0 : index
    %6 = vector.load %arg6[%c0_8, %c0_9] : memref<256x768xf32, #tpu.memory_space<vmem>>, vector<256x768xf32>
    %c64_i32 = arith.constant 64 : i32
    %7 = tpu.dynamic_rotate %3 by %c64_i32 dim 1 : vector<256x768xf32>, i32 -> vector<256x768xf32>
    %c704_i32 = arith.constant 704 : i32
    %8 = tpu.dynamic_rotate %3 by %c704_i32 dim 1 : vector<256x768xf32>, i32 -> vector<256x768xf32>
    %9 = arith.mulf %3, %4 : vector<256x768xf32>
    %10 = arith.mulf %7, %5 : vector<256x768xf32>
    %11 = arith.addf %9, %10 : vector<256x768xf32>
    %12 = arith.mulf %8, %6 : vector<256x768xf32>
    %13 = arith.addf %11, %12 : vector<256x768xf32>
    %14 = arith.truncf %13 : vector<256x768xf32> to vector<256x768xbf16>
    %c0_10 = arith.constant 0 : index
    %c0_11 = arith.constant 0 : index
    %c0_12 = arith.constant 0 : index
    %15 = vector.load %arg7[%c0_10, %c0_11, %c0_12] : memref<1x256x768xbf16, #tpu.memory_space<vmem>>, vector<1x256x768xbf16>
    %16 = vector.shape_cast %15 : vector<1x256x768xbf16> to vector<256x768xbf16>
    %17 = vector.shape_cast %14 : vector<256x768xbf16> to vector<1x256x768xbf16>
    tpu.vector_store %arg7[%c0_10, %c0_11, %c0_12], %17 {strides = array<i32>} : memref<1x256x768xbf16, #tpu.memory_space<vmem>>, vector<1x256x768xbf16>,
    return
  }
  func.func @transform_0(%arg0: i32, %arg1: i32) -> (i32, i32, i32) {
    %c0_i32 = arith.constant 0 : i32
    %c0_i32_0 = arith.constant 0 : i32
    return %arg1, %arg0, %c0_i32 : i32, i32, i32
  }
  func.func @transform_1(%arg0: i32, %arg1: i32) -> (i32, i32) {
    %c0_i32 = arith.constant 0 : i32
    %c0_i32_0 = arith.constant 0 : i32
    %c0_i32_1 = arith.constant 0 : i32
    return %c0_i32, %c0_i32_0 : i32, i32
  }
  func.func @transform_2(%arg0: i32, %arg1: i32) -> (i32, i32) {
    %c0_i32 = arith.constant 0 : i32
    %c0_i32_0 = arith.constant 0 : i32
    return %arg0, %c0_i32 : i32, i32
  }
  func.func @transform_3(%arg0: i32, %arg1: i32) -> (i32, i32) {
    %c0_i32 = arith.constant 0 : i32
    %c0_i32_0 = arith.constant 0 : i32
    return %arg0, %c0_i32 : i32, i32
  }
  func.func @transform_4(%arg0: i32, %arg1: i32) -> (i32, i32) {
    %c0_i32 = arith.constant 0 : i32
    %c0_i32_0 = arith.constant 0 : i32
    return %arg0, %c0_i32 : i32, i32
  }
  func.func @transform_5(%arg0: i32, %arg1: i32) -> (i32, i32, i32) {
    %c0_i32 = arith.constant 0 : i32
    %c0_i32_0 = arith.constant 0 : i32
    return %arg1, %arg0, %c0_i32 : i32, i32, i32
  }
}

</mosaic_0001>

<llo_original>
// kernel: tpu_custom_call.1
$region0: #{tpu_custom_call.1}
  #allocation0 [shape = 'u32[]', space=smem, size = 0x4, offset = 0x4, fixed_abs, tag = 'smem constant byte address 0x4 - core index']
  #allocation1 [shape = 'u32[72,128]{1,0:T(1,128)}', space=vmem, size = 0x9000, scoped, tag = 'internal scratch']
  %s0 = inlined_call_operand.hbm [shape: bf16[2,512,128], index: 0, kind: input, shape index: {}]
  %s1 = inlined_call_operand.hbm [shape: bf16[128,768], index: 1, kind: input, shape index: {}]
  %s2 = inlined_call_operand.hbm [shape: f32[512,768], index: 2, kind: input, shape index: {}]
  %s3 = inlined_call_operand.hbm [shape: f32[512,768], index: 3, kind: input, shape index: {}]
  %s4 = inlined_call_operand.hbm [shape: f32[512,768], index: 4, kind: input, shape index: {}]
  %s5 = inlined_call_operand.hbm [shape: bf16[2,512,768], index: 5, kind: output, shape index: {}]
  %s6 = sld [smem:[#allocation0]]
  $region73: #{tpu_custom_call.1} parent=0
    _
  %s8 = ssub.s32 1, %s6
  %s9 = scalar_select 0, %s8, %s6
  $region1: #{tpu_custom_call.1} parent=0
    #allocation2 [shape = 'u8[131072]{0}', space=vmem, size = 0x20000, scoped, tag = 'input window, operand 0']
    #allocation3 [shape = 's32[2]{0}', space=sflag, size = 0x8, scoped, tag = 'scoped memory for tpu_custom_call.1']
    #allocation4 [shape = 's32[2]{0}', space=sflag, size = 0x8, scoped, tag = 'scoped memory for tpu_custom_call.1']
    #allocation5 [shape = 'u8[196608]{0}', space=vmem, size = 0x30000, scoped, tag = 'input window, operand 1, single buffered']
    #allocation6 [shape = 's32[1]{0}', space=sflag, size = 0x4, scoped, tag = 'scoped memory for tpu_custom_call.1']
    #allocation7 [shape = 'u8[1572864]{0}', space=vmem, size = 0x180000, scoped, tag = 'input window, operand 2']
    #allocation8 [shape = 'u8[1572864]{0}', space=vmem, size = 0x180000, scoped, tag = 'input window, operand 3']
    #allocation9 [shape = 'u8[1572864]{0}', space=vmem, size = 0x180000, scoped, tag = 'input window, operand 4']
    #allocation10 [shape = 'u8[786432]{0}', space=vmem, size = 0xc0000, scoped, tag = 'output window, operand 0']
    %10 = vsyncpa [#allocation3], 0
    %s11 = scalar_lea.sflag [#allocation3], 1
    %12 = vsyncpa %s11, 0
    %13 = vsyncpa [#allocation6], 0
    %14 = vsyncpa [#allocation4], 0
    %s15 = scalar_lea.sflag [#allocation4], 1
    %16 = vsyncpa %s15, 0
    loop: start=0, step=1, limit=6
    $region2: #{tpu_custom_call.1} parent=1 // loop_pre_header
      _
    $region3: #{tpu_custom_call.1} parent=1 // loop_header
      %s18 = sphi 0, %s22
      %p19 = scmp.ge.s32.totalorder %s18, 6
      %s25 = sphi 0, %s37
      %s26 = sphi 0, %s33
      %s27 = sphi 0, %s25
      %s28 = sphi 0, %s26
      %s29 = sphi 0, %s27
      %s30 = sphi 0, %s28
      %s42 = sphi 0, %s44
      %s45 = sphi 0, %s42
      %s46 = sphi 0, %s45
      %s62 = sphi 0, %s46
      %s66 = sphi 0, %s66
      %s68 = sphi 0, %s66
      %s69 = sphi 0, %s68
      %s83 = sphi 0, %s69
      %s89 = sphi 0, %s91
      %s92 = sphi 0, %s89
      %s93 = sphi 0, %s92
      %s109 = sphi 0, %s93
      %s115 = sphi 0, %s117
      %s118 = sphi 0, %s115
      %s119 = sphi 0, %s118
      %s135 = sphi 0, %s119
      %s141 = sphi 0, %s143
      %s144 = sphi 0, %s141
      %s145 = sphi 0, %s144
      %s161 = sphi 0, %s145
      %s169 = sphi 0, %s171
      %s172 = sphi 0, %s169
      %s173 = sphi 0, %s172
      %s189 = sphi 0, %s173
    $region4: #{tpu_custom_call.1} parent=1 // loop_header_branch
      %21 = sbr.rel (%p19) target = $region8
    $region5: #{tpu_custom_call.1} parent=1 // loop_body
      %s23 = ssub.s32 %s18, 1
      %s24 = ssub.s32 %s18, 2
      %s31 = sadd.s32 1, %s26
      %p32 = scmp.ge.s32.totalorder %s31, 2
      %s33 = scalar_select %p32, 0, %s31
      %s34 = sadd.s32 1, %s25
      %s35 = scalar_select %p32, %s34, %s25
      %p36 = scmp.ge.s32.totalorder %s35, 2
      %s37 = scalar_select %p36, 0, %s35
      %s38 = ssub.s32 %s26, %s33
      %s39 = ssub.s32 %s25, %s37
      %s40 = sor.u32 %s38, %s39
      %p41 = scmp.eq.s32.totalorder %s40, 0
      %s43 = sadd.s32 %s42, 1
      %s44 = scalar_select %p41, %s42, %s43
      %p47 = pneg %p41
      %p48 = scmp.eq.s32.totalorder %s18, 3
      %p49 = por %p47, %p48
      %p50 = scmp.ne.s32.totalorder %s42, %s45
      %p51 = scmp.eq.s32.totalorder %s18, 0
      %p52 = por %p50, %p51
      %p53 = scmp.ne.s32.totalorder %s42, %s45
      %p54 = scmp.eq.s32.totalorder %s23, 3
      %p55 = por %p53, %p54
      %p56 = scmp.ne.s32.totalorder %s45, %s46
      %p57 = scmp.eq.s32.totalorder %s23, 0
      %p58 = por %p56, %p57
      %p59 = scmp.ne.s32.totalorder %s45, %s46
      %p60 = scmp.eq.s32.totalorder %s24, 3
      %p61 = por %p59, %p60
      %p63 = scmp.ne.s32.totalorder %s46, %s62
      %p64 = scmp.eq.s32.totalorder %s24, 0
      %p65 = por %p63, %p64
      %s67 = sadd.s32 %s66, 1
      %p70 = scmp.eq.s32.totalorder %s18, 3
      %p71 = scmp.ne.s32.totalorder %s66, %s68
      %p72 = scmp.eq.s32.totalorder %s18, 0
      %p73 = por %p71, %p72
      %p74 = scmp.ne.s32.totalorder %s66, %s68
      %p75 = scmp.eq.s32.totalorder %s23, 3
      %p76 = por %p74, %p75
      %p77 = scmp.ne.s32.totalorder %s68, %s69
      %p78 = scmp.eq.s32.totalorder %s23, 0
      %p79 = por %p77, %p78
      %p80 = scmp.ne.s32.totalorder %s68, %s69
      %p81 = scmp.eq.s32.totalorder %s24, 3
      %p82 = por %p80, %p81
      %p84 = scmp.ne.s32.totalorder %s69, %s83
      %p85 = scmp.eq.s32.totalorder %s24, 0
      %p86 = por %p84, %p85
      %s87 = ssub.s32 %s25, %s37
      %p88 = scmp.eq.s32.totalorder %s87, 0
      %s90 = sadd.s32 %s89, 1
      %s91 = scalar_select %p88, %s89, %s90
      %p94 = pneg %p88
      %p95 = scmp.eq.s32.totalorder %s18, 3
      %p96 = por %p94, %p95
      %p97 = scmp.ne.s32.totalorder %s89, %s92
      %p98 = scmp.eq.s32.totalorder %s18, 0
      %p99 = por %p97, %p98
      %p100 = scmp.ne.s32.totalorder %s89, %s92
      %p101 = scmp.eq.s32.totalorder %s23, 3
      %p102 = por %p100, %p101
      %p103 = scmp.ne.s32.totalorder %s92, %s93
      %p104 = scmp.eq.s32.totalorder %s23, 0
      %p105 = por %p103, %p104
      %p106 = scmp.ne.s32.totalorder %s92, %s93
      %p107 = scmp.eq.s32.totalorder %s24, 3
      %p108 = por %p106, %p107
      %p110 = scmp.ne.s32.totalorder %s93, %s109
      %p111 = scmp.eq.s32.totalorder %s24, 0
      %p112 = por %p110, %p111
      %s113 = ssub.s32 %s25, %s37
      %p114 = scmp.eq.s32.totalorder %s113, 0
      %s116 = sadd.s32 %s115, 1
      %s117 = scalar_select %p114, %s115, %s116
      %p120 = pneg %p114
      %p121 = scmp.eq.s32.totalorder %s18, 3
      %p122 = por %p120, %p121
      %p123 = scmp.ne.s32.totalorder %s115, %s118
      %p124 = scmp.eq.s32.totalorder %s18, 0
      %p125 = por %p123, %p124
      %p126 = scmp.ne.s32.totalorder %s115, %s118
      %p127 = scmp.eq.s32.totalorder %s23, 3
      %p128 = por %p126, %p127
      %p129 = scmp.ne.s32.totalorder %s118, %s119
      %p130 = scmp.eq.s32.totalorder %s23, 0
      %p131 = por %p129, %p130
      %p132 = scmp.ne.s32.totalorder %s118, %s119
      %p133 = scmp.eq.s32.totalorder %s24, 3
      %p134 = por %p132, %p133
      %p136 = scmp.ne.s32.totalorder %s119, %s135
      %p137 = scmp.eq.s32.totalorder %s24, 0
      %p138 = por %p136, %p137
      %s139 = ssub.s32 %s25, %s37
      %p140 = scmp.eq.s32.totalorder %s139, 0
      %s142 = sadd.s32 %s141, 1
      %s143 = scalar_select %p140, %s141, %s142
      %p146 = pneg %p140
      %p147 = scmp.eq.s32.totalorder %s18, 3
      %p148 = por %p146, %p147
      %p149 = scmp.ne.s32.totalorder %s141, %s144
      %p150 = scmp.eq.s32.totalorder %s18, 0
      %p151 = por %p149, %p150
      %p152 = scmp.ne.s32.totalorder %s141, %s144
      %p153 = scmp.eq.s32.totalorder %s23, 3
      %p154 = por %p152, %p153
      %p155 = scmp.ne.s32.totalorder %s144, %s145
      %p156 = scmp.eq.s32.totalorder %s23, 0
      %p157 = por %p155, %p156
      %p158 = scmp.ne.s32.totalorder %s144, %s145
      %p159 = scmp.eq.s32.totalorder %s24, 3
      %p160 = por %p158, %p159
      %p162 = scmp.ne.s32.totalorder %s145, %s161
      %p163 = scmp.eq.s32.totalorder %s24, 0
      %p164 = por %p162, %p163
      %s165 = ssub.s32 %s26, %s33
      %s166 = ssub.s32 %s25, %s37
      %s167 = sor.u32 %s165, %s166
      %p168 = scmp.eq.s32.totalorder %s167, 0
      %s170 = sadd.s32 %s169, 1
      %s171 = scalar_select %p168, %s169, %s170
      %p174 = pneg %p168
      %p175 = scmp.eq.s32.totalorder %s18, 3
      %p176 = por %p174, %p175
      %p177 = scmp.ne.s32.totalorder %s169, %s172
      %p178 = scmp.eq.s32.totalorder %s18, 0
      %p179 = por %p177, %p178
      %p180 = scmp.ne.s32.totalorder %s169, %s172
      %p181 = scmp.eq.s32.totalorder %s23, 3
      %p182 = por %p180, %p181
      %p183 = scmp.ne.s32.totalorder %s172, %s173
      %p184 = scmp.eq.s32.totalorder %s23, 0
      %p185 = por %p183, %p184
      %p186 = scmp.ne.s32.totalorder %s172, %s173
      %p187 = scmp.eq.s32.totalorder %s24, 3
      %p188 = por %p186, %p187
      %p190 = scmp.ne.s32.totalorder %s173, %s189
      %p191 = scmp.eq.s32.totalorder %s24, 0
      %p192 = por %p190, %p191
      %p193 = scmp.le.s32.totalorder 1, %s18
      %p194 = scmp.lt.s32.totalorder %s18, 5
      %p195 = pnand %p193, %p194
      %p196 = pneg %p195
      // Predicated region
      $region9: #{tpu_custom_call.1} parent=5 // pred_check
        _
      $region10: #{tpu_custom_call.1} parent=5 // pred_check_branch
        %198 = sbr.rel (%p195) target = $region12
      $region11: #{tpu_custom_call.1} parent=5 // pred_region
        %s199 = ssub.s32 %s18, 1
        // Predicated region
        $region13: #{tpu_custom_call.1} parent=11 // pred_check
          %p200 = pneg %p79
        $region14: #{tpu_custom_call.1} parent=11 // pred_check_branch
          %202 = sbr.rel (%p200) target = $region16
        $region15: #{tpu_custom_call.1} parent=11 // pred_region
          %204 = vsyncadd [#allocation6], 0
          %s205 = sshll.u32 %s1, 4
          %s206 = int_to_ptr.hbm [resolvable:$true] %s205
          %s207 = sshll.u32 [#allocation5], 4
          %s208 = int_to_ptr.vmem [resolvable:$true] %s207
          %213 = dma.hbm_to_vmem [thread:$0]  %s206, 6144, %s208, [#allocation6], 384, 384, 24
        $region16: #{tpu_custom_call.1} parent=11 // pred_fallthru
          _
      $region12: #{tpu_custom_call.1} parent=5 // pred_fallthru
        _
      %p214 = scmp.lt.s32.totalorder %s18, 4
      // Predicated region
      $region17: #{tpu_custom_call.1} parent=5 // pred_check
        %p215 = pneg %p214
      $region18: #{tpu_custom_call.1} parent=5 // pred_check_branch
        %217 = sbr.rel (%p215) target = $region20
      $region19: #{tpu_custom_call.1} parent=5 // pred_region
        // Predicated region
        $region21: #{tpu_custom_call.1} parent=19 // pred_check
          %p218 = pneg %p52
        $region22: #{tpu_custom_call.1} parent=19 // pred_check_branch
          %220 = sbr.rel (%p218) target = $region24
        $region23: #{tpu_custom_call.1} parent=19 // pred_region
          %s221 = sand.u32 %s18, 1
          %s222 = scalar_lea.sflag [#allocation3], %s221
          %s223 = sand.u32 %s42, 1
          %s224 = smul.addr %s223, 128
          %s225 = scalar_lea.vmem [#allocation2], %s224
          %s226 = smul.u32 32, %s25
          %228 = vsyncadd %s222, 0
          %s229 = smul.addr %s26, 64
          %s230 = sadd.s32 %s226, %s229
          %s231 = smul.addr %s230, 4
          %s232 = scalar_lea.hbm %s0, %s231
          %s233 = sshll.u32 %s232, 4
          %s234 = int_to_ptr.hbm [resolvable:$true] %s233
          %s235 = sshll.u32 %s225, 4
          %s236 = int_to_ptr.vmem [resolvable:$true] %s235
          %241 = dma.hbm_to_vmem [thread:$0]  %s234, 2048, %s236, %s222, 64, 64, 4
        $region24: #{tpu_custom_call.1} parent=19 // pred_fallthru
          _
        // Predicated region
        $region25: #{tpu_custom_call.1} parent=19 // pred_check
          %p242 = pneg %p99
        $region26: #{tpu_custom_call.1} parent=19 // pred_check_branch
          %244 = sbr.rel (%p242) target = $region28
        $region27: #{tpu_custom_call.1} parent=19 // pred_region
          %s245 = sand.u32 %s18, 1
          %s246 = scalar_lea.sflag [#allocation3], %s245
          %s247 = sand.u32 %s89, 1
          %s248 = smul.addr %s247, 1536
          %s249 = scalar_lea.vmem [#allocation7], %s248
          %s250 = smul.u32 32, %s25
          %252 = vsyncadd %s246, 0
          %s253 = smul.addr %s250, 6
          %s254 = smul.addr %s253, 8
          %s255 = scalar_lea.hbm %s2, %s254
          %s256 = sshll.u32 %s255, 4
          %s257 = int_to_ptr.hbm [resolvable:$true] %s256
          %s258 = sshll.u32 %s249, 4
          %s259 = int_to_ptr.vmem [resolvable:$true] %s258
          %264 = dma.hbm_to_vmem [thread:$0]  %s257, 24576, %s259, %s246, 768, 768, 48
        $region28: #{tpu_custom_call.1} parent=19 // pred_fallthru
          _
        // Predicated region
        $region29: #{tpu_custom_call.1} parent=19 // pred_check
          %p265 = pneg %p125
        $region30: #{tpu_custom_call.1} parent=19 // pred_check_branch
          %267 = sbr.rel (%p265) target = $region32
        $region31: #{tpu_custom_call.1} parent=19 // pred_region
          %s268 = sand.u32 %s18, 1
          %s269 = scalar_lea.sflag [#allocation3], %s268
          %s270 = sand.u32 %s115, 1
          %s271 = smul.addr %s270, 1536
          %s272 = scalar_lea.vmem [#allocation8], %s271
          %s273 = smul.u32 32, %s25
          %275 = vsyncadd %s269, 0
          %s276 = smul.addr %s273, 6
          %s277 = smul.addr %s276, 8
          %s278 = scalar_lea.hbm %s3, %s277
          %s279 = sshll.u32 %s278, 4
          %s280 = int_to_ptr.hbm [resolvable:$true] %s279
          %s281 = sshll.u32 %s272, 4
          %s282 = int_to_ptr.vmem [resolvable:$true] %s281
          %287 = dma.hbm_to_vmem [thread:$0]  %s280, 24576, %s282, %s269, 768, 768, 48
        $region32: #{tpu_custom_call.1} parent=19 // pred_fallthru
          _
        // Predicated region
        $region33: #{tpu_custom_call.1} parent=19 // pred_check
          %p288 = pneg %p151
        $region34: #{tpu_custom_call.1} parent=19 // pred_check_branch
          %290 = sbr.rel (%p288) target = $region36
        $region35: #{tpu_custom_call.1} parent=19 // pred_region
          %s291 = sand.u32 %s18, 1
          %s292 = scalar_lea.sflag [#allocation3], %s291
          %s293 = sand.u32 %s141, 1
          %s294 = smul.addr %s293, 1536
          %s295 = scalar_lea.vmem [#allocation9], %s294
          %s296 = smul.u32 32, %s25
          %298 = vsyncadd %s292, 0
          %s299 = smul.addr %s296, 6
          %s300 = smul.addr %s299, 8
          %s301 = scalar_lea.hbm %s4, %s300
          %s302 = sshll.u32 %s301, 4
          %s303 = int_to_ptr.hbm [resolvable:$true] %s302
          %s304 = sshll.u32 %s295, 4
          %s305 = int_to_ptr.vmem [resolvable:$true] %s304
          %310 = dma.hbm_to_vmem [thread:$0]  %s303, 24576, %s305, %s292, 768, 768, 48
        $region36: #{tpu_custom_call.1} parent=19 // pred_fallthru
          _
      $region20: #{tpu_custom_call.1} parent=5 // pred_fallthru
        _
      %p311 = scmp.le.s32.totalorder 1, %s18
      %p312 = scmp.lt.s32.totalorder %s18, 5
      %p313 = pnand %p311, %p312
      %p314 = pneg %p313
      // Predicated region
      $region37: #{tpu_custom_call.1} parent=5 // pred_check
        _
      $region38: #{tpu_custom_call.1} parent=5 // pred_check_branch
        %316 = sbr.rel (%p313) target = $region40
      $region39: #{tpu_custom_call.1} parent=5 // pred_region
        %s317 = ssub.s32 %s18, 1
        %s318 = sand.u32 %s23, 1
        %s319 = scalar_lea.sflag [#allocation3], %s318
        %s320 = sand.u32 %s45, 1
        %s321 = smul.addr %s320, 128
        %s322 = scalar_lea.vmem [#allocation2], %s321
        // Predicated region
        $region41: #{tpu_custom_call.1} parent=39 // pred_check
          %p323 = pneg %p58
        $region42: #{tpu_custom_call.1} parent=39 // pred_check_branch
          %325 = sbr.rel (%p323) target = $region44
        $region43: #{tpu_custom_call.1} parent=39 // pred_region
          %327 = dma.done %s319, 2048
        $region44: #{tpu_custom_call.1} parent=39 // pred_fallthru
          _
        // Predicated region
        $region45: #{tpu_custom_call.1} parent=39 // pred_check
          %p328 = pneg %p79
        $region46: #{tpu_custom_call.1} parent=39 // pred_check_branch
          %330 = sbr.rel (%p328) target = $region48
        $region47: #{tpu_custom_call.1} parent=39 // pred_region
          %332 = dma.done [#allocation6], 6144
        $region48: #{tpu_custom_call.1} parent=39 // pred_fallthru
          _
        %s333 = sand.u32 %s23, 1
        %s334 = scalar_lea.sflag [#allocation3], %s333
        %s335 = sand.u32 %s92, 1
        %s336 = smul.addr %s335, 1536
        %s337 = scalar_lea.vmem [#allocation7], %s336
        // Predicated region
        $region49: #{tpu_custom_call.1} parent=39 // pred_check
          %p338 = pneg %p105
        $region50: #{tpu_custom_call.1} parent=39 // pred_check_branch
          %340 = sbr.rel (%p338) target = $region52
        $region51: #{tpu_custom_call.1} parent=39 // pred_region
          %342 = dma.done %s334, 24576
        $region52: #{tpu_custom_call.1} parent=39 // pred_fallthru
          _
        %s343 = sand.u32 %s23, 1
        %s344 = scalar_lea.sflag [#allocation3], %s343
        %s345 = sand.u32 %s118, 1
        %s346 = smul.addr %s345, 1536
        %s347 = scalar_lea.vmem [#allocation8], %s346
        // Predicated region
        $region53: #{tpu_custom_call.1} parent=39 // pred_check
          %p348 = pneg %p131
        $region54: #{tpu_custom_call.1} parent=39 // pred_check_branch
          %350 = sbr.rel (%p348) target = $region56
        $region55: #{tpu_custom_call.1} parent=39 // pred_region
          %352 = dma.done %s344, 24576
        $region56: #{tpu_custom_call.1} parent=39 // pred_fallthru
          _
        %s353 = sand.u32 %s23, 1
        %s354 = scalar_lea.sflag [#allocation3], %s353
        %s355 = sand.u32 %s144, 1
        %s356 = smul.addr %s355, 1536
        %s357 = scalar_lea.vmem [#allocation9], %s356
        // Predicated region
        $region57: #{tpu_custom_call.1} parent=39 // pred_check
          %p358 = pneg %p157
        $region58: #{tpu_custom_call.1} parent=39 // pred_check_branch
          %360 = sbr.rel (%p358) target = $region60
        $region59: #{tpu_custom_call.1} parent=39 // pred_region
          %362 = dma.done %s354, 24576
        $region60: #{tpu_custom_call.1} parent=39 // pred_fallthru
          _
        %s363 = sand.u32 %s23, 1
        %s364 = scalar_lea.sflag [#allocation3], %s363
        %s365 = sand.u32 %s45, 1
        %s366 = smul.addr %s365, 128
        %s367 = scalar_lea.vmem [#allocation2], %s366
        %p368 = pneg %p58
        %p369 = pneg %p55
        %p370 = pneg %p79
        %p371 = pneg %p76
        %s372 = sand.u32 %s23, 1
        %s373 = scalar_lea.sflag [#allocation3], %s372
        %s374 = sand.u32 %s92, 1
        %s375 = smul.addr %s374, 1536
        %s376 = scalar_lea.vmem [#allocation7], %s375
        %p377 = pneg %p105
        %p378 = pneg %p102
        %s379 = sand.u32 %s23, 1
        %s380 = scalar_lea.sflag [#allocation3], %s379
        %s381 = sand.u32 %s118, 1
        %s382 = smul.addr %s381, 1536
        %s383 = scalar_lea.vmem [#allocation8], %s382
        %p384 = pneg %p131
        %p385 = pneg %p128
        %s386 = sand.u32 %s23, 1
        %s387 = scalar_lea.sflag [#allocation3], %s386
        %s388 = sand.u32 %s144, 1
        %s389 = smul.addr %s388, 1536
        %s390 = scalar_lea.vmem [#allocation9], %s389
        %p391 = pneg %p157
        %p392 = pneg %p154
        %p393 = pneg %p185
        %p394 = pneg %p182
        %s395 = sand.u32 %s172, 1
        %s396 = scalar_lea.sflag [#allocation4], %s395
        %s397 = sand.u32 %s172, 1
        %s398 = smul.addr %s397, 768
        %s399 = scalar_lea.vmem [#allocation10], %s398
        %s400 = smul.u32 32, %s27
        %s401 = smul.u32 32, %s27
        %s402 = smul.u32 32, %s27
        %s403 = smul.u32 32, %s27
        %s404 = smul.u32 32, %s27
        %v405 = vld [vmem:[%s322] sm:$0xf]
        %v406 = vld [vmem:[%s322 + $0x4] sm:$0xf]
        %v407 = vld [vmem:[%s322 + $0x8] sm:$0xf]
        %v408 = vld [vmem:[%s322 + $0xc] sm:$0xf]
        %v409 = vld [vmem:[%s322 + $0x10] sm:$0xf]
        %v410 = vld [vmem:[%s322 + $0x14] sm:$0xf]
        %v411 = vld [vmem:[%s322 + $0x18] sm:$0xf]
        %v412 = vld [vmem:[%s322 + $0x1c] sm:$0xf]
        %v413 = vld [vmem:[%s322 + $0x20] sm:$0xf]
        %v414 = vld [vmem:[%s322 + $0x24] sm:$0xf]
        %v415 = vld [vmem:[%s322 + $0x28] sm:$0xf]
        %v416 = vld [vmem:[%s322 + $0x2c] sm:$0xf]
        %v417 = vld [vmem:[%s322 + $0x30] sm:$0xf]
        %v418 = vld [vmem:[%s322 + $0x34] sm:$0xf]
        %v419 = vld [vmem:[%s322 + $0x38] sm:$0xf]
        %v420 = vld [vmem:[%s322 + $0x3c] sm:$0xf]
        %v421 = vld [vmem:[%s322 + $0x40] sm:$0xf]
        %v422 = vld [vmem:[%s322 + $0x44] sm:$0xf]
        %v423 = vld [vmem:[%s322 + $0x48] sm:$0xf]
        %v424 = vld [vmem:[%s322 + $0x4c] sm:$0xf]
        %v425 = vld [vmem:[%s322 + $0x50] sm:$0xf]
        %v426 = vld [vmem:[%s322 + $0x54] sm:$0xf]
        %v427 = vld [vmem:[%s322 + $0x58] sm:$0xf]
        %v428 = vld [vmem:[%s322 + $0x5c] sm:$0xf]
        %v429 = vld [vmem:[%s322 + $0x60] sm:$0xf]
        %v430 = vld [vmem:[%s322 + $0x64] sm:$0xf]
        %v431 = vld [vmem:[%s322 + $0x68] sm:$0xf]
        %v432 = vld [vmem:[%s322 + $0x6c] sm:$0xf]
        %v433 = vld [vmem:[%s322 + $0x70] sm:$0xf]
        %v434 = vld [vmem:[%s322 + $0x74] sm:$0xf]
        %v435 = vld [vmem:[%s322 + $0x78] sm:$0xf]
        %v436 = vld [vmem:[%s322 + $0x7c] sm:$0xf]
        %v437 = vld [vmem:[#allocation5] sm:$0xff]
        %v438 = vld [vmem:[#allocation5 + $0x8] sm:$0xff]
        %v439 = vld [vmem:[#allocation5 + $0x10] sm:$0xff]
        %v440 = vld [vmem:[#allocation5 + $0x18] sm:$0xff]
        %v441 = vld [vmem:[#allocation5 + $0x20] sm:$0xff]
        %v442 = vld [vmem:[#allocation5 + $0x28] sm:$0xff]
        %v443 = vld [vmem:[#allocation5 + $0x30] sm:$0xff]
        %v444 = vld [vmem:[#allocation5 + $0x38] sm:$0xff]
        %v445 = vld [vmem:[#allocation5 + $0x40] sm:$0xff]
        %v446 = vld [vmem:[#allocation5 + $0x48] sm:$0xff]
        %v447 = vld [vmem:[#allocation5 + $0x50] sm:$0xff]
        %v448 = vld [vmem:[#allocation5 + $0x58] sm:$0xff]
        %v449 = vld [vmem:[#allocation5 + $0x60] sm:$0xff]
        %v450 = vld [vmem:[#allocation5 + $0x68] sm:$0xff]
        %v451 = vld [vmem:[#allocation5 + $0x70] sm:$0xff]
        %v452 = vld [vmem:[#allocation5 + $0x78] sm:$0xff]
        %v453 = vld [vmem:[#allocation5 + $0x80] sm:$0xff]
        %v454 = vld [vmem:[#allocation5 + $0x88] sm:$0xff]
        %v455 = vld [vmem:[#allocation5 + $0x90] sm:$0xff]
        %v456 = vld [vmem:[#allocation5 + $0x98] sm:$0xff]
        %v457 = vld [vmem:[#allocation5 + $0xa0] sm:$0xff]
        %v458 = vld [vmem:[#allocation5 + $0xa8] sm:$0xff]
        %v459 = vld [vmem:[#allocation5 + $0xb0] sm:$0xff]
        %v460 = vld [vmem:[#allocation5 + $0xb8] sm:$0xff]
        %v461 = vld [vmem:[#allocation5 + $0xc0] sm:$0xff]
        %v462 = vld [vmem:[#allocation5 + $0xc8] sm:$0xff]
        %v463 = vld [vmem:[#allocation5 + $0xd0] sm:$0xff]
        %v464 = vld [vmem:[#allocation5 + $0xd8] sm:$0xff]
        %v465 = vld [vmem:[#allocation5 + $0xe0] sm:$0xff]
        %v466 = vld [vmem:[#allocation5 + $0xe8] sm:$0xff]
        %v467 = vld [vmem:[#allocation5 + $0xf0] sm:$0xff]
        %v468 = vld [vmem:[#allocation5 + $0xf8] sm:$0xff]
        %v469 = vld [vmem:[#allocation5 + $0x100] sm:$0xff]
        %v470 = vld [vmem:[#allocation5 + $0x108] sm:$0xff]
        %v471 = vld [vmem:[#allocation5 + $0x110] sm:$0xff]
        %v472 = vld [vmem:[#allocation5 + $0x118] sm:$0xff]
        %v473 = vld [vmem:[#allocation5 + $0x120] sm:$0xff]
        %v474 = vld [vmem:[#allocation5 + $0x128] sm:$0xff]
        %v475 = vld [vmem:[#allocation5 + $0x130] sm:$0xff]
        %v476 = vld [vmem:[#allocation5 + $0x138] sm:$0xff]
        %v477 = vld [vmem:[#allocation5 + $0x140] sm:$0xff]
        %v478 = vld [vmem:[#allocation5 + $0x148] sm:$0xff]
        %v479 = vld [vmem:[#allocation5 + $0x150] sm:$0xff]
        %v480 = vld [vmem:[#allocation5 + $0x158] sm:$0xff]
        %v481 = vld [vmem:[#allocation5 + $0x160] sm:$0xff]
        %v482 = vld [vmem:[#allocation5 + $0x168] sm:$0xff]
        %v483 = vld [vmem:[#allocation5 + $0x170] sm:$0xff]
        %v484 = vld [vmem:[#allocation5 + $0x178] sm:$0xff]
        %v517 = vunpack.c.l.b16 %v405
        %v518 = vunpack.c.l.b16 %v406
        %v519 = vunpack.c.l.b16 %v407
        %v520 = vunpack.c.l.b16 %v408
        %v521 = vunpack.c.l.b16 %v409
        %v522 = vunpack.c.l.b16 %v410
        %v523 = vunpack.c.l.b16 %v411
        %v524 = vunpack.c.l.b16 %v412
        %v525 = vunpack.c.l.b16 %v413
        %v526 = vunpack.c.l.b16 %v414
        %v527 = vunpack.c.l.b16 %v415
        %v528 = vunpack.c.l.b16 %v416
        %v529 = vunpack.c.l.b16 %v417
        %v530 = vunpack.c.l.b16 %v418
        %v531 = vunpack.c.l.b16 %v419
        %v532 = vunpack.c.l.b16 %v420
        %v533 = vunpack.c.l.b16 %v421
        %v534 = vunpack.c.l.b16 %v422
        %v535 = vunpack.c.l.b16 %v423
        %v536 = vunpack.c.l.b16 %v424
        %v537 = vunpack.c.l.b16 %v425
        %v538 = vunpack.c.l.b16 %v426
        %v539 = vunpack.c.l.b16 %v427
        %v540 = vunpack.c.l.b16 %v428
        %v541 = vunpack.c.l.b16 %v429
        %v542 = vunpack.c.l.b16 %v430
        %v543 = vunpack.c.l.b16 %v431
        %v544 = vunpack.c.l.b16 %v432
        %v545 = vunpack.c.l.b16 %v433
        %v546 = vunpack.c.l.b16 %v434
        %v547 = vunpack.c.l.b16 %v435
        %v548 = vunpack.c.l.b16 %v436
        %v549 = vpack.c.b16 %v518, %v517
        %v550 = vpack.c.b16 %v520, %v519
        %v551 = vpack.c.b16 %v522, %v521
        %v552 = vpack.c.b16 %v524, %v523
        %v553 = vpack.c.b16 %v526, %v525
        %v554 = vpack.c.b16 %v528, %v527
        %v555 = vpack.c.b16 %v530, %v529
        %v556 = vpack.c.b16 %v532, %v531
        %v557 = vpack.c.b16 %v534, %v533
        %v558 = vpack.c.b16 %v536, %v535
        %v559 = vpack.c.b16 %v538, %v537
        %v560 = vpack.c.b16 %v540, %v539
        %v561 = vpack.c.b16 %v542, %v541
        %v562 = vpack.c.b16 %v544, %v543
        %v563 = vpack.c.b16 %v546, %v545
        %v564 = vpack.c.b16 %v548, %v547
        %v629 = vunpack.c.l.b16 %v437
        %v630 = vunpack.c.h.b16 %v437
        %v631 = vunpack.c.l.b16 %v438
        %v632 = vunpack.c.h.b16 %v438
        %v633 = vunpack.c.l.b16 %v439
        %v634 = vunpack.c.h.b16 %v439
        %v635 = vunpack.c.l.b16 %v440
        %v636 = vunpack.c.h.b16 %v440
        %v637 = vunpack.c.l.b16 %v441
        %v638 = vunpack.c.h.b16 %v441
        %v639 = vunpack.c.l.b16 %v442
        %v640 = vunpack.c.h.b16 %v442
        %v641 = vunpack.c.l.b16 %v443
        %v642 = vunpack.c.h.b16 %v443
        %v643 = vunpack.c.l.b16 %v444
        %v644 = vunpack.c.h.b16 %v444
        %v645 = vunpack.c.l.b16 %v445
        %v646 = vunpack.c.h.b16 %v445
        %v647 = vunpack.c.l.b16 %v446
        %v648 = vunpack.c.h.b16 %v446
        %v649 = vunpack.c.l.b16 %v447
        %v650 = vunpack.c.h.b16 %v447
        %v651 = vunpack.c.l.b16 %v448
        %v652 = vunpack.c.h.b16 %v448
        %v653 = vunpack.c.l.b16 %v449
        %v654 = vunpack.c.h.b16 %v449
        %v655 = vunpack.c.l.b16 %v450
        %v656 = vunpack.c.h.b16 %v450
        %v657 = vunpack.c.l.b16 %v451
        %v658 = vunpack.c.h.b16 %v451
        %v659 = vunpack.c.l.b16 %v452
        %v660 = vunpack.c.h.b16 %v452
        %v661 = vunpack.c.l.b16 %v453
        %v662 = vunpack.c.h.b16 %v453
        %v663 = vunpack.c.l.b16 %v454
        %v664 = vunpack.c.h.b16 %v454
        %v665 = vunpack.c.l.b16 %v455
        %v666 = vunpack.c.h.b16 %v455
        %v667 = vunpack.c.l.b16 %v456
        %v668 = vunpack.c.h.b16 %v456
        %v669 = vunpack.c.l.b16 %v457
        %v670 = vunpack.c.h.b16 %v457
        %v671 = vunpack.c.l.b16 %v458
        %v672 = vunpack.c.h.b16 %v458
        %v673 = vunpack.c.l.b16 %v459
        %v674 = vunpack.c.h.b16 %v459
        %v675 = vunpack.c.l.b16 %v460
        %v676 = vunpack.c.h.b16 %v460
        %v677 = vunpack.c.l.b16 %v461
        %v678 = vunpack.c.h.b16 %v461
        %v679 = vunpack.c.l.b16 %v462
        %v680 = vunpack.c.h.b16 %v462
        %v681 = vunpack.c.l.b16 %v463
        %v682 = vunpack.c.h.b16 %v463
        %v683 = vunpack.c.l.b16 %v464
        %v684 = vunpack.c.h.b16 %v464
        %v685 = vunpack.c.l.b16 %v465
        %v686 = vunpack.c.h.b16 %v465
        %v687 = vunpack.c.l.b16 %v466
        %v688 = vunpack.c.h.b16 %v466
        %v689 = vunpack.c.l.b16 %v467
        %v690 = vunpack.c.h.b16 %v467
        %v691 = vunpack.c.l.b16 %v468
        %v692 = vunpack.c.h.b16 %v468
        %v693 = vunpack.c.l.b16 %v469
        %v694 = vunpack.c.h.b16 %v469
        %v695 = vunpack.c.l.b16 %v470
        %v696 = vunpack.c.h.b16 %v470
        %v697 = vunpack.c.l.b16 %v471
        %v698 = vunpack.c.h.b16 %v471
        %v699 = vunpack.c.l.b16 %v472
        %v700 = vunpack.c.h.b16 %v472
        %v701 = vunpack.c.l.b16 %v473
        %v702 = vunpack.c.h.b16 %v473
        %v703 = vunpack.c.l.b16 %v474
        %v704 = vunpack.c.h.b16 %v474
        %v705 = vunpack.c.l.b16 %v475
        %v706 = vunpack.c.h.b16 %v475
        %v707 = vunpack.c.l.b16 %v476
        %v708 = vunpack.c.h.b16 %v476
        %v709 = vunpack.c.l.b16 %v477
        %v710 = vunpack.c.h.b16 %v477
        %v711 = vunpack.c.l.b16 %v478
        %v712 = vunpack.c.h.b16 %v478
        %v713 = vunpack.c.l.b16 %v479
        %v714 = vunpack.c.h.b16 %v479
        %v715 = vunpack.c.l.b16 %v480
        %v716 = vunpack.c.h.b16 %v480
        %v717 = vunpack.c.l.b16 %v481
        %v718 = vunpack.c.h.b16 %v481
        %v719 = vunpack.c.l.b16 %v482
        %v720 = vunpack.c.h.b16 %v482
        %v721 = vunpack.c.l.b16 %v483
        %v722 = vunpack.c.h.b16 %v483
        %v723 = vunpack.c.l.b16 %v484
        %v724 = vunpack.c.h.b16 %v484
        %v725 = vpack.c.b16 %v635, %v629
        %v726 = vpack.c.b16 %v636, %v630
        %v727 = vpack.c.b16 %v637, %v631
        %v728 = vpack.c.b16 %v638, %v632
        %v729 = vpack.c.b16 %v639, %v633
        %v730 = vpack.c.b16 %v640, %v634
        %v731 = vpack.c.b16 %v647, %v641
        %v732 = vpack.c.b16 %v648, %v642
        %v733 = vpack.c.b16 %v649, %v643
        %v734 = vpack.c.b16 %v650, %v644
        %v735 = vpack.c.b16 %v651, %v645
        %v736 = vpack.c.b16 %v652, %v646
        %v737 = vpack.c.b16 %v659, %v653
        %v738 = vpack.c.b16 %v660, %v654
        %v739 = vpack.c.b16 %v661, %v655
        %v740 = vpack.c.b16 %v662, %v656
        %v741 = vpack.c.b16 %v663, %v657
        %v742 = vpack.c.b16 %v664, %v658
        %v743 = vpack.c.b16 %v671, %v665
        %v744 = vpack.c.b16 %v672, %v666
        %v745 = vpack.c.b16 %v673, %v667
        %v746 = vpack.c.b16 %v674, %v668
        %v747 = vpack.c.b16 %v675, %v669
        %v748 = vpack.c.b16 %v676, %v670
        %v749 = vpack.c.b16 %v683, %v677
        %v750 = vpack.c.b16 %v684, %v678
        %v751 = vpack.c.b16 %v685, %v679
        %v752 = vpack.c.b16 %v686, %v680
        %v753 = vpack.c.b16 %v687, %v681
        %v754 = vpack.c.b16 %v688, %v682
        %v755 = vpack.c.b16 %v695, %v689
        %v756 = vpack.c.b16 %v696, %v690
        %v757 = vpack.c.b16 %v697, %v691
        %v758 = vpack.c.b16 %v698, %v692
        %v759 = vpack.c.b16 %v699, %v693
        %v760 = vpack.c.b16 %v700, %v694
        %v761 = vpack.c.b16 %v707, %v701
        %v762 = vpack.c.b16 %v708, %v702
        %v763 = vpack.c.b16 %v709, %v703
        %v764 = vpack.c.b16 %v710, %v704
        %v765 = vpack.c.b16 %v711, %v705
        %v766 = vpack.c.b16 %v712, %v706
        %v767 = vpack.c.b16 %v719, %v713
        %v768 = vpack.c.b16 %v720, %v714
        %v769 = vpack.c.b16 %v721, %v715
        %v770 = vpack.c.b16 %v722, %v716
        %v771 = vpack.c.b16 %v723, %v717
        %v772 = vpack.c.b16 %v724, %v718
        %821 = vmatpush.bf16.msra.mxu0 %v767
        %822 = vmatpush.bf16.msra.mxu0 %v761
        %823 = vmatpush.bf16.msra.mxu0 %v755
        %824 = vmatpush.bf16.msra.mxu0 %v749
        %825 = vmatpush.bf16.msra.mxu0 %v743
        %826 = vmatpush.bf16.msra.mxu0 %v737
        %827 = vmatpush.bf16.msra.mxu0 %v731
        %828 = vmatpush.bf16.msra.mxu0 %v725
        %829 = vmatmul.bf16.gmra.mxu0 %v549
        %v830 = vpop.f32.mrf.mxu0
        %v831 = vadd.f32 0.0, %v830
        %v832 = vpop.f32.mrf.mxu0
        %v833 = vadd.f32 0.0, %v832
        %834 = vmatmul.bf16.gmra.mxu0 %v550
        %v835 = vpop.f32.mrf.mxu0
        %v836 = vadd.f32 0.0, %v835
        %v837 = vpop.f32.mrf.mxu0
        %v838 = vadd.f32 0.0, %v837
        %839 = vmatmul.bf16.gmra.mxu0 %v551
        %v840 = vpop.f32.mrf.mxu0
        %v841 = vadd.f32 0.0, %v840
        %v842 = vpop.f32.mrf.mxu0
        %v843 = vadd.f32 0.0, %v842
        %844 = vmatmul.bf16.gmra.mxu0 %v552
        %v845 = vpop.f32.mrf.mxu0
        %v846 = vadd.f32 0.0, %v845
        %v847 = vpop.f32.mrf.mxu0
        %v848 = vadd.f32 0.0, %v847
        %849 = vmatmul.bf16.gmra.mxu0 %v553
        %v850 = vpop.f32.mrf.mxu0
        %v851 = vadd.f32 0.0, %v850
        %v852 = vpop.f32.mrf.mxu0
        %v853 = vadd.f32 0.0, %v852
        %854 = vmatmul.bf16.gmra.mxu0 %v554
        %v855 = vpop.f32.mrf.mxu0
        %v856 = vadd.f32 0.0, %v855
        %v857 = vpop.f32.mrf.mxu0
        %v858 = vadd.f32 0.0, %v857
        %859 = vmatmul.bf16.gmra.mxu0 %v555
        %v860 = vpop.f32.mrf.mxu0
        %v861 = vadd.f32 0.0, %v860
        %v862 = vpop.f32.mrf.mxu0
        %v863 = vadd.f32 0.0, %v862
        %864 = vmatmul.bf16.gmra.mxu0 %v556
        %v865 = vpop.f32.mrf.mxu0
        %v866 = vadd.f32 0.0, %v865
        %v867 = vpop.f32.mrf.mxu0
        %v868 = vadd.f32 0.0, %v867
        %869 = vmatmul.bf16.gmra.mxu0 %v557
        %v870 = vpop.f32.mrf.mxu0
        %v871 = vadd.f32 0.0, %v870
        %v872 = vpop.f32.mrf.mxu0
        %v873 = vadd.f32 0.0, %v872
        %874 = vmatmul.bf16.gmra.mxu0 %v558
        %v875 = vpop.f32.mrf.mxu0
        %v876 = vadd.f32 0.0, %v875
        %v877 = vpop.f32.mrf.mxu0
        %v878 = vadd.f32 0.0, %v877
        %879 = vmatmul.bf16.gmra.mxu0 %v559
        %v880 = vpop.f32.mrf.mxu0
        %v881 = vadd.f32 0.0, %v880
        %v882 = vpop.f32.mrf.mxu0
        %v883 = vadd.f32 0.0, %v882
        %884 = vmatmul.bf16.gmra.mxu0 %v560
        %v885 = vpop.f32.mrf.mxu0
        %v886 = vadd.f32 0.0, %v885
        %v887 = vpop.f32.mrf.mxu0
        %v888 = vadd.f32 0.0, %v887
        %889 = vmatmul.bf16.gmra.mxu0 %v561
        %v890 = vpop.f32.mrf.mxu0
        %v891 = vadd.f32 0.0, %v890
        %v892 = vpop.f32.mrf.mxu0
        %v893 = vadd.f32 0.0, %v892
        %894 = vmatmul.bf16.gmra.mxu0 %v562
        %v895 = vpop.f32.mrf.mxu0
        %v896 = vadd.f32 0.0, %v895
        %v897 = vpop.f32.mrf.mxu0
        %v898 = vadd.f32 0.0, %v897
        %899 = vmatmul.bf16.gmra.mxu0 %v563
        %v900 = vpop.f32.mrf.mxu0
        %v901 = vadd.f32 0.0, %v900
        %v902 = vpop.f32.mrf.mxu0
        %v903 = vadd.f32 0.0, %v902
        %904 = vmatmul.bf16.gmra.mxu0 %v564
        %v905 = vpop.f32.mrf.mxu0
        %v906 = vadd.f32 0.0, %v905
        %v907 = vpop.f32.mrf.mxu0
        %v908 = vadd.f32 0.0, %v907
        %909 = vdwg.mxu0
        %910 = vmatpush.bf16.msra.mxu0 %v768
        %911 = vmatpush.bf16.msra.mxu0 %v762
        %912 = vmatpush.bf16.msra.mxu0 %v756
        %913 = vmatpush.bf16.msra.mxu0 %v750
        %914 = vmatpush.bf16.msra.mxu0 %v744
        %915 = vmatpush.bf16.msra.mxu0 %v738
        %916 = vmatpush.bf16.msra.mxu0 %v732
        %917 = vmatpush.bf16.msra.mxu0 %v726
        %918 = vmatmul.bf16.gmra.mxu0 %v549
        %v919 = vpop.f32.mrf.mxu0
        %v920 = vadd.f32 0.0, %v919
        %v921 = vpop.f32.mrf.mxu0
        %v922 = vadd.f32 0.0, %v921
        %923 = vmatmul.bf16.gmra.mxu0 %v550
        %v924 = vpop.f32.mrf.mxu0
        %v925 = vadd.f32 0.0, %v924
        %v926 = vpop.f32.mrf.mxu0
        %v927 = vadd.f32 0.0, %v926
        %928 = vmatmul.bf16.gmra.mxu0 %v551
        %v929 = vpop.f32.mrf.mxu0
        %v930 = vadd.f32 0.0, %v929
        %v931 = vpop.f32.mrf.mxu0
        %v932 = vadd.f32 0.0, %v931
        %933 = vmatmul.bf16.gmra.mxu0 %v552
        %v934 = vpop.f32.mrf.mxu0
        %v935 = vadd.f32 0.0, %v934
        %v936 = vpop.f32.mrf.mxu0
        %v937 = vadd.f32 0.0, %v936
        %938 = vmatmul.bf16.gmra.mxu0 %v553
        %v939 = vpop.f32.mrf.mxu0
        %v940 = vadd.f32 0.0, %v939
        %v941 = vpop.f32.mrf.mxu0
        %v942 = vadd.f32 0.0, %v941
        %943 = vmatmul.bf16.gmra.mxu0 %v554
        %v944 = vpop.f32.mrf.mxu0
        %v945 = vadd.f32 0.0, %v944
        %v946 = vpop.f32.mrf.mxu0
        %v947 = vadd.f32 0.0, %v946
        %948 = vmatmul.bf16.gmra.mxu0 %v555
        %v949 = vpop.f32.mrf.mxu0
        %v950 = vadd.f32 0.0, %v949
        %v951 = vpop.f32.mrf.mxu0
        %v952 = vadd.f32 0.0, %v951
        %953 = vmatmul.bf16.gmra.mxu0 %v556
        %v954 = vpop.f32.mrf.mxu0
        %v955 = vadd.f32 0.0, %v954
        %v956 = vpop.f32.mrf.mxu0
        %v957 = vadd.f32 0.0, %v956
        %958 = vmatmul.bf16.gmra.mxu0 %v557
        %v959 = vpop.f32.mrf.mxu0
        %v960 = vadd.f32 0.0, %v959
        %v961 = vpop.f32.mrf.mxu0
        %v962 = vadd.f32 0.0, %v961
        %963 = vmatmul.bf16.gmra.mxu0 %v558
        %v964 = vpop.f32.mrf.mxu0
        %v965 = vadd.f32 0.0, %v964
        %v966 = vpop.f32.mrf.mxu0
        %v967 = vadd.f32 0.0, %v966
        %968 = vmatmul.bf16.gmra.mxu0 %v559
        %v969 = vpop.f32.mrf.mxu0
        %v970 = vadd.f32 0.0, %v969
        %v971 = vpop.f32.mrf.mxu0
        %v972 = vadd.f32 0.0, %v971
        %973 = vmatmul.bf16.gmra.mxu0 %v560
        %v974 = vpop.f32.mrf.mxu0
        %v975 = vadd.f32 0.0, %v974
        %v976 = vpop.f32.mrf.mxu0
        %v977 = vadd.f32 0.0, %v976
        %978 = vmatmul.bf16.gmra.mxu0 %v561
        %v979 = vpop.f32.mrf.mxu0
        %v980 = vadd.f32 0.0, %v979
        %v981 = vpop.f32.mrf.mxu0
        %v982 = vadd.f32 0.0, %v981
        %983 = vmatmul.bf16.gmra.mxu0 %v562
        %v984 = vpop.f32.mrf.mxu0
        %v985 = vadd.f32 0.0, %v984
        %v986 = vpop.f32.mrf.mxu0
        %v987 = vadd.f32 0.0, %v986
        %988 = vmatmul.bf16.gmra.mxu0 %v563
        %v989 = vpop.f32.mrf.mxu0
        %v990 = vadd.f32 0.0, %v989
        %v991 = vpop.f32.mrf.mxu0
        %v992 = vadd.f32 0.0, %v991
        %993 = vmatmul.bf16.gmra.mxu0 %v564
        %v994 = vpop.f32.mrf.mxu0
        %v995 = vadd.f32 0.0, %v994
        %v996 = vpop.f32.mrf.mxu0
        %v997 = vadd.f32 0.0, %v996
        %998 = vdwg.mxu0
        %999 = vmatpush.bf16.msra.mxu0 %v769
        %1000 = vmatpush.bf16.msra.mxu0 %v763
        %1001 = vmatpush.bf16.msra.mxu0 %v757
        %1002 = vmatpush.bf16.msra.mxu0 %v751
        %1003 = vmatpush.bf16.msra.mxu0 %v745
        %1004 = vmatpush.bf16.msra.mxu0 %v739
        %1005 = vmatpush.bf16.msra.mxu0 %v733
        %1006 = vmatpush.bf16.msra.mxu0 %v727
        %1007 = vmatmul.bf16.gmra.mxu0 %v549
        %v1008 = vpop.f32.mrf.mxu0
        %v1009 = vadd.f32 0.0, %v1008
        %v1010 = vpop.f32.mrf.mxu0
        %v1011 = vadd.f32 0.0, %v1010
        %1012 = vmatmul.bf16.gmra.mxu0 %v550
        %v1013 = vpop.f32.mrf.mxu0
        %v1014 = vadd.f32 0.0, %v1013
        %v1015 = vpop.f32.mrf.mxu0
        %v1016 = vadd.f32 0.0, %v1015
        %1017 = vmatmul.bf16.gmra.mxu0 %v551
        %v1018 = vpop.f32.mrf.mxu0
        %v1019 = vadd.f32 0.0, %v1018
        %v1020 = vpop.f32.mrf.mxu0
        %v1021 = vadd.f32 0.0, %v1020
        %1022 = vmatmul.bf16.gmra.mxu0 %v552
        %v1023 = vpop.f32.mrf.mxu0
        %v1024 = vadd.f32 0.0, %v1023
        %v1025 = vpop.f32.mrf.mxu0
        %v1026 = vadd.f32 0.0, %v1025
        %1027 = vmatmul.bf16.gmra.mxu0 %v553
        %v1028 = vpop.f32.mrf.mxu0
        %v1029 = vadd.f32 0.0, %v1028
        %v1030 = vpop.f32.mrf.mxu0
        %v1031 = vadd.f32 0.0, %v1030
        %1032 = vmatmul.bf16.gmra.mxu0 %v554
        %v1033 = vpop.f32.mrf.mxu0
        %v1034 = vadd.f32 0.0, %v1033
        %v1035 = vpop.f32.mrf.mxu0
        %v1036 = vadd.f32 0.0, %v1035
        %1037 = vmatmul.bf16.gmra.mxu0 %v555
        %v1038 = vpop.f32.mrf.mxu0
        %v1039 = vadd.f32 0.0, %v1038
        %v1040 = vpop.f32.mrf.mxu0
        %v1041 = vadd.f32 0.0, %v1040
        %1042 = vmatmul.bf16.gmra.mxu0 %v556
        %v1043 = vpop.f32.mrf.mxu0
        %v1044 = vadd.f32 0.0, %v1043
        %v1045 = vpop.f32.mrf.mxu0
        %v1046 = vadd.f32 0.0, %v1045
        %1047 = vmatmul.bf16.gmra.mxu0 %v557
        %v1048 = vpop.f32.mrf.mxu0
        %v1049 = vadd.f32 0.0, %v1048
        %v1050 = vpop.f32.mrf.mxu0
        %v1051 = vadd.f32 0.0, %v1050
        %1052 = vmatmul.bf16.gmra.mxu0 %v558
        %v1053 = vpop.f32.mrf.mxu0
        %v1054 = vadd.f32 0.0, %v1053
        %v1055 = vpop.f32.mrf.mxu0
        %v1056 = vadd.f32 0.0, %v1055
        %1057 = vmatmul.bf16.gmra.mxu0 %v559
        %v1058 = vpop.f32.mrf.mxu0
        %v1059 = vadd.f32 0.0, %v1058
        %v1060 = vpop.f32.mrf.mxu0
        %v1061 = vadd.f32 0.0, %v1060
        %1062 = vmatmul.bf16.gmra.mxu0 %v560
        %v1063 = vpop.f32.mrf.mxu0
        %v1064 = vadd.f32 0.0, %v1063
        %v1065 = vpop.f32.mrf.mxu0
        %v1066 = vadd.f32 0.0, %v1065
        %1067 = vmatmul.bf16.gmra.mxu0 %v561
        %v1068 = vpop.f32.mrf.mxu0
        %v1069 = vadd.f32 0.0, %v1068
        %v1070 = vpop.f32.mrf.mxu0
        %v1071 = vadd.f32 0.0, %v1070
        %1072 = vmatmul.bf16.gmra.mxu0 %v562
        %v1073 = vpop.f32.mrf.mxu0
        %v1074 = vadd.f32 0.0, %v1073
        %v1075 = vpop.f32.mrf.mxu0
        %v1076 = vadd.f32 0.0, %v1075
        %1077 = vmatmul.bf16.gmra.mxu0 %v563
        %v1078 = vpop.f32.mrf.mxu0
        %v1079 = vadd.f32 0.0, %v1078
        %v1080 = vpop.f32.mrf.mxu0
        %v1081 = vadd.f32 0.0, %v1080
        %1082 = vmatmul.bf16.gmra.mxu0 %v564
        %v1083 = vpop.f32.mrf.mxu0
        %v1084 = vadd.f32 0.0, %v1083
        %v1085 = vpop.f32.mrf.mxu0
        %v1086 = vadd.f32 0.0, %v1085
        %1087 = vdwg.mxu0
        %1088 = vmatpush.bf16.msra.mxu0 %v770
        %1089 = vmatpush.bf16.msra.mxu0 %v764
        %1090 = vmatpush.bf16.msra.mxu0 %v758
        %1091 = vmatpush.bf16.msra.mxu0 %v752
        %1092 = vmatpush.bf16.msra.mxu0 %v746
        %1093 = vmatpush.bf16.msra.mxu0 %v740
        %1094 = vmatpush.bf16.msra.mxu0 %v734
        %1095 = vmatpush.bf16.msra.mxu0 %v728
        %1096 = vmatmul.bf16.gmra.mxu0 %v549
        %v1097 = vpop.f32.mrf.mxu0
        %v1098 = vadd.f32 0.0, %v1097
        %v1099 = vpop.f32.mrf.mxu0
        %v1100 = vadd.f32 0.0, %v1099
        %1101 = vmatmul.bf16.gmra.mxu0 %v550
        %v1102 = vpop.f32.mrf.mxu0
        %v1103 = vadd.f32 0.0, %v1102
        %v1104 = vpop.f32.mrf.mxu0
        %v1105 = vadd.f32 0.0, %v1104
        %1106 = vmatmul.bf16.gmra.mxu0 %v551
        %v1107 = vpop.f32.mrf.mxu0
        %v1108 = vadd.f32 0.0, %v1107
        %v1109 = vpop.f32.mrf.mxu0
        %v1110 = vadd.f32 0.0, %v1109
        %1111 = vmatmul.bf16.gmra.mxu0 %v552
        %v1112 = vpop.f32.mrf.mxu0
        %v1113 = vadd.f32 0.0, %v1112
        %v1114 = vpop.f32.mrf.mxu0
        %v1115 = vadd.f32 0.0, %v1114
        %1116 = vmatmul.bf16.gmra.mxu0 %v553
        %v1117 = vpop.f32.mrf.mxu0
        %v1118 = vadd.f32 0.0, %v1117
        %v1119 = vpop.f32.mrf.mxu0
        %v1120 = vadd.f32 0.0, %v1119
        %1121 = vmatmul.bf16.gmra.mxu0 %v554
        %v1122 = vpop.f32.mrf.mxu0
        %v1123 = vadd.f32 0.0, %v1122
        %v1124 = vpop.f32.mrf.mxu0
        %v1125 = vadd.f32 0.0, %v1124
        %1126 = vmatmul.bf16.gmra.mxu0 %v555
        %v1127 = vpop.f32.mrf.mxu0
        %v1128 = vadd.f32 0.0, %v1127
        %v1129 = vpop.f32.mrf.mxu0
        %v1130 = vadd.f32 0.0, %v1129
        %1131 = vmatmul.bf16.gmra.mxu0 %v556
        %v1132 = vpop.f32.mrf.mxu0
        %v1133 = vadd.f32 0.0, %v1132
        %v1134 = vpop.f32.mrf.mxu0
        %v1135 = vadd.f32 0.0, %v1134
        %1136 = vmatmul.bf16.gmra.mxu0 %v557
        %v1137 = vpop.f32.mrf.mxu0
        %v1138 = vadd.f32 0.0, %v1137
        %v1139 = vpop.f32.mrf.mxu0
        %v1140 = vadd.f32 0.0, %v1139
        %1141 = vmatmul.bf16.gmra.mxu0 %v558
        %v1142 = vpop.f32.mrf.mxu0
        %v1143 = vadd.f32 0.0, %v1142
        %v1144 = vpop.f32.mrf.mxu0
        %v1145 = vadd.f32 0.0, %v1144
        %1146 = vmatmul.bf16.gmra.mxu0 %v559
        %v1147 = vpop.f32.mrf.mxu0
        %v1148 = vadd.f32 0.0, %v1147
        %v1149 = vpop.f32.mrf.mxu0
        %v1150 = vadd.f32 0.0, %v1149
        %1151 = vmatmul.bf16.gmra.mxu0 %v560
        %v1152 = vpop.f32.mrf.mxu0
        %v1153 = vadd.f32 0.0, %v1152
        %v1154 = vpop.f32.mrf.mxu0
        %v1155 = vadd.f32 0.0, %v1154
        %1156 = vmatmul.bf16.gmra.mxu0 %v561
        %v1157 = vpop.f32.mrf.mxu0
        %v1158 = vadd.f32 0.0, %v1157
        %v1159 = vpop.f32.mrf.mxu0
        %v1160 = vadd.f32 0.0, %v1159
        %1161 = vmatmul.bf16.gmra.mxu0 %v562
        %v1162 = vpop.f32.mrf.mxu0
        %v1163 = vadd.f32 0.0, %v1162
        %v1164 = vpop.f32.mrf.mxu0
        %v1165 = vadd.f32 0.0, %v1164
        %1166 = vmatmul.bf16.gmra.mxu0 %v563
        %v1167 = vpop.f32.mrf.mxu0
        %v1168 = vadd.f32 0.0, %v1167
        %v1169 = vpop.f32.mrf.mxu0
        %v1170 = vadd.f32 0.0, %v1169
        %1171 = vmatmul.bf16.gmra.mxu0 %v564
        %v1172 = vpop.f32.mrf.mxu0
        %v1173 = vadd.f32 0.0, %v1172
        %v1174 = vpop.f32.mrf.mxu0
        %v1175 = vadd.f32 0.0, %v1174
        %1176 = vdwg.mxu0
        %1177 = vmatpush.bf16.msra.mxu0 %v771
        %1178 = vmatpush.bf16.msra.mxu0 %v765
        %1179 = vmatpush.bf16.msra.mxu0 %v759
        %1180 = vmatpush.bf16.msra.mxu0 %v753
        %1181 = vmatpush.bf16.msra.mxu0 %v747
        %1182 = vmatpush.bf16.msra.mxu0 %v741
        %1183 = vmatpush.bf16.msra.mxu0 %v735
        %1184 = vmatpush.bf16.msra.mxu0 %v729
        %1185 = vmatmul.bf16.gmra.mxu0 %v549
        %v1186 = vpop.f32.mrf.mxu0
        %v1187 = vadd.f32 0.0, %v1186
        %v1188 = vpop.f32.mrf.mxu0
        %v1189 = vadd.f32 0.0, %v1188
        %1190 = vmatmul.bf16.gmra.mxu0 %v550
        %v1191 = vpop.f32.mrf.mxu0
        %v1192 = vadd.f32 0.0, %v1191
        %v1193 = vpop.f32.mrf.mxu0
        %v1194 = vadd.f32 0.0, %v1193
        %1195 = vmatmul.bf16.gmra.mxu0 %v551
        %v1196 = vpop.f32.mrf.mxu0
        %v1197 = vadd.f32 0.0, %v1196
        %v1198 = vpop.f32.mrf.mxu0
        %v1199 = vadd.f32 0.0, %v1198
        %1200 = vmatmul.bf16.gmra.mxu0 %v552
        %v1201 = vpop.f32.mrf.mxu0
        %v1202 = vadd.f32 0.0, %v1201
        %v1203 = vpop.f32.mrf.mxu0
        %v1204 = vadd.f32 0.0, %v1203
        %1205 = vmatmul.bf16.gmra.mxu0 %v553
        %v1206 = vpop.f32.mrf.mxu0
        %v1207 = vadd.f32 0.0, %v1206
        %v1208 = vpop.f32.mrf.mxu0
        %v1209 = vadd.f32 0.0, %v1208
        %1210 = vmatmul.bf16.gmra.mxu0 %v554
        %v1211 = vpop.f32.mrf.mxu0
        %v1212 = vadd.f32 0.0, %v1211
        %v1213 = vpop.f32.mrf.mxu0
        %v1214 = vadd.f32 0.0, %v1213
        %1215 = vmatmul.bf16.gmra.mxu0 %v555
        %v1216 = vpop.f32.mrf.mxu0
        %v1217 = vadd.f32 0.0, %v1216
        %v1218 = vpop.f32.mrf.mxu0
        %v1219 = vadd.f32 0.0, %v1218
        %1220 = vmatmul.bf16.gmra.mxu0 %v556
        %v1221 = vpop.f32.mrf.mxu0
        %v1222 = vadd.f32 0.0, %v1221
        %v1223 = vpop.f32.mrf.mxu0
        %v1224 = vadd.f32 0.0, %v1223
        %1225 = vmatmul.bf16.gmra.mxu0 %v557
        %v1226 = vpop.f32.mrf.mxu0
        %v1227 = vadd.f32 0.0, %v1226
        %v1228 = vpop.f32.mrf.mxu0
        %v1229 = vadd.f32 0.0, %v1228
        %1230 = vmatmul.bf16.gmra.mxu0 %v558
        %v1231 = vpop.f32.mrf.mxu0
        %v1232 = vadd.f32 0.0, %v1231
        %v1233 = vpop.f32.mrf.mxu0
        %v1234 = vadd.f32 0.0, %v1233
        %1235 = vmatmul.bf16.gmra.mxu0 %v559
        %v1236 = vpop.f32.mrf.mxu0
        %v1237 = vadd.f32 0.0, %v1236
        %v1238 = vpop.f32.mrf.mxu0
        %v1239 = vadd.f32 0.0, %v1238
        %1240 = vmatmul.bf16.gmra.mxu0 %v560
        %v1241 = vpop.f32.mrf.mxu0
        %v1242 = vadd.f32 0.0, %v1241
        %v1243 = vpop.f32.mrf.mxu0
        %v1244 = vadd.f32 0.0, %v1243
        %1245 = vmatmul.bf16.gmra.mxu0 %v561
        %v1246 = vpop.f32.mrf.mxu0
        %v1247 = vadd.f32 0.0, %v1246
        %v1248 = vpop.f32.mrf.mxu0
        %v1249 = vadd.f32 0.0, %v1248
        %1250 = vmatmul.bf16.gmra.mxu0 %v562
        %v1251 = vpop.f32.mrf.mxu0
        %v1252 = vadd.f32 0.0, %v1251
        %v1253 = vpop.f32.mrf.mxu0
        %v1254 = vadd.f32 0.0, %v1253
        %1255 = vmatmul.bf16.gmra.mxu0 %v563
        %v1256 = vpop.f32.mrf.mxu0
        %v1257 = vadd.f32 0.0, %v1256
        %v1258 = vpop.f32.mrf.mxu0
        %v1259 = vadd.f32 0.0, %v1258
        %1260 = vmatmul.bf16.gmra.mxu0 %v564
        %v1261 = vpop.f32.mrf.mxu0
        %v1262 = vadd.f32 0.0, %v1261
        %v1263 = vpop.f32.mrf.mxu0
        %v1264 = vadd.f32 0.0, %v1263
        %1265 = vdwg.mxu0
        %1266 = vmatpush.bf16.msra.mxu0 %v772
        %1267 = vmatpush.bf16.msra.mxu0 %v766
        %1268 = vmatpush.bf16.msra.mxu0 %v760
        %1269 = vmatpush.bf16.msra.mxu0 %v754
        %1270 = vmatpush.bf16.msra.mxu0 %v748
        %1271 = vmatpush.bf16.msra.mxu0 %v742
        %1272 = vmatpush.bf16.msra.mxu0 %v736
        %1273 = vmatpush.bf16.msra.mxu0 %v730
        %1274 = vmatmul.bf16.gmra.mxu0 %v549
        %v1275 = vpop.f32.mrf.mxu0
        %v1276 = vadd.f32 0.0, %v1275
        %v1277 = vpop.f32.mrf.mxu0
        %v1278 = vadd.f32 0.0, %v1277
        %1279 = vmatmul.bf16.gmra.mxu0 %v550
        %v1280 = vpop.f32.mrf.mxu0
        %v1281 = vadd.f32 0.0, %v1280
        %v1282 = vpop.f32.mrf.mxu0
        %v1283 = vadd.f32 0.0, %v1282
        %1284 = vmatmul.bf16.gmra.mxu0 %v551
        %v1285 = vpop.f32.mrf.mxu0
        %v1286 = vadd.f32 0.0, %v1285
        %v1287 = vpop.f32.mrf.mxu0
        %v1288 = vadd.f32 0.0, %v1287
        %1289 = vmatmul.bf16.gmra.mxu0 %v552
        %v1290 = vpop.f32.mrf.mxu0
        %v1291 = vadd.f32 0.0, %v1290
        %v1292 = vpop.f32.mrf.mxu0
        %v1293 = vadd.f32 0.0, %v1292
        %1294 = vmatmul.bf16.gmra.mxu0 %v553
        %v1295 = vpop.f32.mrf.mxu0
        %v1296 = vadd.f32 0.0, %v1295
        %v1297 = vpop.f32.mrf.mxu0
        %v1298 = vadd.f32 0.0, %v1297
        %1299 = vmatmul.bf16.gmra.mxu0 %v554
        %v1300 = vpop.f32.mrf.mxu0
        %v1301 = vadd.f32 0.0, %v1300
        %v1302 = vpop.f32.mrf.mxu0
        %v1303 = vadd.f32 0.0, %v1302
        %1304 = vmatmul.bf16.gmra.mxu0 %v555
        %v1305 = vpop.f32.mrf.mxu0
        %v1306 = vadd.f32 0.0, %v1305
        %v1307 = vpop.f32.mrf.mxu0
        %v1308 = vadd.f32 0.0, %v1307
        %1309 = vmatmul.bf16.gmra.mxu0 %v556
        %v1310 = vpop.f32.mrf.mxu0
        %v1311 = vadd.f32 0.0, %v1310
        %v1312 = vpop.f32.mrf.mxu0
        %v1313 = vadd.f32 0.0, %v1312
        %1314 = vmatmul.bf16.gmra.mxu0 %v557
        %v1315 = vpop.f32.mrf.mxu0
        %v1316 = vadd.f32 0.0, %v1315
        %v1317 = vpop.f32.mrf.mxu0
        %v1318 = vadd.f32 0.0, %v1317
        %1319 = vmatmul.bf16.gmra.mxu0 %v558
        %v1320 = vpop.f32.mrf.mxu0
        %v1321 = vadd.f32 0.0, %v1320
        %v1322 = vpop.f32.mrf.mxu0
        %v1323 = vadd.f32 0.0, %v1322
        %1324 = vmatmul.bf16.gmra.mxu0 %v559
        %v1325 = vpop.f32.mrf.mxu0
        %v1326 = vadd.f32 0.0, %v1325
        %v1327 = vpop.f32.mrf.mxu0
        %v1328 = vadd.f32 0.0, %v1327
        %1329 = vmatmul.bf16.gmra.mxu0 %v560
        %v1330 = vpop.f32.mrf.mxu0
        %v1331 = vadd.f32 0.0, %v1330
        %v1332 = vpop.f32.mrf.mxu0
        %v1333 = vadd.f32 0.0, %v1332
        %1334 = vmatmul.bf16.gmra.mxu0 %v561
        %v1335 = vpop.f32.mrf.mxu0
        %v1336 = vadd.f32 0.0, %v1335
        %v1337 = vpop.f32.mrf.mxu0
        %v1338 = vadd.f32 0.0, %v1337
        %1339 = vmatmul.bf16.gmra.mxu0 %v562
        %v1340 = vpop.f32.mrf.mxu0
        %v1341 = vadd.f32 0.0, %v1340
        %v1342 = vpop.f32.mrf.mxu0
        %v1343 = vadd.f32 0.0, %v1342
        %1344 = vmatmul.bf16.gmra.mxu0 %v563
        %v1345 = vpop.f32.mrf.mxu0
        %v1346 = vadd.f32 0.0, %v1345
        %v1347 = vpop.f32.mrf.mxu0
        %v1348 = vadd.f32 0.0, %v1347
        %1349 = vmatmul.bf16.gmra.mxu0 %v564
        %v1350 = vpop.f32.mrf.mxu0
        %v1351 = vadd.f32 0.0, %v1350
        %v1352 = vpop.f32.mrf.mxu0
        %v1353 = vadd.f32 0.0, %v1352
        %1354 = vdwg.mxu0
        %v1355 = vld [vmem:[%s337] sm:$0xff]
        %v1356 = vld [vmem:[%s337 + $0x8] sm:$0xff]
        %v1357 = vld [vmem:[%s337 + $0x10] sm:$0xff]
        %v1358 = vld [vmem:[%s337 + $0x18] sm:$0xff]
        %v1359 = vld [vmem:[%s337 + $0x20] sm:$0xff]
        %v1360 = vld [vmem:[%s337 + $0x28] sm:$0xff]
        %v1361 = vld [vmem:[%s337 + $0x30] sm:$0xff]
        %v1362 = vld [vmem:[%s337 + $0x38] sm:$0xff]
        %v1363 = vld [vmem:[%s337 + $0x40] sm:$0xff]
        %v1364 = vld [vmem:[%s337 + $0x48] sm:$0xff]
        %v1365 = vld [vmem:[%s337 + $0x50] sm:$0xff]
        %v1366 = vld [vmem:[%s337 + $0x58] sm:$0xff]
        %v1367 = vld [vmem:[%s337 + $0x60] sm:$0xff]
        %v1368 = vld [vmem:[%s337 + $0x68] sm:$0xff]
        %v1369 = vld [vmem:[%s337 + $0x70] sm:$0xff]
        %v1370 = vld [vmem:[%s337 + $0x78] sm:$0xff]
        %v1371 = vld [vmem:[%s337 + $0x80] sm:$0xff]
        %v1372 = vld [vmem:[%s337 + $0x88] sm:$0xff]
        %v1373 = vld [vmem:[%s337 + $0x90] sm:$0xff]
        %v1374 = vld [vmem:[%s337 + $0x98] sm:$0xff]
        %v1375 = vld [vmem:[%s337 + $0xa0] sm:$0xff]
        %v1376 = vld [vmem:[%s337 + $0xa8] sm:$0xff]
        %v1377 = vld [vmem:[%s337 + $0xb0] sm:$0xff]
        %v1378 = vld [vmem:[%s337 + $0xb8] sm:$0xff]
        %v1379 = vld [vmem:[%s337 + $0xc0] sm:$0xff]
        %v1380 = vld [vmem:[%s337 + $0xc8] sm:$0xff]
        %v1381 = vld [vmem:[%s337 + $0xd0] sm:$0xff]
        %v1382 = vld [vmem:[%s337 + $0xd8] sm:$0xff]
        %v1383 = vld [vmem:[%s337 + $0xe0] sm:$0xff]
        %v1384 = vld [vmem:[%s337 + $0xe8] sm:$0xff]
        %v1385 = vld [vmem:[%s337 + $0xf0] sm:$0xff]
        %v1386 = vld [vmem:[%s337 + $0xf8] sm:$0xff]
        %v1387 = vld [vmem:[%s337 + $0x100] sm:$0xff]
        %v1388 = vld [vmem:[%s337 + $0x108] sm:$0xff]
        %v1389 = vld [vmem:[%s337 + $0x110] sm:$0xff]
        %v1390 = vld [vmem:[%s337 + $0x118] sm:$0xff]
        %v1391 = vld [vmem:[%s337 + $0x120] sm:$0xff]
        %v1392 = vld [vmem:[%s337 + $0x128] sm:$0xff]
        %v1393 = vld [vmem:[%s337 + $0x130] sm:$0xff]
        %v1394 = vld [vmem:[%s337 + $0x138] sm:$0xff]
        %v1395 = vld [vmem:[%s337 + $0x140] sm:$0xff]
        %v1396 = vld [vmem:[%s337 + $0x148] sm:$0xff]
        %v1397 = vld [vmem:[%s337 + $0x150] sm:$0xff]
        %v1398 = vld [vmem:[%s337 + $0x158] sm:$0xff]
        %v1399 = vld [vmem:[%s337 + $0x160] sm:$0xff]
        %v1400 = vld [vmem:[%s337 + $0x168] sm:$0xff]
        %v1401 = vld [vmem:[%s337 + $0x170] sm:$0xff]
        %v1402 = vld [vmem:[%s337 + $0x178] sm:$0xff]
        %v1403 = vld [vmem:[%s337 + $0x180] sm:$0xff]
        %v1404 = vld [vmem:[%s337 + $0x188] sm:$0xff]
        %v1405 = vld [vmem:[%s337 + $0x190] sm:$0xff]
        %v1406 = vld [vmem:[%s337 + $0x198] sm:$0xff]
        %v1407 = vld [vmem:[%s337 + $0x1a0] sm:$0xff]
        %v1408 = vld [vmem:[%s337 + $0x1a8] sm:$0xff]
        %v1409 = vld [vmem:[%s337 + $0x1b0] sm:$0xff]
        %v1410 = vld [vmem:[%s337 + $0x1b8] sm:$0xff]
        %v1411 = vld [vmem:[%s337 + $0x1c0] sm:$0xff]
        %v1412 = vld [vmem:[%s337 + $0x1c8] sm:$0xff]
        %v1413 = vld [vmem:[%s337 + $0x1d0] sm:$0xff]
        %v1414 = vld [vmem:[%s337 + $0x1d8] sm:$0xff]
        %v1415 = vld [vmem:[%s337 + $0x1e0] sm:$0xff]
        %v1416 = vld [vmem:[%s337 + $0x1e8] sm:$0xff]
        %v1417 = vld [vmem:[%s337 + $0x1f0] sm:$0xff]
        %v1418 = vld [vmem:[%s337 + $0x1f8] sm:$0xff]
        %v1419 = vld [vmem:[%s337 + $0x200] sm:$0xff]
        %v1420 = vld [vmem:[%s337 + $0x208] sm:$0xff]
        %v1421 = vld [vmem:[%s337 + $0x210] sm:$0xff]
        %v1422 = vld [vmem:[%s337 + $0x218] sm:$0xff]
        %v1423 = vld [vmem:[%s337 + $0x220] sm:$0xff]
        %v1424 = vld [vmem:[%s337 + $0x228] sm:$0xff]
        %v1425 = vld [vmem:[%s337 + $0x230] sm:$0xff]
        %v1426 = vld [vmem:[%s337 + $0x238] sm:$0xff]
        %v1427 = vld [vmem:[%s337 + $0x240] sm:$0xff]
        %v1428 = vld [vmem:[%s337 + $0x248] sm:$0xff]
        %v1429 = vld [vmem:[%s337 + $0x250] sm:$0xff]
        %v1430 = vld [vmem:[%s337 + $0x258] sm:$0xff]
        %v1431 = vld [vmem:[%s337 + $0x260] sm:$0xff]
        %v1432 = vld [vmem:[%s337 + $0x268] sm:$0xff]
        %v1433 = vld [vmem:[%s337 + $0x270] sm:$0xff]
        %v1434 = vld [vmem:[%s337 + $0x278] sm:$0xff]
        %v1435 = vld [vmem:[%s337 + $0x280] sm:$0xff]
        %v1436 = vld [vmem:[%s337 + $0x288] sm:$0xff]
        %v1437 = vld [vmem:[%s337 + $0x290] sm:$0xff]
        %v1438 = vld [vmem:[%s337 + $0x298] sm:$0xff]
        %v1439 = vld [vmem:[%s337 + $0x2a0] sm:$0xff]
        %v1440 = vld [vmem:[%s337 + $0x2a8] sm:$0xff]
        %v1441 = vld [vmem:[%s337 + $0x2b0] sm:$0xff]
        %v1442 = vld [vmem:[%s337 + $0x2b8] sm:$0xff]
        %v1443 = vld [vmem:[%s337 + $0x2c0] sm:$0xff]
        %v1444 = vld [vmem:[%s337 + $0x2c8] sm:$0xff]
        %v1445 = vld [vmem:[%s337 + $0x2d0] sm:$0xff]
        %v1446 = vld [vmem:[%s337 + $0x2d8] sm:$0xff]
        %v1447 = vld [vmem:[%s337 + $0x2e0] sm:$0xff]
        %v1448 = vld [vmem:[%s337 + $0x2e8] sm:$0xff]
        %v1449 = vld [vmem:[%s337 + $0x2f0] sm:$0xff]
        %v1450 = vld [vmem:[%s337 + $0x2f8] sm:$0xff]
        %v1451 = vld [vmem:[%s337 + $0x300] sm:$0xff]
        %v1452 = vld [vmem:[%s337 + $0x308] sm:$0xff]
        %v1453 = vld [vmem:[%s337 + $0x310] sm:$0xff]
        %v1454 = vld [vmem:[%s337 + $0x318] sm:$0xff]
        %v1455 = vld [vmem:[%s337 + $0x320] sm:$0xff]
        %v1456 = vld [vmem:[%s337 + $0x328] sm:$0xff]
        %v1457 = vld [vmem:[%s337 + $0x330] sm:$0xff]
        %v1458 = vld [vmem:[%s337 + $0x338] sm:$0xff]
        %v1459 = vld [vmem:[%s337 + $0x340] sm:$0xff]
        %v1460 = vld [vmem:[%s337 + $0x348] sm:$0xff]
        %v1461 = vld [vmem:[%s337 + $0x350] sm:$0xff]
        %v1462 = vld [vmem:[%s337 + $0x358] sm:$0xff]
        %v1463 = vld [vmem:[%s337 + $0x360] sm:$0xff]
        %v1464 = vld [vmem:[%s337 + $0x368] sm:$0xff]
        %v1465 = vld [vmem:[%s337 + $0x370] sm:$0xff]
        %v1466 = vld [vmem:[%s337 + $0x378] sm:$0xff]
        %v1467 = vld [vmem:[%s337 + $0x380] sm:$0xff]
        %v1468 = vld [vmem:[%s337 + $0x388] sm:$0xff]
        %v1469 = vld [vmem:[%s337 + $0x390] sm:$0xff]
        %v1470 = vld [vmem:[%s337 + $0x398] sm:$0xff]
        %v1471 = vld [vmem:[%s337 + $0x3a0] sm:$0xff]
        %v1472 = vld [vmem:[%s337 + $0x3a8] sm:$0xff]
        %v1473 = vld [vmem:[%s337 + $0x3b0] sm:$0xff]
        %v1474 = vld [vmem:[%s337 + $0x3b8] sm:$0xff]
        %v1475 = vld [vmem:[%s337 + $0x3c0] sm:$0xff]
        %v1476 = vld [vmem:[%s337 + $0x3c8] sm:$0xff]
        %v1477 = vld [vmem:[%s337 + $0x3d0] sm:$0xff]
        %v1478 = vld [vmem:[%s337 + $0x3d8] sm:$0xff]
        %v1479 = vld [vmem:[%s337 + $0x3e0] sm:$0xff]
        %v1480 = vld [vmem:[%s337 + $0x3e8] sm:$0xff]
        %v1481 = vld [vmem:[%s337 + $0x3f0] sm:$0xff]
        %v1482 = vld [vmem:[%s337 + $0x3f8] sm:$0xff]
        %v1483 = vld [vmem:[%s337 + $0x400] sm:$0xff]
        %v1484 = vld [vmem:[%s337 + $0x408] sm:$0xff]
        %v1485 = vld [vmem:[%s337 + $0x410] sm:$0xff]
        %v1486 = vld [vmem:[%s337 + $0x418] sm:$0xff]
        %v1487 = vld [vmem:[%s337 + $0x420] sm:$0xff]
        %v1488 = vld [vmem:[%s337 + $0x428] sm:$0xff]
        %v1489 = vld [vmem:[%s337 + $0x430] sm:$0xff]
        %v1490 = vld [vmem:[%s337 + $0x438] sm:$0xff]
        %v1491 = vld [vmem:[%s337 + $0x440] sm:$0xff]
        %v1492 = vld [vmem:[%s337 + $0x448] sm:$0xff]
        %v1493 = vld [vmem:[%s337 + $0x450] sm:$0xff]
        %v1494 = vld [vmem:[%s337 + $0x458] sm:$0xff]
        %v1495 = vld [vmem:[%s337 + $0x460] sm:$0xff]
        %v1496 = vld [vmem:[%s337 + $0x468] sm:$0xff]
        %v1497 = vld [vmem:[%s337 + $0x470] sm:$0xff]
        %v1498 = vld [vmem:[%s337 + $0x478] sm:$0xff]
        %v1499 = vld [vmem:[%s337 + $0x480] sm:$0xff]
        %v1500 = vld [vmem:[%s337 + $0x488] sm:$0xff]
        %v1501 = vld [vmem:[%s337 + $0x490] sm:$0xff]
        %v1502 = vld [vmem:[%s337 + $0x498] sm:$0xff]
        %v1503 = vld [vmem:[%s337 + $0x4a0] sm:$0xff]
        %v1504 = vld [vmem:[%s337 + $0x4a8] sm:$0xff]
        %v1505 = vld [vmem:[%s337 + $0x4b0] sm:$0xff]
        %v1506 = vld [vmem:[%s337 + $0x4b8] sm:$0xff]
        %v1507 = vld [vmem:[%s337 + $0x4c0] sm:$0xff]
        %v1508 = vld [vmem:[%s337 + $0x4c8] sm:$0xff]
        %v1509 = vld [vmem:[%s337 + $0x4d0] sm:$0xff]
        %v1510 = vld [vmem:[%s337 + $0x4d8] sm:$0xff]
        %v1511 = vld [vmem:[%s337 + $0x4e0] sm:$0xff]
        %v1512 = vld [vmem:[%s337 + $0x4e8] sm:$0xff]
        %v1513 = vld [vmem:[%s337 + $0x4f0] sm:$0xff]
        %v1514 = vld [vmem:[%s337 + $0x4f8] sm:$0xff]
        %v1515 = vld [vmem:[%s337 + $0x500] sm:$0xff]
        %v1516 = vld [vmem:[%s337 + $0x508] sm:$0xff]
        %v1517 = vld [vmem:[%s337 + $0x510] sm:$0xff]
        %v1518 = vld [vmem:[%s337 + $0x518] sm:$0xff]
        %v1519 = vld [vmem:[%s337 + $0x520] sm:$0xff]
        %v1520 = vld [vmem:[%s337 + $0x528] sm:$0xff]
        %v1521 = vld [vmem:[%s337 + $0x530] sm:$0xff]
        %v1522 = vld [vmem:[%s337 + $0x538] sm:$0xff]
        %v1523 = vld [vmem:[%s337 + $0x540] sm:$0xff]
        %v1524 = vld [vmem:[%s337 + $0x548] sm:$0xff]
        %v1525 = vld [vmem:[%s337 + $0x550] sm:$0xff]
        %v1526 = vld [vmem:[%s337 + $0x558] sm:$0xff]
        %v1527 = vld [vmem:[%s337 + $0x560] sm:$0xff]
        %v1528 = vld [vmem:[%s337 + $0x568] sm:$0xff]
        %v1529 = vld [vmem:[%s337 + $0x570] sm:$0xff]
        %v1530 = vld [vmem:[%s337 + $0x578] sm:$0xff]
        %v1531 = vld [vmem:[%s337 + $0x580] sm:$0xff]
        %v1532 = vld [vmem:[%s337 + $0x588] sm:$0xff]
        %v1533 = vld [vmem:[%s337 + $0x590] sm:$0xff]
        %v1534 = vld [vmem:[%s337 + $0x598] sm:$0xff]
        %v1535 = vld [vmem:[%s337 + $0x5a0] sm:$0xff]
        %v1536 = vld [vmem:[%s337 + $0x5a8] sm:$0xff]
        %v1537 = vld [vmem:[%s337 + $0x5b0] sm:$0xff]
        %v1538 = vld [vmem:[%s337 + $0x5b8] sm:$0xff]
        %v1539 = vld [vmem:[%s337 + $0x5c0] sm:$0xff]
        %v1540 = vld [vmem:[%s337 + $0x5c8] sm:$0xff]
        %v1541 = vld [vmem:[%s337 + $0x5d0] sm:$0xff]
        %v1542 = vld [vmem:[%s337 + $0x5d8] sm:$0xff]
        %v1543 = vld [vmem:[%s337 + $0x5e0] sm:$0xff]
        %v1544 = vld [vmem:[%s337 + $0x5e8] sm:$0xff]
        %v1545 = vld [vmem:[%s337 + $0x5f0] sm:$0xff]
        %v1546 = vld [vmem:[%s337 + $0x5f8] sm:$0xff]
        %v1547 = vld [vmem:[%s347] sm:$0xff]
        %v1548 = vld [vmem:[%s347 + $0x8] sm:$0xff]
        %v1549 = vld [vmem:[%s347 + $0x10] sm:$0xff]
        %v1550 = vld [vmem:[%s347 + $0x18] sm:$0xff]
        %v1551 = vld [vmem:[%s347 + $0x20] sm:$0xff]
        %v1552 = vld [vmem:[%s347 + $0x28] sm:$0xff]
        %v1553 = vld [vmem:[%s347 + $0x30] sm:$0xff]
        %v1554 = vld [vmem:[%s347 + $0x38] sm:$0xff]
        %v1555 = vld [vmem:[%s347 + $0x40] sm:$0xff]
        %v1556 = vld [vmem:[%s347 + $0x48] sm:$0xff]
        %v1557 = vld [vmem:[%s347 + $0x50] sm:$0xff]
        %v1558 = vld [vmem:[%s347 + $0x58] sm:$0xff]
        %v1559 = vld [vmem:[%s347 + $0x60] sm:$0xff]
        %v1560 = vld [vmem:[%s347 + $0x68] sm:$0xff]
        %v1561 = vld [vmem:[%s347 + $0x70] sm:$0xff]
        %v1562 = vld [vmem:[%s347 + $0x78] sm:$0xff]
        %v1563 = vld [vmem:[%s347 + $0x80] sm:$0xff]
        %v1564 = vld [vmem:[%s347 + $0x88] sm:$0xff]
        %v1565 = vld [vmem:[%s347 + $0x90] sm:$0xff]
        %v1566 = vld [vmem:[%s347 + $0x98] sm:$0xff]
        %v1567 = vld [vmem:[%s347 + $0xa0] sm:$0xff]
        %v1568 = vld [vmem:[%s347 + $0xa8] sm:$0xff]
        %v1569 = vld [vmem:[%s347 + $0xb0] sm:$0xff]
        %v1570 = vld [vmem:[%s347 + $0xb8] sm:$0xff]
        %v1571 = vld [vmem:[%s347 + $0xc0] sm:$0xff]
        %v1572 = vld [vmem:[%s347 + $0xc8] sm:$0xff]
        %v1573 = vld [vmem:[%s347 + $0xd0] sm:$0xff]
        %v1574 = vld [vmem:[%s347 + $0xd8] sm:$0xff]
        %v1575 = vld [vmem:[%s347 + $0xe0] sm:$0xff]
        %v1576 = vld [vmem:[%s347 + $0xe8] sm:$0xff]
        %v1577 = vld [vmem:[%s347 + $0xf0] sm:$0xff]
        %v1578 = vld [vmem:[%s347 + $0xf8] sm:$0xff]
        %v1579 = vld [vmem:[%s347 + $0x100] sm:$0xff]
        %v1580 = vld [vmem:[%s347 + $0x108] sm:$0xff]
        %v1581 = vld [vmem:[%s347 + $0x110] sm:$0xff]
        %v1582 = vld [vmem:[%s347 + $0x118] sm:$0xff]
        %v1583 = vld [vmem:[%s347 + $0x120] sm:$0xff]
        %v1584 = vld [vmem:[%s347 + $0x128] sm:$0xff]
        %v1585 = vld [vmem:[%s347 + $0x130] sm:$0xff]
        %v1586 = vld [vmem:[%s347 + $0x138] sm:$0xff]
        %v1587 = vld [vmem:[%s347 + $0x140] sm:$0xff]
        %v1588 = vld [vmem:[%s347 + $0x148] sm:$0xff]
        %v1589 = vld [vmem:[%s347 + $0x150] sm:$0xff]
        %v1590 = vld [vmem:[%s347 + $0x158] sm:$0xff]
        %v1591 = vld [vmem:[%s347 + $0x160] sm:$0xff]
        %v1592 = vld [vmem:[%s347 + $0x168] sm:$0xff]
        %v1593 = vld [vmem:[%s347 + $0x170] sm:$0xff]
        %v1594 = vld [vmem:[%s347 + $0x178] sm:$0xff]
        %v1595 = vld [vmem:[%s347 + $0x180] sm:$0xff]
        %v1596 = vld [vmem:[%s347 + $0x188] sm:$0xff]
        %v1597 = vld [vmem:[%s347 + $0x190] sm:$0xff]
        %v1598 = vld [vmem:[%s347 + $0x198] sm:$0xff]
        %v1599 = vld [vmem:[%s347 + $0x1a0] sm:$0xff]
        %v1600 = vld [vmem:[%s347 + $0x1a8] sm:$0xff]
        %v1601 = vld [vmem:[%s347 + $0x1b0] sm:$0xff]
        %v1602 = vld [vmem:[%s347 + $0x1b8] sm:$0xff]
        %v1603 = vld [vmem:[%s347 + $0x1c0] sm:$0xff]
        %v1604 = vld [vmem:[%s347 + $0x1c8] sm:$0xff]
        %v1605 = vld [vmem:[%s347 + $0x1d0] sm:$0xff]
        %v1606 = vld [vmem:[%s347 + $0x1d8] sm:$0xff]
        %v1607 = vld [vmem:[%s347 + $0x1e0] sm:$0xff]
        %v1608 = vld [vmem:[%s347 + $0x1e8] sm:$0xff]
        %v1609 = vld [vmem:[%s347 + $0x1f0] sm:$0xff]
        %v1610 = vld [vmem:[%s347 + $0x1f8] sm:$0xff]
        %v1611 = vld [vmem:[%s347 + $0x200] sm:$0xff]
        %v1612 = vld [vmem:[%s347 + $0x208] sm:$0xff]
        %v1613 = vld [vmem:[%s347 + $0x210] sm:$0xff]
        %v1614 = vld [vmem:[%s347 + $0x218] sm:$0xff]
        %v1615 = vld [vmem:[%s347 + $0x220] sm:$0xff]
        %v1616 = vld [vmem:[%s347 + $0x228] sm:$0xff]
        %v1617 = vld [vmem:[%s347 + $0x230] sm:$0xff]
        %v1618 = vld [vmem:[%s347 + $0x238] sm:$0xff]
        %v1619 = vld [vmem:[%s347 + $0x240] sm:$0xff]
        %v1620 = vld [vmem:[%s347 + $0x248] sm:$0xff]
        %v1621 = vld [vmem:[%s347 + $0x250] sm:$0xff]
        %v1622 = vld [vmem:[%s347 + $0x258] sm:$0xff]
        %v1623 = vld [vmem:[%s347 + $0x260] sm:$0xff]
        %v1624 = vld [vmem:[%s347 + $0x268] sm:$0xff]
        %v1625 = vld [vmem:[%s347 + $0x270] sm:$0xff]
        %v1626 = vld [vmem:[%s347 + $0x278] sm:$0xff]
        %v1627 = vld [vmem:[%s347 + $0x280] sm:$0xff]
        %v1628 = vld [vmem:[%s347 + $0x288] sm:$0xff]
        %v1629 = vld [vmem:[%s347 + $0x290] sm:$0xff]
        %v1630 = vld [vmem:[%s347 + $0x298] sm:$0xff]
        %v1631 = vld [vmem:[%s347 + $0x2a0] sm:$0xff]
        %v1632 = vld [vmem:[%s347 + $0x2a8] sm:$0xff]
        %v1633 = vld [vmem:[%s347 + $0x2b0] sm:$0xff]
        %v1634 = vld [vmem:[%s347 + $0x2b8] sm:$0xff]
        %v1635 = vld [vmem:[%s347 + $0x2c0] sm:$0xff]
        %v1636 = vld [vmem:[%s347 + $0x2c8] sm:$0xff]
        %v1637 = vld [vmem:[%s347 + $0x2d0] sm:$0xff]
        %v1638 = vld [vmem:[%s347 + $0x2d8] sm:$0xff]
        %v1639 = vld [vmem:[%s347 + $0x2e0] sm:$0xff]
        %v1640 = vld [vmem:[%s347 + $0x2e8] sm:$0xff]
        %v1641 = vld [vmem:[%s347 + $0x2f0] sm:$0xff]
        %v1642 = vld [vmem:[%s347 + $0x2f8] sm:$0xff]
        %v1643 = vld [vmem:[%s347 + $0x300] sm:$0xff]
        %v1644 = vld [vmem:[%s347 + $0x308] sm:$0xff]
        %v1645 = vld [vmem:[%s347 + $0x310] sm:$0xff]
        %v1646 = vld [vmem:[%s347 + $0x318] sm:$0xff]
        %v1647 = vld [vmem:[%s347 + $0x320] sm:$0xff]
        %v1648 = vld [vmem:[%s347 + $0x328] sm:$0xff]
        %v1649 = vld [vmem:[%s347 + $0x330] sm:$0xff]
        %v1650 = vld [vmem:[%s347 + $0x338] sm:$0xff]
        %v1651 = vld [vmem:[%s347 + $0x340] sm:$0xff]
        %v1652 = vld [vmem:[%s347 + $0x348] sm:$0xff]
        %v1653 = vld [vmem:[%s347 + $0x350] sm:$0xff]
        %v1654 = vld [vmem:[%s347 + $0x358] sm:$0xff]
        %v1655 = vld [vmem:[%s347 + $0x360] sm:$0xff]
        %v1656 = vld [vmem:[%s347 + $0x368] sm:$0xff]
        %v1657 = vld [vmem:[%s347 + $0x370] sm:$0xff]
        %v1658 = vld [vmem:[%s347 + $0x378] sm:$0xff]
        %v1659 = vld [vmem:[%s347 + $0x380] sm:$0xff]
        %v1660 = vld [vmem:[%s347 + $0x388] sm:$0xff]
        %v1661 = vld [vmem:[%s347 + $0x390] sm:$0xff]
        %v1662 = vld [vmem:[%s347 + $0x398] sm:$0xff]
        %v1663 = vld [vmem:[%s347 + $0x3a0] sm:$0xff]
        %v1664 = vld [vmem:[%s347 + $0x3a8] sm:$0xff]
        %v1665 = vld [vmem:[%s347 + $0x3b0] sm:$0xff]
        %v1666 = vld [vmem:[%s347 + $0x3b8] sm:$0xff]
        %v1667 = vld [vmem:[%s347 + $0x3c0] sm:$0xff]
        %v1668 = vld [vmem:[%s347 + $0x3c8] sm:$0xff]
        %v1669 = vld [vmem:[%s347 + $0x3d0] sm:$0xff]
        %v1670 = vld [vmem:[%s347 + $0x3d8] sm:$0xff]
        %v1671 = vld [vmem:[%s347 + $0x3e0] sm:$0xff]
        %v1672 = vld [vmem:[%s347 + $0x3e8] sm:$0xff]
        %v1673 = vld [vmem:[%s347 + $0x3f0] sm:$0xff]
        %v1674 = vld [vmem:[%s347 + $0x3f8] sm:$0xff]
        %v1675 = vld [vmem:[%s347 + $0x400] sm:$0xff]
        %v1676 = vld [vmem:[%s347 + $0x408] sm:$0xff]
        %v1677 = vld [vmem:[%s347 + $0x410] sm:$0xff]
        %v1678 = vld [vmem:[%s347 + $0x418] sm:$0xff]
        %v1679 = vld [vmem:[%s347 + $0x420] sm:$0xff]
        %v1680 = vld [vmem:[%s347 + $0x428] sm:$0xff]
        %v1681 = vld [vmem:[%s347 + $0x430] sm:$0xff]
        %v1682 = vld [vmem:[%s347 + $0x438] sm:$0xff]
        %v1683 = vld [vmem:[%s347 + $0x440] sm:$0xff]
        %v1684 = vld [vmem:[%s347 + $0x448] sm:$0xff]
        %v1685 = vld [vmem:[%s347 + $0x450] sm:$0xff]
        %v1686 = vld [vmem:[%s347 + $0x458] sm:$0xff]
        %v1687 = vld [vmem:[%s347 + $0x460] sm:$0xff]
        %v1688 = vld [vmem:[%s347 + $0x468] sm:$0xff]
        %v1689 = vld [vmem:[%s347 + $0x470] sm:$0xff]
        %v1690 = vld [vmem:[%s347 + $0x478] sm:$0xff]
        %v1691 = vld [vmem:[%s347 + $0x480] sm:$0xff]
        %v1692 = vld [vmem:[%s347 + $0x488] sm:$0xff]
        %v1693 = vld [vmem:[%s347 + $0x490] sm:$0xff]
        %v1694 = vld [vmem:[%s347 + $0x498] sm:$0xff]
        %v1695 = vld [vmem:[%s347 + $0x4a0] sm:$0xff]
        %v1696 = vld [vmem:[%s347 + $0x4a8] sm:$0xff]
        %v1697 = vld [vmem:[%s347 + $0x4b0] sm:$0xff]
        %v1698 = vld [vmem:[%s347 + $0x4b8] sm:$0xff]
        %v1699 = vld [vmem:[%s347 + $0x4c0] sm:$0xff]
        %v1700 = vld [vmem:[%s347 + $0x4c8] sm:$0xff]
        %v1701 = vld [vmem:[%s347 + $0x4d0] sm:$0xff]
        %v1702 = vld [vmem:[%s347 + $0x4d8] sm:$0xff]
        %v1703 = vld [vmem:[%s347 + $0x4e0] sm:$0xff]
        %v1704 = vld [vmem:[%s347 + $0x4e8] sm:$0xff]
        %v1705 = vld [vmem:[%s347 + $0x4f0] sm:$0xff]
        %v1706 = vld [vmem:[%s347 + $0x4f8] sm:$0xff]
        %v1707 = vld [vmem:[%s347 + $0x500] sm:$0xff]
        %v1708 = vld [vmem:[%s347 + $0x508] sm:$0xff]
        %v1709 = vld [vmem:[%s347 + $0x510] sm:$0xff]
        %v1710 = vld [vmem:[%s347 + $0x518] sm:$0xff]
        %v1711 = vld [vmem:[%s347 + $0x520] sm:$0xff]
        %v1712 = vld [vmem:[%s347 + $0x528] sm:$0xff]
        %v1713 = vld [vmem:[%s347 + $0x530] sm:$0xff]
        %v1714 = vld [vmem:[%s347 + $0x538] sm:$0xff]
        %v1715 = vld [vmem:[%s347 + $0x540] sm:$0xff]
        %v1716 = vld [vmem:[%s347 + $0x548] sm:$0xff]
        %v1717 = vld [vmem:[%s347 + $0x550] sm:$0xff]
        %v1718 = vld [vmem:[%s347 + $0x558] sm:$0xff]
        %v1719 = vld [vmem:[%s347 + $0x560] sm:$0xff]
        %v1720 = vld [vmem:[%s347 + $0x568] sm:$0xff]
        %v1721 = vld [vmem:[%s347 + $0x570] sm:$0xff]
        %v1722 = vld [vmem:[%s347 + $0x578] sm:$0xff]
        %v1723 = vld [vmem:[%s347 + $0x580] sm:$0xff]
        %v1724 = vld [vmem:[%s347 + $0x588] sm:$0xff]
        %v1725 = vld [vmem:[%s347 + $0x590] sm:$0xff]
        %v1726 = vld [vmem:[%s347 + $0x598] sm:$0xff]
        %v1727 = vld [vmem:[%s347 + $0x5a0] sm:$0xff]
        %v1728 = vld [vmem:[%s347 + $0x5a8] sm:$0xff]
        %v1729 = vld [vmem:[%s347 + $0x5b0] sm:$0xff]
        %v1730 = vld [vmem:[%s347 + $0x5b8] sm:$0xff]
        %v1731 = vld [vmem:[%s347 + $0x5c0] sm:$0xff]
        %v1732 = vld [vmem:[%s347 + $0x5c8] sm:$0xff]
        %v1733 = vld [vmem:[%s347 + $0x5d0] sm:$0xff]
        %v1734 = vld [vmem:[%s347 + $0x5d8] sm:$0xff]
        %v1735 = vld [vmem:[%s347 + $0x5e0] sm:$0xff]
        %v1736 = vld [vmem:[%s347 + $0x5e8] sm:$0xff]
        %v1737 = vld [vmem:[%s347 + $0x5f0] sm:$0xff]
        %v1738 = vld [vmem:[%s347 + $0x5f8] sm:$0xff]
        %v1739 = vld [vmem:[%s357] sm:$0xff]
        %v1740 = vld [vmem:[%s357 + $0x8] sm:$0xff]
        %v1741 = vld [vmem:[%s357 + $0x10] sm:$0xff]
        %v1742 = vld [vmem:[%s357 + $0x18] sm:$0xff]
        %v1743 = vld [vmem:[%s357 + $0x20] sm:$0xff]
        %v1744 = vld [vmem:[%s357 + $0x28] sm:$0xff]
        %v1745 = vld [vmem:[%s357 + $0x30] sm:$0xff]
        %v1746 = vld [vmem:[%s357 + $0x38] sm:$0xff]
        %v1747 = vld [vmem:[%s357 + $0x40] sm:$0xff]
        %v1748 = vld [vmem:[%s357 + $0x48] sm:$0xff]
        %v1749 = vld [vmem:[%s357 + $0x50] sm:$0xff]
        %v1750 = vld [vmem:[%s357 + $0x58] sm:$0xff]
        %v1751 = vld [vmem:[%s357 + $0x60] sm:$0xff]
        %v1752 = vld [vmem:[%s357 + $0x68] sm:$0xff]
        %v1753 = vld [vmem:[%s357 + $0x70] sm:$0xff]
        %v1754 = vld [vmem:[%s357 + $0x78] sm:$0xff]
        %v1755 = vld [vmem:[%s357 + $0x80] sm:$0xff]
        %v1756 = vld [vmem:[%s357 + $0x88] sm:$0xff]
        %v1757 = vld [vmem:[%s357 + $0x90] sm:$0xff]
        %v1758 = vld [vmem:[%s357 + $0x98] sm:$0xff]
        %v1759 = vld [vmem:[%s357 + $0xa0] sm:$0xff]
        %v1760 = vld [vmem:[%s357 + $0xa8] sm:$0xff]
        %v1761 = vld [vmem:[%s357 + $0xb0] sm:$0xff]
        %v1762 = vld [vmem:[%s357 + $0xb8] sm:$0xff]
        %v1763 = vld [vmem:[%s357 + $0xc0] sm:$0xff]
        %v1764 = vld [vmem:[%s357 + $0xc8] sm:$0xff]
        %v1765 = vld [vmem:[%s357 + $0xd0] sm:$0xff]
        %v1766 = vld [vmem:[%s357 + $0xd8] sm:$0xff]
        %v1767 = vld [vmem:[%s357 + $0xe0] sm:$0xff]
        %v1768 = vld [vmem:[%s357 + $0xe8] sm:$0xff]
        %v1769 = vld [vmem:[%s357 + $0xf0] sm:$0xff]
        %v1770 = vld [vmem:[%s357 + $0xf8] sm:$0xff]
        %v1771 = vld [vmem:[%s357 + $0x100] sm:$0xff]
        %v1772 = vld [vmem:[%s357 + $0x108] sm:$0xff]
        %v1773 = vld [vmem:[%s357 + $0x110] sm:$0xff]
        %v1774 = vld [vmem:[%s357 + $0x118] sm:$0xff]
        %v1775 = vld [vmem:[%s357 + $0x120] sm:$0xff]
        %v1776 = vld [vmem:[%s357 + $0x128] sm:$0xff]
        %v1777 = vld [vmem:[%s357 + $0x130] sm:$0xff]
        %v1778 = vld [vmem:[%s357 + $0x138] sm:$0xff]
        %v1779 = vld [vmem:[%s357 + $0x140] sm:$0xff]
        %v1780 = vld [vmem:[%s357 + $0x148] sm:$0xff]
        %v1781 = vld [vmem:[%s357 + $0x150] sm:$0xff]
        %v1782 = vld [vmem:[%s357 + $0x158] sm:$0xff]
        %v1783 = vld [vmem:[%s357 + $0x160] sm:$0xff]
        %v1784 = vld [vmem:[%s357 + $0x168] sm:$0xff]
        %v1785 = vld [vmem:[%s357 + $0x170] sm:$0xff]
        %v1786 = vld [vmem:[%s357 + $0x178] sm:$0xff]
        %v1787 = vld [vmem:[%s357 + $0x180] sm:$0xff]
        %v1788 = vld [vmem:[%s357 + $0x188] sm:$0xff]
        %v1789 = vld [vmem:[%s357 + $0x190] sm:$0xff]
        %v1790 = vld [vmem:[%s357 + $0x198] sm:$0xff]
        %v1791 = vld [vmem:[%s357 + $0x1a0] sm:$0xff]
        %v1792 = vld [vmem:[%s357 + $0x1a8] sm:$0xff]
        %v1793 = vld [vmem:[%s357 + $0x1b0] sm:$0xff]
        %v1794 = vld [vmem:[%s357 + $0x1b8] sm:$0xff]
        %v1795 = vld [vmem:[%s357 + $0x1c0] sm:$0xff]
        %v1796 = vld [vmem:[%s357 + $0x1c8] sm:$0xff]
        %v1797 = vld [vmem:[%s357 + $0x1d0] sm:$0xff]
        %v1798 = vld [vmem:[%s357 + $0x1d8] sm:$0xff]
        %v1799 = vld [vmem:[%s357 + $0x1e0] sm:$0xff]
        %v1800 = vld [vmem:[%s357 + $0x1e8] sm:$0xff]
        %v1801 = vld [vmem:[%s357 + $0x1f0] sm:$0xff]
        %v1802 = vld [vmem:[%s357 + $0x1f8] sm:$0xff]
        %v1803 = vld [vmem:[%s357 + $0x200] sm:$0xff]
        %v1804 = vld [vmem:[%s357 + $0x208] sm:$0xff]
        %v1805 = vld [vmem:[%s357 + $0x210] sm:$0xff]
        %v1806 = vld [vmem:[%s357 + $0x218] sm:$0xff]
        %v1807 = vld [vmem:[%s357 + $0x220] sm:$0xff]
        %v1808 = vld [vmem:[%s357 + $0x228] sm:$0xff]
        %v1809 = vld [vmem:[%s357 + $0x230] sm:$0xff]
        %v1810 = vld [vmem:[%s357 + $0x238] sm:$0xff]
        %v1811 = vld [vmem:[%s357 + $0x240] sm:$0xff]
        %v1812 = vld [vmem:[%s357 + $0x248] sm:$0xff]
        %v1813 = vld [vmem:[%s357 + $0x250] sm:$0xff]
        %v1814 = vld [vmem:[%s357 + $0x258] sm:$0xff]
        %v1815 = vld [vmem:[%s357 + $0x260] sm:$0xff]
        %v1816 = vld [vmem:[%s357 + $0x268] sm:$0xff]
        %v1817 = vld [vmem:[%s357 + $0x270] sm:$0xff]
        %v1818 = vld [vmem:[%s357 + $0x278] sm:$0xff]
        %v1819 = vld [vmem:[%s357 + $0x280] sm:$0xff]
        %v1820 = vld [vmem:[%s357 + $0x288] sm:$0xff]
        %v1821 = vld [vmem:[%s357 + $0x290] sm:$0xff]
        %v1822 = vld [vmem:[%s357 + $0x298] sm:$0xff]
        %v1823 = vld [vmem:[%s357 + $0x2a0] sm:$0xff]
        %v1824 = vld [vmem:[%s357 + $0x2a8] sm:$0xff]
        %v1825 = vld [vmem:[%s357 + $0x2b0] sm:$0xff]
        %v1826 = vld [vmem:[%s357 + $0x2b8] sm:$0xff]
        %v1827 = vld [vmem:[%s357 + $0x2c0] sm:$0xff]
        %v1828 = vld [vmem:[%s357 + $0x2c8] sm:$0xff]
        %v1829 = vld [vmem:[%s357 + $0x2d0] sm:$0xff]
        %v1830 = vld [vmem:[%s357 + $0x2d8] sm:$0xff]
        %v1831 = vld [vmem:[%s357 + $0x2e0] sm:$0xff]
        %v1832 = vld [vmem:[%s357 + $0x2e8] sm:$0xff]
        %v1833 = vld [vmem:[%s357 + $0x2f0] sm:$0xff]
        %v1834 = vld [vmem:[%s357 + $0x2f8] sm:$0xff]
        %v1835 = vld [vmem:[%s357 + $0x300] sm:$0xff]
        %v1836 = vld [vmem:[%s357 + $0x308] sm:$0xff]
        %v1837 = vld [vmem:[%s357 + $0x310] sm:$0xff]
        %v1838 = vld [vmem:[%s357 + $0x318] sm:$0xff]
        %v1839 = vld [vmem:[%s357 + $0x320] sm:$0xff]
        %v1840 = vld [vmem:[%s357 + $0x328] sm:$0xff]
        %v1841 = vld [vmem:[%s357 + $0x330] sm:$0xff]
        %v1842 = vld [vmem:[%s357 + $0x338] sm:$0xff]
        %v1843 = vld [vmem:[%s357 + $0x340] sm:$0xff]
        %v1844 = vld [vmem:[%s357 + $0x348] sm:$0xff]
        %v1845 = vld [vmem:[%s357 + $0x350] sm:$0xff]
        %v1846 = vld [vmem:[%s357 + $0x358] sm:$0xff]
        %v1847 = vld [vmem:[%s357 + $0x360] sm:$0xff]
        %v1848 = vld [vmem:[%s357 + $0x368] sm:$0xff]
        %v1849 = vld [vmem:[%s357 + $0x370] sm:$0xff]
        %v1850 = vld [vmem:[%s357 + $0x378] sm:$0xff]
        %v1851 = vld [vmem:[%s357 + $0x380] sm:$0xff]
        %v1852 = vld [vmem:[%s357 + $0x388] sm:$0xff]
        %v1853 = vld [vmem:[%s357 + $0x390] sm:$0xff]
        %v1854 = vld [vmem:[%s357 + $0x398] sm:$0xff]
        %v1855 = vld [vmem:[%s357 + $0x3a0] sm:$0xff]
        %v1856 = vld [vmem:[%s357 + $0x3a8] sm:$0xff]
        %v1857 = vld [vmem:[%s357 + $0x3b0] sm:$0xff]
        %v1858 = vld [vmem:[%s357 + $0x3b8] sm:$0xff]
        %v1859 = vld [vmem:[%s357 + $0x3c0] sm:$0xff]
        %v1860 = vld [vmem:[%s357 + $0x3c8] sm:$0xff]
        %v1861 = vld [vmem:[%s357 + $0x3d0] sm:$0xff]
        %v1862 = vld [vmem:[%s357 + $0x3d8] sm:$0xff]
        %v1863 = vld [vmem:[%s357 + $0x3e0] sm:$0xff]
        %v1864 = vld [vmem:[%s357 + $0x3e8] sm:$0xff]
        %v1865 = vld [vmem:[%s357 + $0x3f0] sm:$0xff]
        %v1866 = vld [vmem:[%s357 + $0x3f8] sm:$0xff]
        %v1867 = vld [vmem:[%s357 + $0x400] sm:$0xff]
        %v1868 = vld [vmem:[%s357 + $0x408] sm:$0xff]
        %v1869 = vld [vmem:[%s357 + $0x410] sm:$0xff]
        %v1870 = vld [vmem:[%s357 + $0x418] sm:$0xff]
        %v1871 = vld [vmem:[%s357 + $0x420] sm:$0xff]
        %v1872 = vld [vmem:[%s357 + $0x428] sm:$0xff]
        %v1873 = vld [vmem:[%s357 + $0x430] sm:$0xff]
        %v1874 = vld [vmem:[%s357 + $0x438] sm:$0xff]
        %v1875 = vld [vmem:[%s357 + $0x440] sm:$0xff]
        %v1876 = vld [vmem:[%s357 + $0x448] sm:$0xff]
        %v1877 = vld [vmem:[%s357 + $0x450] sm:$0xff]
        %v1878 = vld [vmem:[%s357 + $0x458] sm:$0xff]
        %v1879 = vld [vmem:[%s357 + $0x460] sm:$0xff]
        %v1880 = vld [vmem:[%s357 + $0x468] sm:$0xff]
        %v1881 = vld [vmem:[%s357 + $0x470] sm:$0xff]
        %v1882 = vld [vmem:[%s357 + $0x478] sm:$0xff]
        %v1883 = vld [vmem:[%s357 + $0x480] sm:$0xff]
        %v1884 = vld [vmem:[%s357 + $0x488] sm:$0xff]
        %v1885 = vld [vmem:[%s357 + $0x490] sm:$0xff]
        %v1886 = vld [vmem:[%s357 + $0x498] sm:$0xff]
        %v1887 = vld [vmem:[%s357 + $0x4a0] sm:$0xff]
        %v1888 = vld [vmem:[%s357 + $0x4a8] sm:$0xff]
        %v1889 = vld [vmem:[%s357 + $0x4b0] sm:$0xff]
        %v1890 = vld [vmem:[%s357 + $0x4b8] sm:$0xff]
        %v1891 = vld [vmem:[%s357 + $0x4c0] sm:$0xff]
        %v1892 = vld [vmem:[%s357 + $0x4c8] sm:$0xff]
        %v1893 = vld [vmem:[%s357 + $0x4d0] sm:$0xff]
        %v1894 = vld [vmem:[%s357 + $0x4d8] sm:$0xff]
        %v1895 = vld [vmem:[%s357 + $0x4e0] sm:$0xff]
        %v1896 = vld [vmem:[%s357 + $0x4e8] sm:$0xff]
        %v1897 = vld [vmem:[%s357 + $0x4f0] sm:$0xff]
        %v1898 = vld [vmem:[%s357 + $0x4f8] sm:$0xff]
        %v1899 = vld [vmem:[%s357 + $0x500] sm:$0xff]
        %v1900 = vld [vmem:[%s357 + $0x508] sm:$0xff]
        %v1901 = vld [vmem:[%s357 + $0x510] sm:$0xff]
        %v1902 = vld [vmem:[%s357 + $0x518] sm:$0xff]
        %v1903 = vld [vmem:[%s357 + $0x520] sm:$0xff]
        %v1904 = vld [vmem:[%s357 + $0x528] sm:$0xff]
        %v1905 = vld [vmem:[%s357 + $0x530] sm:$0xff]
        %v1906 = vld [vmem:[%s357 + $0x538] sm:$0xff]
        %v1907 = vld [vmem:[%s357 + $0x540] sm:$0xff]
        %v1908 = vld [vmem:[%s357 + $0x548] sm:$0xff]
        %v1909 = vld [vmem:[%s357 + $0x550] sm:$0xff]
        %v1910 = vld [vmem:[%s357 + $0x558] sm:$0xff]
        %v1911 = vld [vmem:[%s357 + $0x560] sm:$0xff]
        %v1912 = vld [vmem:[%s357 + $0x568] sm:$0xff]
        %v1913 = vld [vmem:[%s357 + $0x570] sm:$0xff]
        %v1914 = vld [vmem:[%s357 + $0x578] sm:$0xff]
        %v1915 = vld [vmem:[%s357 + $0x580] sm:$0xff]
        %v1916 = vld [vmem:[%s357 + $0x588] sm:$0xff]
        %v1917 = vld [vmem:[%s357 + $0x590] sm:$0xff]
        %v1918 = vld [vmem:[%s357 + $0x598] sm:$0xff]
        %v1919 = vld [vmem:[%s357 + $0x5a0] sm:$0xff]
        %v1920 = vld [vmem:[%s357 + $0x5a8] sm:$0xff]
        %v1921 = vld [vmem:[%s357 + $0x5b0] sm:$0xff]
        %v1922 = vld [vmem:[%s357 + $0x5b8] sm:$0xff]
        %v1923 = vld [vmem:[%s357 + $0x5c0] sm:$0xff]
        %v1924 = vld [vmem:[%s357 + $0x5c8] sm:$0xff]
        %v1925 = vld [vmem:[%s357 + $0x5d0] sm:$0xff]
        %v1926 = vld [vmem:[%s357 + $0x5d8] sm:$0xff]
        %v1927 = vld [vmem:[%s357 + $0x5e0] sm:$0xff]
        %v1928 = vld [vmem:[%s357 + $0x5e8] sm:$0xff]
        %v1929 = vld [vmem:[%s357 + $0x5f0] sm:$0xff]
        %v1930 = vld [vmem:[%s357 + $0x5f8] sm:$0xff]
        %1931 = vrot.lane.b32.xlu0 %v831, 64
        %v1932 = vpop.permute.xlu0 %1931
        %1933 = vrot.lane.b32.xlu0 %v833, 64
        %v1934 = vpop.permute.xlu0 %1933
        %1935 = vrot.lane.b32.xlu0 %v836, 64
        %v1936 = vpop.permute.xlu0 %1935
        %1937 = vrot.lane.b32.xlu0 %v838, 64
        %v1938 = vpop.permute.xlu0 %1937
        %1939 = vrot.lane.b32.xlu0 %v841, 64
        %v1940 = vpop.permute.xlu0 %1939
        %1941 = vrot.lane.b32.xlu0 %v843, 64
        %v1942 = vpop.permute.xlu0 %1941
        %1943 = vrot.lane.b32.xlu0 %v846, 64
        %v1944 = vpop.permute.xlu0 %1943
        %1945 = vrot.lane.b32.xlu0 %v848, 64
        %v1946 = vpop.permute.xlu0 %1945
        %1947 = vrot.lane.b32.xlu0 %v851, 64
        %v1948 = vpop.permute.xlu0 %1947
        %1949 = vrot.lane.b32.xlu0 %v853, 64
        %v1950 = vpop.permute.xlu0 %1949
        %1951 = vrot.lane.b32.xlu0 %v856, 64
        %v1952 = vpop.permute.xlu0 %1951
        %1953 = vrot.lane.b32.xlu0 %v858, 64
        %v1954 = vpop.permute.xlu0 %1953
        %1955 = vrot.lane.b32.xlu0 %v861, 64
        %v1956 = vpop.permute.xlu0 %1955
        %1957 = vrot.lane.b32.xlu0 %v863, 64
        %v1958 = vpop.permute.xlu0 %1957
        %1959 = vrot.lane.b32.xlu0 %v866, 64
        %v1960 = vpop.permute.xlu0 %1959
        %1961 = vrot.lane.b32.xlu0 %v868, 64
        %v1962 = vpop.permute.xlu0 %1961
        %1963 = vrot.lane.b32.xlu0 %v871, 64
        %v1964 = vpop.permute.xlu0 %1963
        %1965 = vrot.lane.b32.xlu0 %v873, 64
        %v1966 = vpop.permute.xlu0 %1965
        %1967 = vrot.lane.b32.xlu0 %v876, 64
        %v1968 = vpop.permute.xlu0 %1967
        %1969 = vrot.lane.b32.xlu0 %v878, 64
        %v1970 = vpop.permute.xlu0 %1969
        %1971 = vrot.lane.b32.xlu0 %v881, 64
        %v1972 = vpop.permute.xlu0 %1971
        %1973 = vrot.lane.b32.xlu0 %v883, 64
        %v1974 = vpop.permute.xlu0 %1973
        %1975 = vrot.lane.b32.xlu0 %v886, 64
        %v1976 = vpop.permute.xlu0 %1975
        %1977 = vrot.lane.b32.xlu0 %v888, 64
        %v1978 = vpop.permute.xlu0 %1977
        %1979 = vrot.lane.b32.xlu0 %v891, 64
        %v1980 = vpop.permute.xlu0 %1979
        %1981 = vrot.lane.b32.xlu0 %v893, 64
        %v1982 = vpop.permute.xlu0 %1981
        %1983 = vrot.lane.b32.xlu0 %v896, 64
        %v1984 = vpop.permute.xlu0 %1983
        %1985 = vrot.lane.b32.xlu0 %v898, 64
        %v1986 = vpop.permute.xlu0 %1985
        %1987 = vrot.lane.b32.xlu0 %v901, 64
        %v1988 = vpop.permute.xlu0 %1987
        %1989 = vrot.lane.b32.xlu0 %v903, 64
        %v1990 = vpop.permute.xlu0 %1989
        %1991 = vrot.lane.b32.xlu0 %v906, 64
        %v1992 = vpop.permute.xlu0 %1991
        %1993 = vrot.lane.b32.xlu0 %v908, 64
        %v1994 = vpop.permute.xlu0 %1993
        %1995 = vrot.lane.b32.xlu0 %v920, 64
        %v1996 = vpop.permute.xlu0 %1995
        %1997 = vrot.lane.b32.xlu0 %v922, 64
        %v1998 = vpop.permute.xlu0 %1997
        %1999 = vrot.lane.b32.xlu0 %v925, 64
        %v2000 = vpop.permute.xlu0 %1999
        %2001 = vrot.lane.b32.xlu0 %v927, 64
        %v2002 = vpop.permute.xlu0 %2001
        %2003 = vrot.lane.b32.xlu0 %v930, 64
        %v2004 = vpop.permute.xlu0 %2003
        %2005 = vrot.lane.b32.xlu0 %v932, 64
        %v2006 = vpop.permute.xlu0 %2005
        %2007 = vrot.lane.b32.xlu0 %v935, 64
        %v2008 = vpop.permute.xlu0 %2007
        %2009 = vrot.lane.b32.xlu0 %v937, 64
        %v2010 = vpop.permute.xlu0 %2009
        %2011 = vrot.lane.b32.xlu0 %v940, 64
        %v2012 = vpop.permute.xlu0 %2011
        %2013 = vrot.lane.b32.xlu0 %v942, 64
        %v2014 = vpop.permute.xlu0 %2013
        %2015 = vrot.lane.b32.xlu0 %v945, 64
        %v2016 = vpop.permute.xlu0 %2015
        %2017 = vrot.lane.b32.xlu0 %v947, 64
        %v2018 = vpop.permute.xlu0 %2017
        %2019 = vrot.lane.b32.xlu0 %v950, 64
        %v2020 = vpop.permute.xlu0 %2019
        %2021 = vrot.lane.b32.xlu0 %v952, 64
        %v2022 = vpop.permute.xlu0 %2021
        %2023 = vrot.lane.b32.xlu0 %v955, 64
        %v2024 = vpop.permute.xlu0 %2023
        %2025 = vrot.lane.b32.xlu0 %v957, 64
        %v2026 = vpop.permute.xlu0 %2025
        %2027 = vrot.lane.b32.xlu0 %v960, 64
        %v2028 = vpop.permute.xlu0 %2027
        %2029 = vrot.lane.b32.xlu0 %v962, 64
        %v2030 = vpop.permute.xlu0 %2029
        %2031 = vrot.lane.b32.xlu0 %v965, 64
        %v2032 = vpop.permute.xlu0 %2031
        %2033 = vrot.lane.b32.xlu0 %v967, 64
        %v2034 = vpop.permute.xlu0 %2033
        %2035 = vrot.lane.b32.xlu0 %v970, 64
        %v2036 = vpop.permute.xlu0 %2035
        %2037 = vrot.lane.b32.xlu0 %v972, 64
        %v2038 = vpop.permute.xlu0 %2037
        %2039 = vrot.lane.b32.xlu0 %v975, 64
        %v2040 = vpop.permute.xlu0 %2039
        %2041 = vrot.lane.b32.xlu0 %v977, 64
        %v2042 = vpop.permute.xlu0 %2041
        %2043 = vrot.lane.b32.xlu0 %v980, 64
        %v2044 = vpop.permute.xlu0 %2043
        %2045 = vrot.lane.b32.xlu0 %v982, 64
        %v2046 = vpop.permute.xlu0 %2045
        %2047 = vrot.lane.b32.xlu0 %v985, 64
        %v2048 = vpop.permute.xlu0 %2047
        %2049 = vrot.lane.b32.xlu0 %v987, 64
        %v2050 = vpop.permute.xlu0 %2049
        %2051 = vrot.lane.b32.xlu0 %v990, 64
        %v2052 = vpop.permute.xlu0 %2051
        %2053 = vrot.lane.b32.xlu0 %v992, 64
        %v2054 = vpop.permute.xlu0 %2053
        %2055 = vrot.lane.b32.xlu0 %v995, 64
        %v2056 = vpop.permute.xlu0 %2055
        %2057 = vrot.lane.b32.xlu0 %v997, 64
        %v2058 = vpop.permute.xlu0 %2057
        %2059 = vrot.lane.b32.xlu0 %v1009, 64
        %v2060 = vpop.permute.xlu0 %2059
        %2061 = vrot.lane.b32.xlu0 %v1011, 64
        %v2062 = vpop.permute.xlu0 %2061
        %2063 = vrot.lane.b32.xlu0 %v1014, 64
        %v2064 = vpop.permute.xlu0 %2063
        %2065 = vrot.lane.b32.xlu0 %v1016, 64
        %v2066 = vpop.permute.xlu0 %2065
        %2067 = vrot.lane.b32.xlu0 %v1019, 64
        %v2068 = vpop.permute.xlu0 %2067
        %2069 = vrot.lane.b32.xlu0 %v1021, 64
        %v2070 = vpop.permute.xlu0 %2069
        %2071 = vrot.lane.b32.xlu0 %v1024, 64
        %v2072 = vpop.permute.xlu0 %2071
        %2073 = vrot.lane.b32.xlu0 %v1026, 64
        %v2074 = vpop.permute.xlu0 %2073
        %2075 = vrot.lane.b32.xlu0 %v1029, 64
        %v2076 = vpop.permute.xlu0 %2075
        %2077 = vrot.lane.b32.xlu0 %v1031, 64
        %v2078 = vpop.permute.xlu0 %2077
        %2079 = vrot.lane.b32.xlu0 %v1034, 64
        %v2080 = vpop.permute.xlu0 %2079
        %2081 = vrot.lane.b32.xlu0 %v1036, 64
        %v2082 = vpop.permute.xlu0 %2081
        %2083 = vrot.lane.b32.xlu0 %v1039, 64
        %v2084 = vpop.permute.xlu0 %2083
        %2085 = vrot.lane.b32.xlu0 %v1041, 64
        %v2086 = vpop.permute.xlu0 %2085
        %2087 = vrot.lane.b32.xlu0 %v1044, 64
        %v2088 = vpop.permute.xlu0 %2087
        %2089 = vrot.lane.b32.xlu0 %v1046, 64
        %v2090 = vpop.permute.xlu0 %2089
        %2091 = vrot.lane.b32.xlu0 %v1049, 64
        %v2092 = vpop.permute.xlu0 %2091
        %2093 = vrot.lane.b32.xlu0 %v1051, 64
        %v2094 = vpop.permute.xlu0 %2093
        %2095 = vrot.lane.b32.xlu0 %v1054, 64
        %v2096 = vpop.permute.xlu0 %2095
        %2097 = vrot.lane.b32.xlu0 %v1056, 64
        %v2098 = vpop.permute.xlu0 %2097
        %2099 = vrot.lane.b32.xlu0 %v1059, 64
        %v2100 = vpop.permute.xlu0 %2099
        %2101 = vrot.lane.b32.xlu0 %v1061, 64
        %v2102 = vpop.permute.xlu0 %2101
        %2103 = vrot.lane.b32.xlu0 %v1064, 64
        %v2104 = vpop.permute.xlu0 %2103
        %2105 = vrot.lane.b32.xlu0 %v1066, 64
        %v2106 = vpop.permute.xlu0 %2105
        %2107 = vrot.lane.b32.xlu0 %v1069, 64
        %v2108 = vpop.permute.xlu0 %2107
        %2109 = vrot.lane.b32.xlu0 %v1071, 64
        %v2110 = vpop.permute.xlu0 %2109
        %2111 = vrot.lane.b32.xlu0 %v1074, 64
        %v2112 = vpop.permute.xlu0 %2111
        %2113 = vrot.lane.b32.xlu0 %v1076, 64
        %v2114 = vpop.permute.xlu0 %2113
        %2115 = vrot.lane.b32.xlu0 %v1079, 64
        %v2116 = vpop.permute.xlu0 %2115
        %2117 = vrot.lane.b32.xlu0 %v1081, 64
        %v2118 = vpop.permute.xlu0 %2117
        %2119 = vrot.lane.b32.xlu0 %v1084, 64
        %v2120 = vpop.permute.xlu0 %2119
        %2121 = vrot.lane.b32.xlu0 %v1086, 64
        %v2122 = vpop.permute.xlu0 %2121
        %2123 = vrot.lane.b32.xlu0 %v1098, 64
        %v2124 = vpop.permute.xlu0 %2123
        %2125 = vrot.lane.b32.xlu0 %v1100, 64
        %v2126 = vpop.permute.xlu0 %2125
        %2127 = vrot.lane.b32.xlu0 %v1103, 64
        %v2128 = vpop.permute.xlu0 %2127
        %2129 = vrot.lane.b32.xlu0 %v1105, 64
        %v2130 = vpop.permute.xlu0 %2129
        %2131 = vrot.lane.b32.xlu0 %v1108, 64
        %v2132 = vpop.permute.xlu0 %2131
        %2133 = vrot.lane.b32.xlu0 %v1110, 64
        %v2134 = vpop.permute.xlu0 %2133
        %2135 = vrot.lane.b32.xlu0 %v1113, 64
        %v2136 = vpop.permute.xlu0 %2135
        %2137 = vrot.lane.b32.xlu0 %v1115, 64
        %v2138 = vpop.permute.xlu0 %2137
        %2139 = vrot.lane.b32.xlu0 %v1118, 64
        %v2140 = vpop.permute.xlu0 %2139
        %2141 = vrot.lane.b32.xlu0 %v1120, 64
        %v2142 = vpop.permute.xlu0 %2141
        %2143 = vrot.lane.b32.xlu0 %v1123, 64
        %v2144 = vpop.permute.xlu0 %2143
        %2145 = vrot.lane.b32.xlu0 %v1125, 64
        %v2146 = vpop.permute.xlu0 %2145
        %2147 = vrot.lane.b32.xlu0 %v1128, 64
        %v2148 = vpop.permute.xlu0 %2147
        %2149 = vrot.lane.b32.xlu0 %v1130, 64
        %v2150 = vpop.permute.xlu0 %2149
        %2151 = vrot.lane.b32.xlu0 %v1133, 64
        %v2152 = vpop.permute.xlu0 %2151
        %2153 = vrot.lane.b32.xlu0 %v1135, 64
        %v2154 = vpop.permute.xlu0 %2153
        %2155 = vrot.lane.b32.xlu0 %v1138, 64
        %v2156 = vpop.permute.xlu0 %2155
        %2157 = vrot.lane.b32.xlu0 %v1140, 64
        %v2158 = vpop.permute.xlu0 %2157
        %2159 = vrot.lane.b32.xlu0 %v1143, 64
        %v2160 = vpop.permute.xlu0 %2159
        %2161 = vrot.lane.b32.xlu0 %v1145, 64
        %v2162 = vpop.permute.xlu0 %2161
        %2163 = vrot.lane.b32.xlu0 %v1148, 64
        %v2164 = vpop.permute.xlu0 %2163
        %2165 = vrot.lane.b32.xlu0 %v1150, 64
        %v2166 = vpop.permute.xlu0 %2165
        %2167 = vrot.lane.b32.xlu0 %v1153, 64
        %v2168 = vpop.permute.xlu0 %2167
        %2169 = vrot.lane.b32.xlu0 %v1155, 64
        %v2170 = vpop.permute.xlu0 %2169
        %2171 = vrot.lane.b32.xlu0 %v1158, 64
        %v2172 = vpop.permute.xlu0 %2171
        %2173 = vrot.lane.b32.xlu0 %v1160, 64
        %v2174 = vpop.permute.xlu0 %2173
        %2175 = vrot.lane.b32.xlu0 %v1163, 64
        %v2176 = vpop.permute.xlu0 %2175
        %2177 = vrot.lane.b32.xlu0 %v1165, 64
        %v2178 = vpop.permute.xlu0 %2177
        %2179 = vrot.lane.b32.xlu0 %v1168, 64
        %v2180 = vpop.permute.xlu0 %2179
        %2181 = vrot.lane.b32.xlu0 %v1170, 64
        %v2182 = vpop.permute.xlu0 %2181
        %2183 = vrot.lane.b32.xlu0 %v1173, 64
        %v2184 = vpop.permute.xlu0 %2183
        %2185 = vrot.lane.b32.xlu0 %v1175, 64
        %v2186 = vpop.permute.xlu0 %2185
        %2187 = vrot.lane.b32.xlu0 %v1187, 64
        %v2188 = vpop.permute.xlu0 %2187
        %2189 = vrot.lane.b32.xlu0 %v1189, 64
        %v2190 = vpop.permute.xlu0 %2189
        %2191 = vrot.lane.b32.xlu0 %v1192, 64
        %v2192 = vpop.permute.xlu0 %2191
        %2193 = vrot.lane.b32.xlu0 %v1194, 64
        %v2194 = vpop.permute.xlu0 %2193
        %2195 = vrot.lane.b32.xlu0 %v1197, 64
        %v2196 = vpop.permute.xlu0 %2195
        %2197 = vrot.lane.b32.xlu0 %v1199, 64
        %v2198 = vpop.permute.xlu0 %2197
        %2199 = vrot.lane.b32.xlu0 %v1202, 64
        %v2200 = vpop.permute.xlu0 %2199
        %2201 = vrot.lane.b32.xlu0 %v1204, 64
        %v2202 = vpop.permute.xlu0 %2201
        %2203 = vrot.lane.b32.xlu0 %v1207, 64
        %v2204 = vpop.permute.xlu0 %2203
        %2205 = vrot.lane.b32.xlu0 %v1209, 64
        %v2206 = vpop.permute.xlu0 %2205
        %2207 = vrot.lane.b32.xlu0 %v1212, 64
        %v2208 = vpop.permute.xlu0 %2207
        %2209 = vrot.lane.b32.xlu0 %v1214, 64
        %v2210 = vpop.permute.xlu0 %2209
        %2211 = vrot.lane.b32.xlu0 %v1217, 64
        %v2212 = vpop.permute.xlu0 %2211
        %2213 = vrot.lane.b32.xlu0 %v1219, 64
        %v2214 = vpop.permute.xlu0 %2213
        %2215 = vrot.lane.b32.xlu0 %v1222, 64
        %v2216 = vpop.permute.xlu0 %2215
        %2217 = vrot.lane.b32.xlu0 %v1224, 64
        %v2218 = vpop.permute.xlu0 %2217
        %2219 = vrot.lane.b32.xlu0 %v1227, 64
        %v2220 = vpop.permute.xlu0 %2219
        %2221 = vrot.lane.b32.xlu0 %v1229, 64
        %v2222 = vpop.permute.xlu0 %2221
        %2223 = vrot.lane.b32.xlu0 %v1232, 64
        %v2224 = vpop.permute.xlu0 %2223
        %2225 = vrot.lane.b32.xlu0 %v1234, 64
        %v2226 = vpop.permute.xlu0 %2225
        %2227 = vrot.lane.b32.xlu0 %v1237, 64
        %v2228 = vpop.permute.xlu0 %2227
        %2229 = vrot.lane.b32.xlu0 %v1239, 64
        %v2230 = vpop.permute.xlu0 %2229
        %2231 = vrot.lane.b32.xlu0 %v1242, 64
        %v2232 = vpop.permute.xlu0 %2231
        %2233 = vrot.lane.b32.xlu0 %v1244, 64
        %v2234 = vpop.permute.xlu0 %2233
        %2235 = vrot.lane.b32.xlu0 %v1247, 64
        %v2236 = vpop.permute.xlu0 %2235
        %2237 = vrot.lane.b32.xlu0 %v1249, 64
        %v2238 = vpop.permute.xlu0 %2237
        %2239 = vrot.lane.b32.xlu0 %v1252, 64
        %v2240 = vpop.permute.xlu0 %2239
        %2241 = vrot.lane.b32.xlu0 %v1254, 64
        %v2242 = vpop.permute.xlu0 %2241
        %2243 = vrot.lane.b32.xlu0 %v1257, 64
        %v2244 = vpop.permute.xlu0 %2243
        %2245 = vrot.lane.b32.xlu0 %v1259, 64
        %v2246 = vpop.permute.xlu0 %2245
        %2247 = vrot.lane.b32.xlu0 %v1262, 64
        %v2248 = vpop.permute.xlu0 %2247
        %2249 = vrot.lane.b32.xlu0 %v1264, 64
        %v2250 = vpop.permute.xlu0 %2249
        %2251 = vrot.lane.b32.xlu0 %v1276, 64
        %v2252 = vpop.permute.xlu0 %2251
        %2253 = vrot.lane.b32.xlu0 %v1278, 64
        %v2254 = vpop.permute.xlu0 %2253
        %2255 = vrot.lane.b32.xlu0 %v1281, 64
        %v2256 = vpop.permute.xlu0 %2255
        %2257 = vrot.lane.b32.xlu0 %v1283, 64
        %v2258 = vpop.permute.xlu0 %2257
        %2259 = vrot.lane.b32.xlu0 %v1286, 64
        %v2260 = vpop.permute.xlu0 %2259
        %2261 = vrot.lane.b32.xlu0 %v1288, 64
        %v2262 = vpop.permute.xlu0 %2261
        %2263 = vrot.lane.b32.xlu0 %v1291, 64
        %v2264 = vpop.permute.xlu0 %2263
        %2265 = vrot.lane.b32.xlu0 %v1293, 64
        %v2266 = vpop.permute.xlu0 %2265
        %2267 = vrot.lane.b32.xlu0 %v1296, 64
        %v2268 = vpop.permute.xlu0 %2267
        %2269 = vrot.lane.b32.xlu0 %v1298, 64
        %v2270 = vpop.permute.xlu0 %2269
        %2271 = vrot.lane.b32.xlu0 %v1301, 64
        %v2272 = vpop.permute.xlu0 %2271
        %2273 = vrot.lane.b32.xlu0 %v1303, 64
        %v2274 = vpop.permute.xlu0 %2273
        %2275 = vrot.lane.b32.xlu0 %v1306, 64
        %v2276 = vpop.permute.xlu0 %2275
        %2277 = vrot.lane.b32.xlu0 %v1308, 64
        %v2278 = vpop.permute.xlu0 %2277
        %2279 = vrot.lane.b32.xlu0 %v1311, 64
        %v2280 = vpop.permute.xlu0 %2279
        %2281 = vrot.lane.b32.xlu0 %v1313, 64
        %v2282 = vpop.permute.xlu0 %2281
        %2283 = vrot.lane.b32.xlu0 %v1316, 64
        %v2284 = vpop.permute.xlu0 %2283
        %2285 = vrot.lane.b32.xlu0 %v1318, 64
        %v2286 = vpop.permute.xlu0 %2285
        %2287 = vrot.lane.b32.xlu0 %v1321, 64
        %v2288 = vpop.permute.xlu0 %2287
        %2289 = vrot.lane.b32.xlu0 %v1323, 64
        %v2290 = vpop.permute.xlu0 %2289
        %2291 = vrot.lane.b32.xlu0 %v1326, 64
        %v2292 = vpop.permute.xlu0 %2291
        %2293 = vrot.lane.b32.xlu0 %v1328, 64
        %v2294 = vpop.permute.xlu0 %2293
        %2295 = vrot.lane.b32.xlu0 %v1331, 64
        %v2296 = vpop.permute.xlu0 %2295
        %2297 = vrot.lane.b32.xlu0 %v1333, 64
        %v2298 = vpop.permute.xlu0 %2297
        %2299 = vrot.lane.b32.xlu0 %v1336, 64
        %v2300 = vpop.permute.xlu0 %2299
        %2301 = vrot.lane.b32.xlu0 %v1338, 64
        %v2302 = vpop.permute.xlu0 %2301
        %2303 = vrot.lane.b32.xlu0 %v1341, 64
        %v2304 = vpop.permute.xlu0 %2303
        %2305 = vrot.lane.b32.xlu0 %v1343, 64
        %v2306 = vpop.permute.xlu0 %2305
        %2307 = vrot.lane.b32.xlu0 %v1346, 64
        %v2308 = vpop.permute.xlu0 %2307
        %2309 = vrot.lane.b32.xlu0 %v1348, 64
        %v2310 = vpop.permute.xlu0 %2309
        %2311 = vrot.lane.b32.xlu0 %v1351, 64
        %v2312 = vpop.permute.xlu0 %2311
        %2313 = vrot.lane.b32.xlu0 %v1353, 64
        %v2314 = vpop.permute.xlu0 %2313
        %v2315 = vlaneseq
        %v2316 = vand.u32 %v2315, 127
        %vm2317 = vcmp.lt.s32.totalorder %v2316, 64
        %v2318 = vsel %vm2317, %v2188, %v2252
        %v2319 = vsel %vm2317, %v2190, %v2254
        %v2320 = vsel %vm2317, %v2192, %v2256
        %v2321 = vsel %vm2317, %v2194, %v2258
        %v2322 = vsel %vm2317, %v2196, %v2260
        %v2323 = vsel %vm2317, %v2198, %v2262
        %v2324 = vsel %vm2317, %v2200, %v2264
        %v2325 = vsel %vm2317, %v2202, %v2266
        %v2326 = vsel %vm2317, %v2204, %v2268
        %v2327 = vsel %vm2317, %v2206, %v2270
        %v2328 = vsel %vm2317, %v2208, %v2272
        %v2329 = vsel %vm2317, %v2210, %v2274
        %v2330 = vsel %vm2317, %v2212, %v2276
        %v2331 = vsel %vm2317, %v2214, %v2278
        %v2332 = vsel %vm2317, %v2216, %v2280
        %v2333 = vsel %vm2317, %v2218, %v2282
        %v2334 = vsel %vm2317, %v2220, %v2284
        %v2335 = vsel %vm2317, %v2222, %v2286
        %v2336 = vsel %vm2317, %v2224, %v2288
        %v2337 = vsel %vm2317, %v2226, %v2290
        %v2338 = vsel %vm2317, %v2228, %v2292
        %v2339 = vsel %vm2317, %v2230, %v2294
        %v2340 = vsel %vm2317, %v2232, %v2296
        %v2341 = vsel %vm2317, %v2234, %v2298
        %v2342 = vsel %vm2317, %v2236, %v2300
        %v2343 = vsel %vm2317, %v2238, %v2302
        %v2344 = vsel %vm2317, %v2240, %v2304
        %v2345 = vsel %vm2317, %v2242, %v2306
        %v2346 = vsel %vm2317, %v2244, %v2308
        %v2347 = vsel %vm2317, %v2246, %v2310
        %v2348 = vsel %vm2317, %v2248, %v2312
        %v2349 = vsel %vm2317, %v2250, %v2314
        %v2350 = vsel %vm2317, %v2124, %v2188
        %v2351 = vsel %vm2317, %v2126, %v2190
        %v2352 = vsel %vm2317, %v2128, %v2192
        %v2353 = vsel %vm2317, %v2130, %v2194
        %v2354 = vsel %vm2317, %v2132, %v2196
        %v2355 = vsel %vm2317, %v2134, %v2198
        %v2356 = vsel %vm2317, %v2136, %v2200
        %v2357 = vsel %vm2317, %v2138, %v2202
        %v2358 = vsel %vm2317, %v2140, %v2204
        %v2359 = vsel %vm2317, %v2142, %v2206
        %v2360 = vsel %vm2317, %v2144, %v2208
        %v2361 = vsel %vm2317, %v2146, %v2210
        %v2362 = vsel %vm2317, %v2148, %v2212
        %v2363 = vsel %vm2317, %v2150, %v2214
        %v2364 = vsel %vm2317, %v2152, %v2216
        %v2365 = vsel %vm2317, %v2154, %v2218
        %v2366 = vsel %vm2317, %v2156, %v2220
        %v2367 = vsel %vm2317, %v2158, %v2222
        %v2368 = vsel %vm2317, %v2160, %v2224
        %v2369 = vsel %vm2317, %v2162, %v2226
        %v2370 = vsel %vm2317, %v2164, %v2228
        %v2371 = vsel %vm2317, %v2166, %v2230
        %v2372 = vsel %vm2317, %v2168, %v2232
        %v2373 = vsel %vm2317, %v2170, %v2234
        %v2374 = vsel %vm2317, %v2172, %v2236
        %v2375 = vsel %vm2317, %v2174, %v2238
        %v2376 = vsel %vm2317, %v2176, %v2240
        %v2377 = vsel %vm2317, %v2178, %v2242
        %v2378 = vsel %vm2317, %v2180, %v2244
        %v2379 = vsel %vm2317, %v2182, %v2246
        %v2380 = vsel %vm2317, %v2184, %v2248
        %v2381 = vsel %vm2317, %v2186, %v2250
        %v2382 = vsel %vm2317, %v2060, %v2124
        %v2383 = vsel %vm2317, %v2062, %v2126
        %v2384 = vsel %vm2317, %v2064, %v2128
        %v2385 = vsel %vm2317, %v2066, %v2130
        %v2386 = vsel %vm2317, %v2068, %v2132
        %v2387 = vsel %vm2317, %v2070, %v2134
        %v2388 = vsel %vm2317, %v2072, %v2136
        %v2389 = vsel %vm2317, %v2074, %v2138
        %v2390 = vsel %vm2317, %v2076, %v2140
        %v2391 = vsel %vm2317, %v2078, %v2142
        %v2392 = vsel %vm2317, %v2080, %v2144
        %v2393 = vsel %vm2317, %v2082, %v2146
        %v2394 = vsel %vm2317, %v2084, %v2148
        %v2395 = vsel %vm2317, %v2086, %v2150
        %v2396 = vsel %vm2317, %v2088, %v2152
        %v2397 = vsel %vm2317, %v2090, %v2154
        %v2398 = vsel %vm2317, %v2092, %v2156
        %v2399 = vsel %vm2317, %v2094, %v2158
        %v2400 = vsel %vm2317, %v2096, %v2160
        %v2401 = vsel %vm2317, %v2098, %v2162
        %v2402 = vsel %vm2317, %v2100, %v2164
        %v2403 = vsel %vm2317, %v2102, %v2166
        %v2404 = vsel %vm2317, %v2104, %v2168
        %v2405 = vsel %vm2317, %v2106, %v2170
        %v2406 = vsel %vm2317, %v2108, %v2172
        %v2407 = vsel %vm2317, %v2110, %v2174
        %v2408 = vsel %vm2317, %v2112, %v2176
        %v2409 = vsel %vm2317, %v2114, %v2178
        %v2410 = vsel %vm2317, %v2116, %v2180
        %v2411 = vsel %vm2317, %v2118, %v2182
        %v2412 = vsel %vm2317, %v2120, %v2184
        %v2413 = vsel %vm2317, %v2122, %v2186
        %v2414 = vsel %vm2317, %v1996, %v2060
        %v2415 = vsel %vm2317, %v1998, %v2062
        %v2416 = vsel %vm2317, %v2000, %v2064
        %v2417 = vsel %vm2317, %v2002, %v2066
        %v2418 = vsel %vm2317, %v2004, %v2068
        %v2419 = vsel %vm2317, %v2006, %v2070
        %v2420 = vsel %vm2317, %v2008, %v2072
        %v2421 = vsel %vm2317, %v2010, %v2074
        %v2422 = vsel %vm2317, %v2012, %v2076
        %v2423 = vsel %vm2317, %v2014, %v2078
        %v2424 = vsel %vm2317, %v2016, %v2080
        %v2425 = vsel %vm2317, %v2018, %v2082
        %v2426 = vsel %vm2317, %v2020, %v2084
        %v2427 = vsel %vm2317, %v2022, %v2086
        %v2428 = vsel %vm2317, %v2024, %v2088
        %v2429 = vsel %vm2317, %v2026, %v2090
        %v2430 = vsel %vm2317, %v2028, %v2092
        %v2431 = vsel %vm2317, %v2030, %v2094
        %v2432 = vsel %vm2317, %v2032, %v2096
        %v2433 = vsel %vm2317, %v2034, %v2098
        %v2434 = vsel %vm2317, %v2036, %v2100
        %v2435 = vsel %vm2317, %v2038, %v2102
        %v2436 = vsel %vm2317, %v2040, %v2104
        %v2437 = vsel %vm2317, %v2042, %v2106
        %v2438 = vsel %vm2317, %v2044, %v2108
        %v2439 = vsel %vm2317, %v2046, %v2110
        %v2440 = vsel %vm2317, %v2048, %v2112
        %v2441 = vsel %vm2317, %v2050, %v2114
        %v2442 = vsel %vm2317, %v2052, %v2116
        %v2443 = vsel %vm2317, %v2054, %v2118
        %v2444 = vsel %vm2317, %v2056, %v2120
        %v2445 = vsel %vm2317, %v2058, %v2122
        %v2446 = vsel %vm2317, %v1932, %v1996
        %v2447 = vsel %vm2317, %v1934, %v1998
        %v2448 = vsel %vm2317, %v1936, %v2000
        %v2449 = vsel %vm2317, %v1938, %v2002
        %v2450 = vsel %vm2317, %v1940, %v2004
        %v2451 = vsel %vm2317, %v1942, %v2006
        %v2452 = vsel %vm2317, %v1944, %v2008
        %v2453 = vsel %vm2317, %v1946, %v2010
        %v2454 = vsel %vm2317, %v1948, %v2012
        %v2455 = vsel %vm2317, %v1950, %v2014
        %v2456 = vsel %vm2317, %v1952, %v2016
        %v2457 = vsel %vm2317, %v1954, %v2018
        %v2458 = vsel %vm2317, %v1956, %v2020
        %v2459 = vsel %vm2317, %v1958, %v2022
        %v2460 = vsel %vm2317, %v1960, %v2024
        %v2461 = vsel %vm2317, %v1962, %v2026
        %v2462 = vsel %vm2317, %v1964, %v2028
        %v2463 = vsel %vm2317, %v1966, %v2030
        %v2464 = vsel %vm2317, %v1968, %v2032
        %v2465 = vsel %vm2317, %v1970, %v2034
        %v2466 = vsel %vm2317, %v1972, %v2036
        %v2467 = vsel %vm2317, %v1974, %v2038
        %v2468 = vsel %vm2317, %v1976, %v2040
        %v2469 = vsel %vm2317, %v1978, %v2042
        %v2470 = vsel %vm2317, %v1980, %v2044
        %v2471 = vsel %vm2317, %v1982, %v2046
        %v2472 = vsel %vm2317, %v1984, %v2048
        %v2473 = vsel %vm2317, %v1986, %v2050
        %v2474 = vsel %vm2317, %v1988, %v2052
        %v2475 = vsel %vm2317, %v1990, %v2054
        %v2476 = vsel %vm2317, %v1992, %v2056
        %v2477 = vsel %vm2317, %v1994, %v2058
        %v2478 = vsel %vm2317, %v2252, %v1932
        %v2479 = vsel %vm2317, %v2254, %v1934
        %v2480 = vsel %vm2317, %v2256, %v1936
        %v2481 = vsel %vm2317, %v2258, %v1938
        %v2482 = vsel %vm2317, %v2260, %v1940
        %v2483 = vsel %vm2317, %v2262, %v1942
        %v2484 = vsel %vm2317, %v2264, %v1944
        %v2485 = vsel %vm2317, %v2266, %v1946
        %v2486 = vsel %vm2317, %v2268, %v1948
        %v2487 = vsel %vm2317, %v2270, %v1950
        %v2488 = vsel %vm2317, %v2272, %v1952
        %v2489 = vsel %vm2317, %v2274, %v1954
        %v2490 = vsel %vm2317, %v2276, %v1956
        %v2491 = vsel %vm2317, %v2278, %v1958
        %v2492 = vsel %vm2317, %v2280, %v1960
        %v2493 = vsel %vm2317, %v2282, %v1962
        %v2494 = vsel %vm2317, %v2284, %v1964
        %v2495 = vsel %vm2317, %v2286, %v1966
        %v2496 = vsel %vm2317, %v2288, %v1968
        %v2497 = vsel %vm2317, %v2290, %v1970
        %v2498 = vsel %vm2317, %v2292, %v1972
        %v2499 = vsel %vm2317, %v2294, %v1974
        %v2500 = vsel %vm2317, %v2296, %v1976
        %v2501 = vsel %vm2317, %v2298, %v1978
        %v2502 = vsel %vm2317, %v2300, %v1980
        %v2503 = vsel %vm2317, %v2302, %v1982
        %v2504 = vsel %vm2317, %v2304, %v1984
        %v2505 = vsel %vm2317, %v2306, %v1986
        %v2506 = vsel %vm2317, %v2308, %v1988
        %v2507 = vsel %vm2317, %v2310, %v1990
        %v2508 = vsel %vm2317, %v2312, %v1992
        %v2509 = vsel %vm2317, %v2314, %v1994
        %v2510 = vmul.f32 %v831, %v1355
        %v2511 = vmul.f32 %v920, %v1356
        %v2512 = vmul.f32 %v1009, %v1357
        %v2513 = vmul.f32 %v1098, %v1358
        %v2514 = vmul.f32 %v1187, %v1359
        %v2515 = vmul.f32 %v1276, %v1360
        %v2516 = vmul.f32 %v833, %v1361
        %v2517 = vmul.f32 %v922, %v1362
        %v2518 = vmul.f32 %v1011, %v1363
        %v2519 = vmul.f32 %v1100, %v1364
        %v2520 = vmul.f32 %v1189, %v1365
        %v2521 = vmul.f32 %v1278, %v1366
        %v2522 = vmul.f32 %v836, %v1367
        %v2523 = vmul.f32 %v925, %v1368
        %v2524 = vmul.f32 %v1014, %v1369
        %v2525 = vmul.f32 %v1103, %v1370
        %v2526 = vmul.f32 %v1192, %v1371
        %v2527 = vmul.f32 %v1281, %v1372
        %v2528 = vmul.f32 %v838, %v1373
        %v2529 = vmul.f32 %v927, %v1374
        %v2530 = vmul.f32 %v1016, %v1375
        %v2531 = vmul.f32 %v1105, %v1376
        %v2532 = vmul.f32 %v1194, %v1377
        %v2533 = vmul.f32 %v1283, %v1378
        %v2534 = vmul.f32 %v841, %v1379
        %v2535 = vmul.f32 %v930, %v1380
        %v2536 = vmul.f32 %v1019, %v1381
        %v2537 = vmul.f32 %v1108, %v1382
        %v2538 = vmul.f32 %v1197, %v1383
        %v2539 = vmul.f32 %v1286, %v1384
        %v2540 = vmul.f32 %v843, %v1385
        %v2541 = vmul.f32 %v932, %v1386
        %v2542 = vmul.f32 %v1021, %v1387
        %v2543 = vmul.f32 %v1110, %v1388
        %v2544 = vmul.f32 %v1199, %v1389
        %v2545 = vmul.f32 %v1288, %v1390
        %v2546 = vmul.f32 %v846, %v1391
        %v2547 = vmul.f32 %v935, %v1392
        %v2548 = vmul.f32 %v1024, %v1393
        %v2549 = vmul.f32 %v1113, %v1394
        %v2550 = vmul.f32 %v1202, %v1395
        %v2551 = vmul.f32 %v1291, %v1396
        %v2552 = vmul.f32 %v848, %v1397
        %v2553 = vmul.f32 %v937, %v1398
        %v2554 = vmul.f32 %v1026, %v1399
        %v2555 = vmul.f32 %v1115, %v1400
        %v2556 = vmul.f32 %v1204, %v1401
        %v2557 = vmul.f32 %v1293, %v1402
        %v2558 = vmul.f32 %v851, %v1403
        %v2559 = vmul.f32 %v940, %v1404
        %v2560 = vmul.f32 %v1029, %v1405
        %v2561 = vmul.f32 %v1118, %v1406
        %v2562 = vmul.f32 %v1207, %v1407
        %v2563 = vmul.f32 %v1296, %v1408
        %v2564 = vmul.f32 %v853, %v1409
        %v2565 = vmul.f32 %v942, %v1410
        %v2566 = vmul.f32 %v1031, %v1411
        %v2567 = vmul.f32 %v1120, %v1412
        %v2568 = vmul.f32 %v1209, %v1413
        %v2569 = vmul.f32 %v1298, %v1414
        %v2570 = vmul.f32 %v856, %v1415
        %v2571 = vmul.f32 %v945, %v1416
        %v2572 = vmul.f32 %v1034, %v1417
        %v2573 = vmul.f32 %v1123, %v1418
        %v2574 = vmul.f32 %v1212, %v1419
        %v2575 = vmul.f32 %v1301, %v1420
        %v2576 = vmul.f32 %v858, %v1421
        %v2577 = vmul.f32 %v947, %v1422
        %v2578 = vmul.f32 %v1036, %v1423
        %v2579 = vmul.f32 %v1125, %v1424
        %v2580 = vmul.f32 %v1214, %v1425
        %v2581 = vmul.f32 %v1303, %v1426
        %v2582 = vmul.f32 %v861, %v1427
        %v2583 = vmul.f32 %v950, %v1428
        %v2584 = vmul.f32 %v1039, %v1429
        %v2585 = vmul.f32 %v1128, %v1430
        %v2586 = vmul.f32 %v1217, %v1431
        %v2587 = vmul.f32 %v1306, %v1432
        %v2588 = vmul.f32 %v863, %v1433
        %v2589 = vmul.f32 %v952, %v1434
        %v2590 = vmul.f32 %v1041, %v1435
        %v2591 = vmul.f32 %v1130, %v1436
        %v2592 = vmul.f32 %v1219, %v1437
        %v2593 = vmul.f32 %v1308, %v1438
        %v2594 = vmul.f32 %v866, %v1439
        %v2595 = vmul.f32 %v955, %v1440
        %v2596 = vmul.f32 %v1044, %v1441
        %v2597 = vmul.f32 %v1133, %v1442
        %v2598 = vmul.f32 %v1222, %v1443
        %v2599 = vmul.f32 %v1311, %v1444
        %v2600 = vmul.f32 %v868, %v1445
        %v2601 = vmul.f32 %v957, %v1446
        %v2602 = vmul.f32 %v1046, %v1447
        %v2603 = vmul.f32 %v1135, %v1448
        %v2604 = vmul.f32 %v1224, %v1449
        %v2605 = vmul.f32 %v1313, %v1450
        %v2606 = vmul.f32 %v871, %v1451
        %v2607 = vmul.f32 %v960, %v1452
        %v2608 = vmul.f32 %v1049, %v1453
        %v2609 = vmul.f32 %v1138, %v1454
        %v2610 = vmul.f32 %v1227, %v1455
        %v2611 = vmul.f32 %v1316, %v1456
        %v2612 = vmul.f32 %v873, %v1457
        %v2613 = vmul.f32 %v962, %v1458
        %v2614 = vmul.f32 %v1051, %v1459
        %v2615 = vmul.f32 %v1140, %v1460
        %v2616 = vmul.f32 %v1229, %v1461
        %v2617 = vmul.f32 %v1318, %v1462
        %v2618 = vmul.f32 %v876, %v1463
        %v2619 = vmul.f32 %v965, %v1464
        %v2620 = vmul.f32 %v1054, %v1465
        %v2621 = vmul.f32 %v1143, %v1466
        %v2622 = vmul.f32 %v1232, %v1467
        %v2623 = vmul.f32 %v1321, %v1468
        %v2624 = vmul.f32 %v878, %v1469
        %v2625 = vmul.f32 %v967, %v1470
        %v2626 = vmul.f32 %v1056, %v1471
        %v2627 = vmul.f32 %v1145, %v1472
        %v2628 = vmul.f32 %v1234, %v1473
        %v2629 = vmul.f32 %v1323, %v1474
        %v2630 = vmul.f32 %v881, %v1475
        %v2631 = vmul.f32 %v970, %v1476
        %v2632 = vmul.f32 %v1059, %v1477
        %v2633 = vmul.f32 %v1148, %v1478
        %v2634 = vmul.f32 %v1237, %v1479
        %v2635 = vmul.f32 %v1326, %v1480
        %v2636 = vmul.f32 %v883, %v1481
        %v2637 = vmul.f32 %v972, %v1482
        %v2638 = vmul.f32 %v1061, %v1483
        %v2639 = vmul.f32 %v1150, %v1484
        %v2640 = vmul.f32 %v1239, %v1485
        %v2641 = vmul.f32 %v1328, %v1486
        %v2642 = vmul.f32 %v886, %v1487
        %v2643 = vmul.f32 %v975, %v1488
        %v2644 = vmul.f32 %v1064, %v1489
        %v2645 = vmul.f32 %v1153, %v1490
        %v2646 = vmul.f32 %v1242, %v1491
        %v2647 = vmul.f32 %v1331, %v1492
        %v2648 = vmul.f32 %v888, %v1493
        %v2649 = vmul.f32 %v977, %v1494
        %v2650 = vmul.f32 %v1066, %v1495
        %v2651 = vmul.f32 %v1155, %v1496
        %v2652 = vmul.f32 %v1244, %v1497
        %v2653 = vmul.f32 %v1333, %v1498
        %v2654 = vmul.f32 %v891, %v1499
        %v2655 = vmul.f32 %v980, %v1500
        %v2656 = vmul.f32 %v1069, %v1501
        %v2657 = vmul.f32 %v1158, %v1502
        %v2658 = vmul.f32 %v1247, %v1503
        %v2659 = vmul.f32 %v1336, %v1504
        %v2660 = vmul.f32 %v893, %v1505
        %v2661 = vmul.f32 %v982, %v1506
        %v2662 = vmul.f32 %v1071, %v1507
        %v2663 = vmul.f32 %v1160, %v1508
        %v2664 = vmul.f32 %v1249, %v1509
        %v2665 = vmul.f32 %v1338, %v1510
        %v2666 = vmul.f32 %v896, %v1511
        %v2667 = vmul.f32 %v985, %v1512
        %v2668 = vmul.f32 %v1074, %v1513
        %v2669 = vmul.f32 %v1163, %v1514
        %v2670 = vmul.f32 %v1252, %v1515
        %v2671 = vmul.f32 %v1341, %v1516
        %v2672 = vmul.f32 %v898, %v1517
        %v2673 = vmul.f32 %v987, %v1518
        %v2674 = vmul.f32 %v1076, %v1519
        %v2675 = vmul.f32 %v1165, %v1520
        %v2676 = vmul.f32 %v1254, %v1521
        %v2677 = vmul.f32 %v1343, %v1522
        %v2678 = vmul.f32 %v901, %v1523
        %v2679 = vmul.f32 %v990, %v1524
        %v2680 = vmul.f32 %v1079, %v1525
        %v2681 = vmul.f32 %v1168, %v1526
        %v2682 = vmul.f32 %v1257, %v1527
        %v2683 = vmul.f32 %v1346, %v1528
        %v2684 = vmul.f32 %v903, %v1529
        %v2685 = vmul.f32 %v992, %v1530
        %v2686 = vmul.f32 %v1081, %v1531
        %v2687 = vmul.f32 %v1170, %v1532
        %v2688 = vmul.f32 %v1259, %v1533
        %v2689 = vmul.f32 %v1348, %v1534
        %v2690 = vmul.f32 %v906, %v1535
        %v2691 = vmul.f32 %v995, %v1536
        %v2692 = vmul.f32 %v1084, %v1537
        %v2693 = vmul.f32 %v1173, %v1538
        %v2694 = vmul.f32 %v1262, %v1539
        %v2695 = vmul.f32 %v1351, %v1540
        %v2696 = vmul.f32 %v908, %v1541
        %v2697 = vmul.f32 %v997, %v1542
        %v2698 = vmul.f32 %v1086, %v1543
        %v2699 = vmul.f32 %v1175, %v1544
        %v2700 = vmul.f32 %v1264, %v1545
        %v2701 = vmul.f32 %v1353, %v1546
        %v2702 = vmul.f32 %v2478, %v1547
        %v2703 = vmul.f32 %v2446, %v1548
        %v2704 = vmul.f32 %v2414, %v1549
        %v2705 = vmul.f32 %v2382, %v1550
        %v2706 = vmul.f32 %v2350, %v1551
        %v2707 = vmul.f32 %v2318, %v1552
        %v2708 = vmul.f32 %v2479, %v1553
        %v2709 = vmul.f32 %v2447, %v1554
        %v2710 = vmul.f32 %v2415, %v1555
        %v2711 = vmul.f32 %v2383, %v1556
        %v2712 = vmul.f32 %v2351, %v1557
        %v2713 = vmul.f32 %v2319, %v1558
        %v2714 = vmul.f32 %v2480, %v1559
        %v2715 = vmul.f32 %v2448, %v1560
        %v2716 = vmul.f32 %v2416, %v1561
        %v2717 = vmul.f32 %v2384, %v1562
        %v2718 = vmul.f32 %v2352, %v1563
        %v2719 = vmul.f32 %v2320, %v1564
        %v2720 = vmul.f32 %v2481, %v1565
        %v2721 = vmul.f32 %v2449, %v1566
        %v2722 = vmul.f32 %v2417, %v1567
        %v2723 = vmul.f32 %v2385, %v1568
        %v2724 = vmul.f32 %v2353, %v1569
        %v2725 = vmul.f32 %v2321, %v1570
        %v2726 = vmul.f32 %v2482, %v1571
        %v2727 = vmul.f32 %v2450, %v1572
        %v2728 = vmul.f32 %v2418, %v1573
        %v2729 = vmul.f32 %v2386, %v1574
        %v2730 = vmul.f32 %v2354, %v1575
        %v2731 = vmul.f32 %v2322, %v1576
        %v2732 = vmul.f32 %v2483, %v1577
        %v2733 = vmul.f32 %v2451, %v1578
        %v2734 = vmul.f32 %v2419, %v1579
        %v2735 = vmul.f32 %v2387, %v1580
        %v2736 = vmul.f32 %v2355, %v1581
        %v2737 = vmul.f32 %v2323, %v1582
        %v2738 = vmul.f32 %v2484, %v1583
        %v2739 = vmul.f32 %v2452, %v1584
        %v2740 = vmul.f32 %v2420, %v1585
        %v2741 = vmul.f32 %v2388, %v1586
        %v2742 = vmul.f32 %v2356, %v1587
        %v2743 = vmul.f32 %v2324, %v1588
        %v2744 = vmul.f32 %v2485, %v1589
        %v2745 = vmul.f32 %v2453, %v1590
        %v2746 = vmul.f32 %v2421, %v1591
        %v2747 = vmul.f32 %v2389, %v1592
        %v2748 = vmul.f32 %v2357, %v1593
        %v2749 = vmul.f32 %v2325, %v1594
        %v2750 = vmul.f32 %v2486, %v1595
        %v2751 = vmul.f32 %v2454, %v1596
        %v2752 = vmul.f32 %v2422, %v1597
        %v2753 = vmul.f32 %v2390, %v1598
        %v2754 = vmul.f32 %v2358, %v1599
        %v2755 = vmul.f32 %v2326, %v1600
        %v2756 = vmul.f32 %v2487, %v1601
        %v2757 = vmul.f32 %v2455, %v1602
        %v2758 = vmul.f32 %v2423, %v1603
        %v2759 = vmul.f32 %v2391, %v1604
        %v2760 = vmul.f32 %v2359, %v1605
        %v2761 = vmul.f32 %v2327, %v1606
        %v2762 = vmul.f32 %v2488, %v1607
        %v2763 = vmul.f32 %v2456, %v1608
        %v2764 = vmul.f32 %v2424, %v1609
        %v2765 = vmul.f32 %v2392, %v1610
        %v2766 = vmul.f32 %v2360, %v1611
        %v2767 = vmul.f32 %v2328, %v1612
        %v2768 = vmul.f32 %v2489, %v1613
        %v2769 = vmul.f32 %v2457, %v1614
        %v2770 = vmul.f32 %v2425, %v1615
        %v2771 = vmul.f32 %v2393, %v1616
        %v2772 = vmul.f32 %v2361, %v1617
        %v2773 = vmul.f32 %v2329, %v1618
        %v2774 = vmul.f32 %v2490, %v1619
        %v2775 = vmul.f32 %v2458, %v1620
        %v2776 = vmul.f32 %v2426, %v1621
        %v2777 = vmul.f32 %v2394, %v1622
        %v2778 = vmul.f32 %v2362, %v1623
        %v2779 = vmul.f32 %v2330, %v1624
        %v2780 = vmul.f32 %v2491, %v1625
        %v2781 = vmul.f32 %v2459, %v1626
        %v2782 = vmul.f32 %v2427, %v1627
        %v2783 = vmul.f32 %v2395, %v1628
        %v2784 = vmul.f32 %v2363, %v1629
        %v2785 = vmul.f32 %v2331, %v1630
        %v2786 = vmul.f32 %v2492, %v1631
        %v2787 = vmul.f32 %v2460, %v1632
        %v2788 = vmul.f32 %v2428, %v1633
        %v2789 = vmul.f32 %v2396, %v1634
        %v2790 = vmul.f32 %v2364, %v1635
        %v2791 = vmul.f32 %v2332, %v1636
        %v2792 = vmul.f32 %v2493, %v1637
        %v2793 = vmul.f32 %v2461, %v1638
        %v2794 = vmul.f32 %v2429, %v1639
        %v2795 = vmul.f32 %v2397, %v1640
        %v2796 = vmul.f32 %v2365, %v1641
        %v2797 = vmul.f32 %v2333, %v1642
        %v2798 = vmul.f32 %v2494, %v1643
        %v2799 = vmul.f32 %v2462, %v1644
        %v2800 = vmul.f32 %v2430, %v1645
        %v2801 = vmul.f32 %v2398, %v1646
        %v2802 = vmul.f32 %v2366, %v1647
        %v2803 = vmul.f32 %v2334, %v1648
        %v2804 = vmul.f32 %v2495, %v1649
        %v2805 = vmul.f32 %v2463, %v1650
        %v2806 = vmul.f32 %v2431, %v1651
        %v2807 = vmul.f32 %v2399, %v1652
        %v2808 = vmul.f32 %v2367, %v1653
        %v2809 = vmul.f32 %v2335, %v1654
        %v2810 = vmul.f32 %v2496, %v1655
        %v2811 = vmul.f32 %v2464, %v1656
        %v2812 = vmul.f32 %v2432, %v1657
        %v2813 = vmul.f32 %v2400, %v1658
        %v2814 = vmul.f32 %v2368, %v1659
        %v2815 = vmul.f32 %v2336, %v1660
        %v2816 = vmul.f32 %v2497, %v1661
        %v2817 = vmul.f32 %v2465, %v1662
        %v2818 = vmul.f32 %v2433, %v1663
        %v2819 = vmul.f32 %v2401, %v1664
        %v2820 = vmul.f32 %v2369, %v1665
        %v2821 = vmul.f32 %v2337, %v1666
        %v2822 = vmul.f32 %v2498, %v1667
        %v2823 = vmul.f32 %v2466, %v1668
        %v2824 = vmul.f32 %v2434, %v1669
        %v2825 = vmul.f32 %v2402, %v1670
        %v2826 = vmul.f32 %v2370, %v1671
        %v2827 = vmul.f32 %v2338, %v1672
        %v2828 = vmul.f32 %v2499, %v1673
        %v2829 = vmul.f32 %v2467, %v1674
        %v2830 = vmul.f32 %v2435, %v1675
        %v2831 = vmul.f32 %v2403, %v1676
        %v2832 = vmul.f32 %v2371, %v1677
        %v2833 = vmul.f32 %v2339, %v1678
        %v2834 = vmul.f32 %v2500, %v1679
        %v2835 = vmul.f32 %v2468, %v1680
        %v2836 = vmul.f32 %v2436, %v1681
        %v2837 = vmul.f32 %v2404, %v1682
        %v2838 = vmul.f32 %v2372, %v1683
        %v2839 = vmul.f32 %v2340, %v1684
        %v2840 = vmul.f32 %v2501, %v1685
        %v2841 = vmul.f32 %v2469, %v1686
        %v2842 = vmul.f32 %v2437, %v1687
        %v2843 = vmul.f32 %v2405, %v1688
        %v2844 = vmul.f32 %v2373, %v1689
        %v2845 = vmul.f32 %v2341, %v1690
        %v2846 = vmul.f32 %v2502, %v1691
        %v2847 = vmul.f32 %v2470, %v1692
        %v2848 = vmul.f32 %v2438, %v1693
        %v2849 = vmul.f32 %v2406, %v1694
        %v2850 = vmul.f32 %v2374, %v1695
        %v2851 = vmul.f32 %v2342, %v1696
        %v2852 = vmul.f32 %v2503, %v1697
        %v2853 = vmul.f32 %v2471, %v1698
        %v2854 = vmul.f32 %v2439, %v1699
        %v2855 = vmul.f32 %v2407, %v1700
        %v2856 = vmul.f32 %v2375, %v1701
        %v2857 = vmul.f32 %v2343, %v1702
        %v2858 = vmul.f32 %v2504, %v1703
        %v2859 = vmul.f32 %v2472, %v1704
        %v2860 = vmul.f32 %v2440, %v1705
        %v2861 = vmul.f32 %v2408, %v1706
        %v2862 = vmul.f32 %v2376, %v1707
        %v2863 = vmul.f32 %v2344, %v1708
        %v2864 = vmul.f32 %v2505, %v1709
        %v2865 = vmul.f32 %v2473, %v1710
        %v2866 = vmul.f32 %v2441, %v1711
        %v2867 = vmul.f32 %v2409, %v1712
        %v2868 = vmul.f32 %v2377, %v1713
        %v2869 = vmul.f32 %v2345, %v1714
        %v2870 = vmul.f32 %v2506, %v1715
        %v2871 = vmul.f32 %v2474, %v1716
        %v2872 = vmul.f32 %v2442, %v1717
        %v2873 = vmul.f32 %v2410, %v1718
        %v2874 = vmul.f32 %v2378, %v1719
        %v2875 = vmul.f32 %v2346, %v1720
        %v2876 = vmul.f32 %v2507, %v1721
        %v2877 = vmul.f32 %v2475, %v1722
        %v2878 = vmul.f32 %v2443, %v1723
        %v2879 = vmul.f32 %v2411, %v1724
        %v2880 = vmul.f32 %v2379, %v1725
        %v2881 = vmul.f32 %v2347, %v1726
        %v2882 = vmul.f32 %v2508, %v1727
        %v2883 = vmul.f32 %v2476, %v1728
        %v2884 = vmul.f32 %v2444, %v1729
        %v2885 = vmul.f32 %v2412, %v1730
        %v2886 = vmul.f32 %v2380, %v1731
        %v2887 = vmul.f32 %v2348, %v1732
        %v2888 = vmul.f32 %v2509, %v1733
        %v2889 = vmul.f32 %v2477, %v1734
        %v2890 = vmul.f32 %v2445, %v1735
        %v2891 = vmul.f32 %v2413, %v1736
        %v2892 = vmul.f32 %v2381, %v1737
        %v2893 = vmul.f32 %v2349, %v1738
        %v2894 = vadd.f32 %v2510, %v2702
        %v2895 = vadd.f32 %v2511, %v2703
        %v2896 = vadd.f32 %v2512, %v2704
        %v2897 = vadd.f32 %v2513, %v2705
        %v2898 = vadd.f32 %v2514, %v2706
        %v2899 = vadd.f32 %v2515, %v2707
        %v2900 = vadd.f32 %v2516, %v2708
        %v2901 = vadd.f32 %v2517, %v2709
        %v2902 = vadd.f32 %v2518, %v2710
        %v2903 = vadd.f32 %v2519, %v2711
        %v2904 = vadd.f32 %v2520, %v2712
        %v2905 = vadd.f32 %v2521, %v2713
        %v2906 = vadd.f32 %v2522, %v2714
        %v2907 = vadd.f32 %v2523, %v2715
        %v2908 = vadd.f32 %v2524, %v2716
        %v2909 = vadd.f32 %v2525, %v2717
        %v2910 = vadd.f32 %v2526, %v2718
        %v2911 = vadd.f32 %v2527, %v2719
        %v2912 = vadd.f32 %v2528, %v2720
        %v2913 = vadd.f32 %v2529, %v2721
        %v2914 = vadd.f32 %v2530, %v2722
        %v2915 = vadd.f32 %v2531, %v2723
        %v2916 = vadd.f32 %v2532, %v2724
        %v2917 = vadd.f32 %v2533, %v2725
        %v2918 = vadd.f32 %v2534, %v2726
        %v2919 = vadd.f32 %v2535, %v2727
        %v2920 = vadd.f32 %v2536, %v2728
        %v2921 = vadd.f32 %v2537, %v2729
        %v2922 = vadd.f32 %v2538, %v2730
        %v2923 = vadd.f32 %v2539, %v2731
        %v2924 = vadd.f32 %v2540, %v2732
        %v2925 = vadd.f32 %v2541, %v2733
        %v2926 = vadd.f32 %v2542, %v2734
        %v2927 = vadd.f32 %v2543, %v2735
        %v2928 = vadd.f32 %v2544, %v2736
        %v2929 = vadd.f32 %v2545, %v2737
        %v2930 = vadd.f32 %v2546, %v2738
        %v2931 = vadd.f32 %v2547, %v2739
        %v2932 = vadd.f32 %v2548, %v2740
        %v2933 = vadd.f32 %v2549, %v2741
        %v2934 = vadd.f32 %v2550, %v2742
        %v2935 = vadd.f32 %v2551, %v2743
        %v2936 = vadd.f32 %v2552, %v2744
        %v2937 = vadd.f32 %v2553, %v2745
        %v2938 = vadd.f32 %v2554, %v2746
        %v2939 = vadd.f32 %v2555, %v2747
        %v2940 = vadd.f32 %v2556, %v2748
        %v2941 = vadd.f32 %v2557, %v2749
        %v2942 = vadd.f32 %v2558, %v2750
        %v2943 = vadd.f32 %v2559, %v2751
        %v2944 = vadd.f32 %v2560, %v2752
        %v2945 = vadd.f32 %v2561, %v2753
        %v2946 = vadd.f32 %v2562, %v2754
        %v2947 = vadd.f32 %v2563, %v2755
        %v2948 = vadd.f32 %v2564, %v2756
        %v2949 = vadd.f32 %v2565, %v2757
        %v2950 = vadd.f32 %v2566, %v2758
        %v2951 = vadd.f32 %v2567, %v2759
        %v2952 = vadd.f32 %v2568, %v2760
        %v2953 = vadd.f32 %v2569, %v2761
        %v2954 = vadd.f32 %v2570, %v2762
        %v2955 = vadd.f32 %v2571, %v2763
        %v2956 = vadd.f32 %v2572, %v2764
        %v2957 = vadd.f32 %v2573, %v2765
        %v2958 = vadd.f32 %v2574, %v2766
        %v2959 = vadd.f32 %v2575, %v2767
        %v2960 = vadd.f32 %v2576, %v2768
        %v2961 = vadd.f32 %v2577, %v2769
        %v2962 = vadd.f32 %v2578, %v2770
        %v2963 = vadd.f32 %v2579, %v2771
        %v2964 = vadd.f32 %v2580, %v2772
        %v2965 = vadd.f32 %v2581, %v2773
        %v2966 = vadd.f32 %v2582, %v2774
        %v2967 = vadd.f32 %v2583, %v2775
        %v2968 = vadd.f32 %v2584, %v2776
        %v2969 = vadd.f32 %v2585, %v2777
        %v2970 = vadd.f32 %v2586, %v2778
        %v2971 = vadd.f32 %v2587, %v2779
        %v2972 = vadd.f32 %v2588, %v2780
        %v2973 = vadd.f32 %v2589, %v2781
        %v2974 = vadd.f32 %v2590, %v2782
        %v2975 = vadd.f32 %v2591, %v2783
        %v2976 = vadd.f32 %v2592, %v2784
        %v2977 = vadd.f32 %v2593, %v2785
        %v2978 = vadd.f32 %v2594, %v2786
        %v2979 = vadd.f32 %v2595, %v2787
        %v2980 = vadd.f32 %v2596, %v2788
        %v2981 = vadd.f32 %v2597, %v2789
        %v2982 = vadd.f32 %v2598, %v2790
        %v2983 = vadd.f32 %v2599, %v2791
        %v2984 = vadd.f32 %v2600, %v2792
        %v2985 = vadd.f32 %v2601, %v2793
        %v2986 = vadd.f32 %v2602, %v2794
        %v2987 = vadd.f32 %v2603, %v2795
        %v2988 = vadd.f32 %v2604, %v2796
        %v2989 = vadd.f32 %v2605, %v2797
        %v2990 = vadd.f32 %v2606, %v2798
        %v2991 = vadd.f32 %v2607, %v2799
        %v2992 = vadd.f32 %v2608, %v2800
        %v2993 = vadd.f32 %v2609, %v2801
        %v2994 = vadd.f32 %v2610, %v2802
        %v2995 = vadd.f32 %v2611, %v2803
        %v2996 = vadd.f32 %v2612, %v2804
        %v2997 = vadd.f32 %v2613, %v2805
        %v2998 = vadd.f32 %v2614, %v2806
        %v2999 = vadd.f32 %v2615, %v2807
        %v3000 = vadd.f32 %v2616, %v2808
        %v3001 = vadd.f32 %v2617, %v2809
        %v3002 = vadd.f32 %v2618, %v2810
        %v3003 = vadd.f32 %v2619, %v2811
        %v3004 = vadd.f32 %v2620, %v2812
        %v3005 = vadd.f32 %v2621, %v2813
        %v3006 = vadd.f32 %v2622, %v2814
        %v3007 = vadd.f32 %v2623, %v2815
        %v3008 = vadd.f32 %v2624, %v2816
        %v3009 = vadd.f32 %v2625, %v2817
        %v3010 = vadd.f32 %v2626, %v2818
        %v3011 = vadd.f32 %v2627, %v2819
        %v3012 = vadd.f32 %v2628, %v2820
        %v3013 = vadd.f32 %v2629, %v2821
        %v3014 = vadd.f32 %v2630, %v2822
        %v3015 = vadd.f32 %v2631, %v2823
        %v3016 = vadd.f32 %v2632, %v2824
        %v3017 = vadd.f32 %v2633, %v2825
        %v3018 = vadd.f32 %v2634, %v2826
        %v3019 = vadd.f32 %v2635, %v2827
        %v3020 = vadd.f32 %v2636, %v2828
        %v3021 = vadd.f32 %v2637, %v2829
        %v3022 = vadd.f32 %v2638, %v2830
        %v3023 = vadd.f32 %v2639, %v2831
        %v3024 = vadd.f32 %v2640, %v2832
        %v3025 = vadd.f32 %v2641, %v2833
        %v3026 = vadd.f32 %v2642, %v2834
        %v3027 = vadd.f32 %v2643, %v2835
        %v3028 = vadd.f32 %v2644, %v2836
        %v3029 = vadd.f32 %v2645, %v2837
        %v3030 = vadd.f32 %v2646, %v2838
        %v3031 = vadd.f32 %v2647, %v2839
        %v3032 = vadd.f32 %v2648, %v2840
        %v3033 = vadd.f32 %v2649, %v2841
        %v3034 = vadd.f32 %v2650, %v2842
        %v3035 = vadd.f32 %v2651, %v2843
        %v3036 = vadd.f32 %v2652, %v2844
        %v3037 = vadd.f32 %v2653, %v2845
        %v3038 = vadd.f32 %v2654, %v2846
        %v3039 = vadd.f32 %v2655, %v2847
        %v3040 = vadd.f32 %v2656, %v2848
        %v3041 = vadd.f32 %v2657, %v2849
        %v3042 = vadd.f32 %v2658, %v2850
        %v3043 = vadd.f32 %v2659, %v2851
        %v3044 = vadd.f32 %v2660, %v2852
        %v3045 = vadd.f32 %v2661, %v2853
        %v3046 = vadd.f32 %v2662, %v2854
        %v3047 = vadd.f32 %v2663, %v2855
        %v3048 = vadd.f32 %v2664, %v2856
        %v3049 = vadd.f32 %v2665, %v2857
        %v3050 = vadd.f32 %v2666, %v2858
        %v3051 = vadd.f32 %v2667, %v2859
        %v3052 = vadd.f32 %v2668, %v2860
        %v3053 = vadd.f32 %v2669, %v2861
        %v3054 = vadd.f32 %v2670, %v2862
        %v3055 = vadd.f32 %v2671, %v2863
        %v3056 = vadd.f32 %v2672, %v2864
        %v3057 = vadd.f32 %v2673, %v2865
        %v3058 = vadd.f32 %v2674, %v2866
        %v3059 = vadd.f32 %v2675, %v2867
        %v3060 = vadd.f32 %v2676, %v2868
        %v3061 = vadd.f32 %v2677, %v2869
        %v3062 = vadd.f32 %v2678, %v2870
        %v3063 = vadd.f32 %v2679, %v2871
        %v3064 = vadd.f32 %v2680, %v2872
        %v3065 = vadd.f32 %v2681, %v2873
        %v3066 = vadd.f32 %v2682, %v2874
        %v3067 = vadd.f32 %v2683, %v2875
        %v3068 = vadd.f32 %v2684, %v2876
        %v3069 = vadd.f32 %v2685, %v2877
        %v3070 = vadd.f32 %v2686, %v2878
        %v3071 = vadd.f32 %v2687, %v2879
        %v3072 = vadd.f32 %v2688, %v2880
        %v3073 = vadd.f32 %v2689, %v2881
        %v3074 = vadd.f32 %v2690, %v2882
        %v3075 = vadd.f32 %v2691, %v2883
        %v3076 = vadd.f32 %v2692, %v2884
        %v3077 = vadd.f32 %v2693, %v2885
        %v3078 = vadd.f32 %v2694, %v2886
        %v3079 = vadd.f32 %v2695, %v2887
        %v3080 = vadd.f32 %v2696, %v2888
        %v3081 = vadd.f32 %v2697, %v2889
        %v3082 = vadd.f32 %v2698, %v2890
        %v3083 = vadd.f32 %v2699, %v2891
        %v3084 = vadd.f32 %v2700, %v2892
        %v3085 = vadd.f32 %v2701, %v2893
        %v3086 = vmul.f32 %v2446, %v1739
        %v3087 = vmul.f32 %v2414, %v1740
        %v3088 = vmul.f32 %v2382, %v1741
        %v3089 = vmul.f32 %v2350, %v1742
        %v3090 = vmul.f32 %v2318, %v1743
        %v3091 = vmul.f32 %v2478, %v1744
        %v3092 = vmul.f32 %v2447, %v1745
        %v3093 = vmul.f32 %v2415, %v1746
        %v3094 = vmul.f32 %v2383, %v1747
        %v3095 = vmul.f32 %v2351, %v1748
        %v3096 = vmul.f32 %v2319, %v1749
        %v3097 = vmul.f32 %v2479, %v1750
        %v3098 = vmul.f32 %v2448, %v1751
        %v3099 = vmul.f32 %v2416, %v1752
        %v3100 = vmul.f32 %v2384, %v1753
        %v3101 = vmul.f32 %v2352, %v1754
        %v3102 = vmul.f32 %v2320, %v1755
        %v3103 = vmul.f32 %v2480, %v1756
        %v3104 = vmul.f32 %v2449, %v1757
        %v3105 = vmul.f32 %v2417, %v1758
        %v3106 = vmul.f32 %v2385, %v1759
        %v3107 = vmul.f32 %v2353, %v1760
        %v3108 = vmul.f32 %v2321, %v1761
        %v3109 = vmul.f32 %v2481, %v1762
        %v3110 = vmul.f32 %v2450, %v1763
        %v3111 = vmul.f32 %v2418, %v1764
        %v3112 = vmul.f32 %v2386, %v1765
        %v3113 = vmul.f32 %v2354, %v1766
        %v3114 = vmul.f32 %v2322, %v1767
        %v3115 = vmul.f32 %v2482, %v1768
        %v3116 = vmul.f32 %v2451, %v1769
        %v3117 = vmul.f32 %v2419, %v1770
        %v3118 = vmul.f32 %v2387, %v1771
        %v3119 = vmul.f32 %v2355, %v1772
        %v3120 = vmul.f32 %v2323, %v1773
        %v3121 = vmul.f32 %v2483, %v1774
        %v3122 = vmul.f32 %v2452, %v1775
        %v3123 = vmul.f32 %v2420, %v1776
        %v3124 = vmul.f32 %v2388, %v1777
        %v3125 = vmul.f32 %v2356, %v1778
        %v3126 = vmul.f32 %v2324, %v1779
        %v3127 = vmul.f32 %v2484, %v1780
        %v3128 = vmul.f32 %v2453, %v1781
        %v3129 = vmul.f32 %v2421, %v1782
        %v3130 = vmul.f32 %v2389, %v1783
        %v3131 = vmul.f32 %v2357, %v1784
        %v3132 = vmul.f32 %v2325, %v1785
        %v3133 = vmul.f32 %v2485, %v1786
        %v3134 = vmul.f32 %v2454, %v1787
        %v3135 = vmul.f32 %v2422, %v1788
        %v3136 = vmul.f32 %v2390, %v1789
        %v3137 = vmul.f32 %v2358, %v1790
        %v3138 = vmul.f32 %v2326, %v1791
        %v3139 = vmul.f32 %v2486, %v1792
        %v3140 = vmul.f32 %v2455, %v1793
        %v3141 = vmul.f32 %v2423, %v1794
        %v3142 = vmul.f32 %v2391, %v1795
        %v3143 = vmul.f32 %v2359, %v1796
        %v3144 = vmul.f32 %v2327, %v1797
        %v3145 = vmul.f32 %v2487, %v1798
        %v3146 = vmul.f32 %v2456, %v1799
        %v3147 = vmul.f32 %v2424, %v1800
        %v3148 = vmul.f32 %v2392, %v1801
        %v3149 = vmul.f32 %v2360, %v1802
        %v3150 = vmul.f32 %v2328, %v1803
        %v3151 = vmul.f32 %v2488, %v1804
        %v3152 = vmul.f32 %v2457, %v1805
        %v3153 = vmul.f32 %v2425, %v1806
        %v3154 = vmul.f32 %v2393, %v1807
        %v3155 = vmul.f32 %v2361, %v1808
        %v3156 = vmul.f32 %v2329, %v1809
        %v3157 = vmul.f32 %v2489, %v1810
        %v3158 = vmul.f32 %v2458, %v1811
        %v3159 = vmul.f32 %v2426, %v1812
        %v3160 = vmul.f32 %v2394, %v1813
        %v3161 = vmul.f32 %v2362, %v1814
        %v3162 = vmul.f32 %v2330, %v1815
        %v3163 = vmul.f32 %v2490, %v1816
        %v3164 = vmul.f32 %v2459, %v1817
        %v3165 = vmul.f32 %v2427, %v1818
        %v3166 = vmul.f32 %v2395, %v1819
        %v3167 = vmul.f32 %v2363, %v1820
        %v3168 = vmul.f32 %v2331, %v1821
        %v3169 = vmul.f32 %v2491, %v1822
        %v3170 = vmul.f32 %v2460, %v1823
        %v3171 = vmul.f32 %v2428, %v1824
        %v3172 = vmul.f32 %v2396, %v1825
        %v3173 = vmul.f32 %v2364, %v1826
        %v3174 = vmul.f32 %v2332, %v1827
        %v3175 = vmul.f32 %v2492, %v1828
        %v3176 = vmul.f32 %v2461, %v1829
        %v3177 = vmul.f32 %v2429, %v1830
        %v3178 = vmul.f32 %v2397, %v1831
        %v3179 = vmul.f32 %v2365, %v1832
        %v3180 = vmul.f32 %v2333, %v1833
        %v3181 = vmul.f32 %v2493, %v1834
        %v3182 = vmul.f32 %v2462, %v1835
        %v3183 = vmul.f32 %v2430, %v1836
        %v3184 = vmul.f32 %v2398, %v1837
        %v3185 = vmul.f32 %v2366, %v1838
        %v3186 = vmul.f32 %v2334, %v1839
        %v3187 = vmul.f32 %v2494, %v1840
        %v3188 = vmul.f32 %v2463, %v1841
        %v3189 = vmul.f32 %v2431, %v1842
        %v3190 = vmul.f32 %v2399, %v1843
        %v3191 = vmul.f32 %v2367, %v1844
        %v3192 = vmul.f32 %v2335, %v1845
        %v3193 = vmul.f32 %v2495, %v1846
        %v3194 = vmul.f32 %v2464, %v1847
        %v3195 = vmul.f32 %v2432, %v1848
        %v3196 = vmul.f32 %v2400, %v1849
        %v3197 = vmul.f32 %v2368, %v1850
        %v3198 = vmul.f32 %v2336, %v1851
        %v3199 = vmul.f32 %v2496, %v1852
        %v3200 = vmul.f32 %v2465, %v1853
        %v3201 = vmul.f32 %v2433, %v1854
        %v3202 = vmul.f32 %v2401, %v1855
        %v3203 = vmul.f32 %v2369, %v1856
        %v3204 = vmul.f32 %v2337, %v1857
        %v3205 = vmul.f32 %v2497, %v1858
        %v3206 = vmul.f32 %v2466, %v1859
        %v3207 = vmul.f32 %v2434, %v1860
        %v3208 = vmul.f32 %v2402, %v1861
        %v3209 = vmul.f32 %v2370, %v1862
        %v3210 = vmul.f32 %v2338, %v1863
        %v3211 = vmul.f32 %v2498, %v1864
        %v3212 = vmul.f32 %v2467, %v1865
        %v3213 = vmul.f32 %v2435, %v1866
        %v3214 = vmul.f32 %v2403, %v1867
        %v3215 = vmul.f32 %v2371, %v1868
        %v3216 = vmul.f32 %v2339, %v1869
        %v3217 = vmul.f32 %v2499, %v1870
        %v3218 = vmul.f32 %v2468, %v1871
        %v3219 = vmul.f32 %v2436, %v1872
        %v3220 = vmul.f32 %v2404, %v1873
        %v3221 = vmul.f32 %v2372, %v1874
        %v3222 = vmul.f32 %v2340, %v1875
        %v3223 = vmul.f32 %v2500, %v1876
        %v3224 = vmul.f32 %v2469, %v1877
        %v3225 = vmul.f32 %v2437, %v1878
        %v3226 = vmul.f32 %v2405, %v1879
        %v3227 = vmul.f32 %v2373, %v1880
        %v3228 = vmul.f32 %v2341, %v1881
        %v3229 = vmul.f32 %v2501, %v1882
        %v3230 = vmul.f32 %v2470, %v1883
        %v3231 = vmul.f32 %v2438, %v1884
        %v3232 = vmul.f32 %v2406, %v1885
        %v3233 = vmul.f32 %v2374, %v1886
        %v3234 = vmul.f32 %v2342, %v1887
        %v3235 = vmul.f32 %v2502, %v1888
        %v3236 = vmul.f32 %v2471, %v1889
        %v3237 = vmul.f32 %v2439, %v1890
        %v3238 = vmul.f32 %v2407, %v1891
        %v3239 = vmul.f32 %v2375, %v1892
        %v3240 = vmul.f32 %v2343, %v1893
        %v3241 = vmul.f32 %v2503, %v1894
        %v3242 = vmul.f32 %v2472, %v1895
        %v3243 = vmul.f32 %v2440, %v1896
        %v3244 = vmul.f32 %v2408, %v1897
        %v3245 = vmul.f32 %v2376, %v1898
        %v3246 = vmul.f32 %v2344, %v1899
        %v3247 = vmul.f32 %v2504, %v1900
        %v3248 = vmul.f32 %v2473, %v1901
        %v3249 = vmul.f32 %v2441, %v1902
        %v3250 = vmul.f32 %v2409, %v1903
        %v3251 = vmul.f32 %v2377, %v1904
        %v3252 = vmul.f32 %v2345, %v1905
        %v3253 = vmul.f32 %v2505, %v1906
        %v3254 = vmul.f32 %v2474, %v1907
        %v3255 = vmul.f32 %v2442, %v1908
        %v3256 = vmul.f32 %v2410, %v1909
        %v3257 = vmul.f32 %v2378, %v1910
        %v3258 = vmul.f32 %v2346, %v1911
        %v3259 = vmul.f32 %v2506, %v1912
        %v3260 = vmul.f32 %v2475, %v1913
        %v3261 = vmul.f32 %v2443, %v1914
        %v3262 = vmul.f32 %v2411, %v1915
        %v3263 = vmul.f32 %v2379, %v1916
        %v3264 = vmul.f32 %v2347, %v1917
        %v3265 = vmul.f32 %v2507, %v1918
        %v3266 = vmul.f32 %v2476, %v1919
        %v3267 = vmul.f32 %v2444, %v1920
        %v3268 = vmul.f32 %v2412, %v1921
        %v3269 = vmul.f32 %v2380, %v1922
        %v3270 = vmul.f32 %v2348, %v1923
        %v3271 = vmul.f32 %v2508, %v1924
        %v3272 = vmul.f32 %v2477, %v1925
        %v3273 = vmul.f32 %v2445, %v1926
        %v3274 = vmul.f32 %v2413, %v1927
        %v3275 = vmul.f32 %v2381, %v1928
        %v3276 = vmul.f32 %v2349, %v1929
        %v3277 = vmul.f32 %v2509, %v1930
        %v3278 = vadd.f32 %v2894, %v3086
        %v3279 = vadd.f32 %v2895, %v3087
        %v3280 = vadd.f32 %v2896, %v3088
        %v3281 = vadd.f32 %v2897, %v3089
        %v3282 = vadd.f32 %v2898, %v3090
        %v3283 = vadd.f32 %v2899, %v3091
        %v3284 = vadd.f32 %v2900, %v3092
        %v3285 = vadd.f32 %v2901, %v3093
        %v3286 = vadd.f32 %v2902, %v3094
        %v3287 = vadd.f32 %v2903, %v3095
        %v3288 = vadd.f32 %v2904, %v3096
        %v3289 = vadd.f32 %v2905, %v3097
        %v3290 = vadd.f32 %v2906, %v3098
        %v3291 = vadd.f32 %v2907, %v3099
        %v3292 = vadd.f32 %v2908, %v3100
        %v3293 = vadd.f32 %v2909, %v3101
        %v3294 = vadd.f32 %v2910, %v3102
        %v3295 = vadd.f32 %v2911, %v3103
        %v3296 = vadd.f32 %v2912, %v3104
        %v3297 = vadd.f32 %v2913, %v3105
        %v3298 = vadd.f32 %v2914, %v3106
        %v3299 = vadd.f32 %v2915, %v3107
        %v3300 = vadd.f32 %v2916, %v3108
        %v3301 = vadd.f32 %v2917, %v3109
        %v3302 = vadd.f32 %v2918, %v3110
        %v3303 = vadd.f32 %v2919, %v3111
        %v3304 = vadd.f32 %v2920, %v3112
        %v3305 = vadd.f32 %v2921, %v3113
        %v3306 = vadd.f32 %v2922, %v3114
        %v3307 = vadd.f32 %v2923, %v3115
        %v3308 = vadd.f32 %v2924, %v3116
        %v3309 = vadd.f32 %v2925, %v3117
        %v3310 = vadd.f32 %v2926, %v3118
        %v3311 = vadd.f32 %v2927, %v3119
        %v3312 = vadd.f32 %v2928, %v3120
        %v3313 = vadd.f32 %v2929, %v3121
        %v3314 = vadd.f32 %v2930, %v3122
        %v3315 = vadd.f32 %v2931, %v3123
        %v3316 = vadd.f32 %v2932, %v3124
        %v3317 = vadd.f32 %v2933, %v3125
        %v3318 = vadd.f32 %v2934, %v3126
        %v3319 = vadd.f32 %v2935, %v3127
        %v3320 = vadd.f32 %v2936, %v3128
        %v3321 = vadd.f32 %v2937, %v3129
        %v3322 = vadd.f32 %v2938, %v3130
        %v3323 = vadd.f32 %v2939, %v3131
        %v3324 = vadd.f32 %v2940, %v3132
        %v3325 = vadd.f32 %v2941, %v3133
        %v3326 = vadd.f32 %v2942, %v3134
        %v3327 = vadd.f32 %v2943, %v3135
        %v3328 = vadd.f32 %v2944, %v3136
        %v3329 = vadd.f32 %v2945, %v3137
        %v3330 = vadd.f32 %v2946, %v3138
        %v3331 = vadd.f32 %v2947, %v3139
        %v3332 = vadd.f32 %v2948, %v3140
        %v3333 = vadd.f32 %v2949, %v3141
        %v3334 = vadd.f32 %v2950, %v3142
        %v3335 = vadd.f32 %v2951, %v3143
        %v3336 = vadd.f32 %v2952, %v3144
        %v3337 = vadd.f32 %v2953, %v3145
        %v3338 = vadd.f32 %v2954, %v3146
        %v3339 = vadd.f32 %v2955, %v3147
        %v3340 = vadd.f32 %v2956, %v3148
        %v3341 = vadd.f32 %v2957, %v3149
        %v3342 = vadd.f32 %v2958, %v3150
        %v3343 = vadd.f32 %v2959, %v3151
        %v3344 = vadd.f32 %v2960, %v3152
        %v3345 = vadd.f32 %v2961, %v3153
        %v3346 = vadd.f32 %v2962, %v3154
        %v3347 = vadd.f32 %v2963, %v3155
        %v3348 = vadd.f32 %v2964, %v3156
        %v3349 = vadd.f32 %v2965, %v3157
        %v3350 = vadd.f32 %v2966, %v3158
        %v3351 = vadd.f32 %v2967, %v3159
        %v3352 = vadd.f32 %v2968, %v3160
        %v3353 = vadd.f32 %v2969, %v3161
        %v3354 = vadd.f32 %v2970, %v3162
        %v3355 = vadd.f32 %v2971, %v3163
        %v3356 = vadd.f32 %v2972, %v3164
        %v3357 = vadd.f32 %v2973, %v3165
        %v3358 = vadd.f32 %v2974, %v3166
        %v3359 = vadd.f32 %v2975, %v3167
        %v3360 = vadd.f32 %v2976, %v3168
        %v3361 = vadd.f32 %v2977, %v3169
        %v3362 = vadd.f32 %v2978, %v3170
        %v3363 = vadd.f32 %v2979, %v3171
        %v3364 = vadd.f32 %v2980, %v3172
        %v3365 = vadd.f32 %v2981, %v3173
        %v3366 = vadd.f32 %v2982, %v3174
        %v3367 = vadd.f32 %v2983, %v3175
        %v3368 = vadd.f32 %v2984, %v3176
        %v3369 = vadd.f32 %v2985, %v3177
        %v3370 = vadd.f32 %v2986, %v3178
        %v3371 = vadd.f32 %v2987, %v3179
        %v3372 = vadd.f32 %v2988, %v3180
        %v3373 = vadd.f32 %v2989, %v3181
        %v3374 = vadd.f32 %v2990, %v3182
        %v3375 = vadd.f32 %v2991, %v3183
        %v3376 = vadd.f32 %v2992, %v3184
        %v3377 = vadd.f32 %v2993, %v3185
        %v3378 = vadd.f32 %v2994, %v3186
        %v3379 = vadd.f32 %v2995, %v3187
        %v3380 = vadd.f32 %v2996, %v3188
        %v3381 = vadd.f32 %v2997, %v3189
        %v3382 = vadd.f32 %v2998, %v3190
        %v3383 = vadd.f32 %v2999, %v3191
        %v3384 = vadd.f32 %v3000, %v3192
        %v3385 = vadd.f32 %v3001, %v3193
        %v3386 = vadd.f32 %v3002, %v3194
        %v3387 = vadd.f32 %v3003, %v3195
        %v3388 = vadd.f32 %v3004, %v3196
        %v3389 = vadd.f32 %v3005, %v3197
        %v3390 = vadd.f32 %v3006, %v3198
        %v3391 = vadd.f32 %v3007, %v3199
        %v3392 = vadd.f32 %v3008, %v3200
        %v3393 = vadd.f32 %v3009, %v3201
        %v3394 = vadd.f32 %v3010, %v3202
        %v3395 = vadd.f32 %v3011, %v3203
        %v3396 = vadd.f32 %v3012, %v3204
        %v3397 = vadd.f32 %v3013, %v3205
        %v3398 = vadd.f32 %v3014, %v3206
        %v3399 = vadd.f32 %v3015, %v3207
        %v3400 = vadd.f32 %v3016, %v3208
        %v3401 = vadd.f32 %v3017, %v3209
        %v3402 = vadd.f32 %v3018, %v3210
        %v3403 = vadd.f32 %v3019, %v3211
        %v3404 = vadd.f32 %v3020, %v3212
        %v3405 = vadd.f32 %v3021, %v3213
        %v3406 = vadd.f32 %v3022, %v3214
        %v3407 = vadd.f32 %v3023, %v3215
        %v3408 = vadd.f32 %v3024, %v3216
        %v3409 = vadd.f32 %v3025, %v3217
        %v3410 = vadd.f32 %v3026, %v3218
        %v3411 = vadd.f32 %v3027, %v3219
        %v3412 = vadd.f32 %v3028, %v3220
        %v3413 = vadd.f32 %v3029, %v3221
        %v3414 = vadd.f32 %v3030, %v3222
        %v3415 = vadd.f32 %v3031, %v3223
        %v3416 = vadd.f32 %v3032, %v3224
        %v3417 = vadd.f32 %v3033, %v3225
        %v3418 = vadd.f32 %v3034, %v3226
        %v3419 = vadd.f32 %v3035, %v3227
        %v3420 = vadd.f32 %v3036, %v3228
        %v3421 = vadd.f32 %v3037, %v3229
        %v3422 = vadd.f32 %v3038, %v3230
        %v3423 = vadd.f32 %v3039, %v3231
        %v3424 = vadd.f32 %v3040, %v3232
        %v3425 = vadd.f32 %v3041, %v3233
        %v3426 = vadd.f32 %v3042, %v3234
        %v3427 = vadd.f32 %v3043, %v3235
        %v3428 = vadd.f32 %v3044, %v3236
        %v3429 = vadd.f32 %v3045, %v3237
        %v3430 = vadd.f32 %v3046, %v3238
        %v3431 = vadd.f32 %v3047, %v3239
        %v3432 = vadd.f32 %v3048, %v3240
        %v3433 = vadd.f32 %v3049, %v3241
        %v3434 = vadd.f32 %v3050, %v3242
        %v3435 = vadd.f32 %v3051, %v3243
        %v3436 = vadd.f32 %v3052, %v3244
        %v3437 = vadd.f32 %v3053, %v3245
        %v3438 = vadd.f32 %v3054, %v3246
        %v3439 = vadd.f32 %v3055, %v3247
        %v3440 = vadd.f32 %v3056, %v3248
        %v3441 = vadd.f32 %v3057, %v3249
        %v3442 = vadd.f32 %v3058, %v3250
        %v3443 = vadd.f32 %v3059, %v3251
        %v3444 = vadd.f32 %v3060, %v3252
        %v3445 = vadd.f32 %v3061, %v3253
        %v3446 = vadd.f32 %v3062, %v3254
        %v3447 = vadd.f32 %v3063, %v3255
        %v3448 = vadd.f32 %v3064, %v3256
        %v3449 = vadd.f32 %v3065, %v3257
        %v3450 = vadd.f32 %v3066, %v3258
        %v3451 = vadd.f32 %v3067, %v3259
        %v3452 = vadd.f32 %v3068, %v3260
        %v3453 = vadd.f32 %v3069, %v3261
        %v3454 = vadd.f32 %v3070, %v3262
        %v3455 = vadd.f32 %v3071, %v3263
        %v3456 = vadd.f32 %v3072, %v3264
        %v3457 = vadd.f32 %v3073, %v3265
        %v3458 = vadd.f32 %v3074, %v3266
        %v3459 = vadd.f32 %v3075, %v3267
        %v3460 = vadd.f32 %v3076, %v3268
        %v3461 = vadd.f32 %v3077, %v3269
        %v3462 = vadd.f32 %v3078, %v3270
        %v3463 = vadd.f32 %v3079, %v3271
        %v3464 = vadd.f32 %v3080, %v3272
        %v3465 = vadd.f32 %v3081, %v3273
        %v3466 = vadd.f32 %v3082, %v3274
        %v3467 = vadd.f32 %v3083, %v3275
        %v3468 = vadd.f32 %v3084, %v3276
        %v3469 = vadd.f32 %v3085, %v3277
        %v3470 = vpack.c.bf16 %v3279, %v3278
        %v3471 = vpack.c.bf16 %v3281, %v3280
        %v3472 = vpack.c.bf16 %v3283, %v3282
        %v3473 = vpack.c.bf16 %v3285, %v3284
        %v3474 = vpack.c.bf16 %v3287, %v3286
        %v3475 = vpack.c.bf16 %v3289, %v3288
        %v3476 = vpack.c.bf16 %v3291, %v3290
        %v3477 = vpack.c.bf16 %v3293, %v3292
        %v3478 = vpack.c.bf16 %v3295, %v3294
        %v3479 = vpack.c.bf16 %v3297, %v3296
        %v3480 = vpack.c.bf16 %v3299, %v3298
        %v3481 = vpack.c.bf16 %v3301, %v3300
        %v3482 = vpack.c.bf16 %v3303, %v3302
        %v3483 = vpack.c.bf16 %v3305, %v3304
        %v3484 = vpack.c.bf16 %v3307, %v3306
        %v3485 = vpack.c.bf16 %v3309, %v3308
        %v3486 = vpack.c.bf16 %v3311, %v3310
        %v3487 = vpack.c.bf16 %v3313, %v3312
        %v3488 = vpack.c.bf16 %v3315, %v3314
        %v3489 = vpack.c.bf16 %v3317, %v3316
        %v3490 = vpack.c.bf16 %v3319, %v3318
        %v3491 = vpack.c.bf16 %v3321, %v3320
        %v3492 = vpack.c.bf16 %v3323, %v3322
        %v3493 = vpack.c.bf16 %v3325, %v3324
        %v3494 = vpack.c.bf16 %v3327, %v3326
        %v3495 = vpack.c.bf16 %v3329, %v3328
        %v3496 = vpack.c.bf16 %v3331, %v3330
        %v3497 = vpack.c.bf16 %v3333, %v3332
        %v3498 = vpack.c.bf16 %v3335, %v3334
        %v3499 = vpack.c.bf16 %v3337, %v3336
        %v3500 = vpack.c.bf16 %v3339, %v3338
        %v3501 = vpack.c.bf16 %v3341, %v3340
        %v3502 = vpack.c.bf16 %v3343, %v3342
        %v3503 = vpack.c.bf16 %v3345, %v3344
        %v3504 = vpack.c.bf16 %v3347, %v3346
        %v3505 = vpack.c.bf16 %v3349, %v3348
        %v3506 = vpack.c.bf16 %v3351, %v3350
        %v3507 = vpack.c.bf16 %v3353, %v3352
        %v3508 = vpack.c.bf16 %v3355, %v3354
        %v3509 = vpack.c.bf16 %v3357, %v3356
        %v3510 = vpack.c.bf16 %v3359, %v3358
        %v3511 = vpack.c.bf16 %v3361, %v3360
        %v3512 = vpack.c.bf16 %v3363, %v3362
        %v3513 = vpack.c.bf16 %v3365, %v3364
        %v3514 = vpack.c.bf16 %v3367, %v3366
        %v3515 = vpack.c.bf16 %v3369, %v3368
        %v3516 = vpack.c.bf16 %v3371, %v3370
        %v3517 = vpack.c.bf16 %v3373, %v3372
        %v3518 = vpack.c.bf16 %v3375, %v3374
        %v3519 = vpack.c.bf16 %v3377, %v3376
        %v3520 = vpack.c.bf16 %v3379, %v3378
        %v3521 = vpack.c.bf16 %v3381, %v3380
        %v3522 = vpack.c.bf16 %v3383, %v3382
        %v3523 = vpack.c.bf16 %v3385, %v3384
        %v3524 = vpack.c.bf16 %v3387, %v3386
        %v3525 = vpack.c.bf16 %v3389, %v3388
        %v3526 = vpack.c.bf16 %v3391, %v3390
        %v3527 = vpack.c.bf16 %v3393, %v3392
        %v3528 = vpack.c.bf16 %v3395, %v3394
        %v3529 = vpack.c.bf16 %v3397, %v3396
        %v3530 = vpack.c.bf16 %v3399, %v3398
        %v3531 = vpack.c.bf16 %v3401, %v3400
        %v3532 = vpack.c.bf16 %v3403, %v3402
        %v3533 = vpack.c.bf16 %v3405, %v3404
        %v3534 = vpack.c.bf16 %v3407, %v3406
        %v3535 = vpack.c.bf16 %v3409, %v3408
        %v3536 = vpack.c.bf16 %v3411, %v3410
        %v3537 = vpack.c.bf16 %v3413, %v3412
        %v3538 = vpack.c.bf16 %v3415, %v3414
        %v3539 = vpack.c.bf16 %v3417, %v3416
        %v3540 = vpack.c.bf16 %v3419, %v3418
        %v3541 = vpack.c.bf16 %v3421, %v3420
        %v3542 = vpack.c.bf16 %v3423, %v3422
        %v3543 = vpack.c.bf16 %v3425, %v3424
        %v3544 = vpack.c.bf16 %v3427, %v3426
        %v3545 = vpack.c.bf16 %v3429, %v3428
        %v3546 = vpack.c.bf16 %v3431, %v3430
        %v3547 = vpack.c.bf16 %v3433, %v3432
        %v3548 = vpack.c.bf16 %v3435, %v3434
        %v3549 = vpack.c.bf16 %v3437, %v3436
        %v3550 = vpack.c.bf16 %v3439, %v3438
        %v3551 = vpack.c.bf16 %v3441, %v3440
        %v3552 = vpack.c.bf16 %v3443, %v3442
        %v3553 = vpack.c.bf16 %v3445, %v3444
        %v3554 = vpack.c.bf16 %v3447, %v3446
        %v3555 = vpack.c.bf16 %v3449, %v3448
        %v3556 = vpack.c.bf16 %v3451, %v3450
        %v3557 = vpack.c.bf16 %v3453, %v3452
        %v3558 = vpack.c.bf16 %v3455, %v3454
        %v3559 = vpack.c.bf16 %v3457, %v3456
        %v3560 = vpack.c.bf16 %v3459, %v3458
        %v3561 = vpack.c.bf16 %v3461, %v3460
        %v3562 = vpack.c.bf16 %v3463, %v3462
        %v3563 = vpack.c.bf16 %v3465, %v3464
        %v3564 = vpack.c.bf16 %v3467, %v3466
        %v3565 = vpack.c.bf16 %v3469, %v3468
        %3566 = vst [vmem:[%s399] sm:$0xff] %v3470
        %3567 = vst [vmem:[%s399 + $0x8] sm:$0xff] %v3471
        %3568 = vst [vmem:[%s399 + $0x10] sm:$0xff] %v3472
        %3569 = vst [vmem:[%s399 + $0x18] sm:$0xff] %v3473
        %3570 = vst [vmem:[%s399 + $0x20] sm:$0xff] %v3474
        %3571 = vst [vmem:[%s399 + $0x28] sm:$0xff] %v3475
        %3572 = vst [vmem:[%s399 + $0x30] sm:$0xff] %v3476
        %3573 = vst [vmem:[%s399 + $0x38] sm:$0xff] %v3477
        %3574 = vst [vmem:[%s399 + $0x40] sm:$0xff] %v3478
        %3575 = vst [vmem:[%s399 + $0x48] sm:$0xff] %v3479
        %3576 = vst [vmem:[%s399 + $0x50] sm:$0xff] %v3480
        %3577 = vst [vmem:[%s399 + $0x58] sm:$0xff] %v3481
        %3578 = vst [vmem:[%s399 + $0x60] sm:$0xff] %v3482
        %3579 = vst [vmem:[%s399 + $0x68] sm:$0xff] %v3483
        %3580 = vst [vmem:[%s399 + $0x70] sm:$0xff] %v3484
        %3581 = vst [vmem:[%s399 + $0x78] sm:$0xff] %v3485
        %3582 = vst [vmem:[%s399 + $0x80] sm:$0xff] %v3486
        %3583 = vst [vmem:[%s399 + $0x88] sm:$0xff] %v3487
        %3584 = vst [vmem:[%s399 + $0x90] sm:$0xff] %v3488
        %3585 = vst [vmem:[%s399 + $0x98] sm:$0xff] %v3489
        %3586 = vst [vmem:[%s399 + $0xa0] sm:$0xff] %v3490
        %3587 = vst [vmem:[%s399 + $0xa8] sm:$0xff] %v3491
        %3588 = vst [vmem:[%s399 + $0xb0] sm:$0xff] %v3492
        %3589 = vst [vmem:[%s399 + $0xb8] sm:$0xff] %v3493
        %3590 = vst [vmem:[%s399 + $0xc0] sm:$0xff] %v3494
        %3591 = vst [vmem:[%s399 + $0xc8] sm:$0xff] %v3495
        %3592 = vst [vmem:[%s399 + $0xd0] sm:$0xff] %v3496
        %3593 = vst [vmem:[%s399 + $0xd8] sm:$0xff] %v3497
        %3594 = vst [vmem:[%s399 + $0xe0] sm:$0xff] %v3498
        %3595 = vst [vmem:[%s399 + $0xe8] sm:$0xff] %v3499
        %3596 = vst [vmem:[%s399 + $0xf0] sm:$0xff] %v3500
        %3597 = vst [vmem:[%s399 + $0xf8] sm:$0xff] %v3501
        %3598 = vst [vmem:[%s399 + $0x100] sm:$0xff] %v3502
        %3599 = vst [vmem:[%s399 + $0x108] sm:$0xff] %v3503
        %3600 = vst [vmem:[%s399 + $0x110] sm:$0xff] %v3504
        %3601 = vst [vmem:[%s399 + $0x118] sm:$0xff] %v3505
        %3602 = vst [vmem:[%s399 + $0x120] sm:$0xff] %v3506
        %3603 = vst [vmem:[%s399 + $0x128] sm:$0xff] %v3507
        %3604 = vst [vmem:[%s399 + $0x130] sm:$0xff] %v3508
        %3605 = vst [vmem:[%s399 + $0x138] sm:$0xff] %v3509
        %3606 = vst [vmem:[%s399 + $0x140] sm:$0xff] %v3510
        %3607 = vst [vmem:[%s399 + $0x148] sm:$0xff] %v3511
        %3608 = vst [vmem:[%s399 + $0x150] sm:$0xff] %v3512
        %3609 = vst [vmem:[%s399 + $0x158] sm:$0xff] %v3513
        %3610 = vst [vmem:[%s399 + $0x160] sm:$0xff] %v3514
        %3611 = vst [vmem:[%s399 + $0x168] sm:$0xff] %v3515
        %3612 = vst [vmem:[%s399 + $0x170] sm:$0xff] %v3516
        %3613 = vst [vmem:[%s399 + $0x178] sm:$0xff] %v3517
        %3614 = vst [vmem:[%s399 + $0x180] sm:$0xff] %v3518
        %3615 = vst [vmem:[%s399 + $0x188] sm:$0xff] %v3519
        %3616 = vst [vmem:[%s399 + $0x190] sm:$0xff] %v3520
        %3617 = vst [vmem:[%s399 + $0x198] sm:$0xff] %v3521
        %3618 = vst [vmem:[%s399 + $0x1a0] sm:$0xff] %v3522
        %3619 = vst [vmem:[%s399 + $0x1a8] sm:$0xff] %v3523
        %3620 = vst [vmem:[%s399 + $0x1b0] sm:$0xff] %v3524
        %3621 = vst [vmem:[%s399 + $0x1b8] sm:$0xff] %v3525
        %3622 = vst [vmem:[%s399 + $0x1c0] sm:$0xff] %v3526
        %3623 = vst [vmem:[%s399 + $0x1c8] sm:$0xff] %v3527
        %3624 = vst [vmem:[%s399 + $0x1d0] sm:$0xff] %v3528
        %3625 = vst [vmem:[%s399 + $0x1d8] sm:$0xff] %v3529
        %3626 = vst [vmem:[%s399 + $0x1e0] sm:$0xff] %v3530
        %3627 = vst [vmem:[%s399 + $0x1e8] sm:$0xff] %v3531
        %3628 = vst [vmem:[%s399 + $0x1f0] sm:$0xff] %v3532
        %3629 = vst [vmem:[%s399 + $0x1f8] sm:$0xff] %v3533
        %3630 = vst [vmem:[%s399 + $0x200] sm:$0xff] %v3534
        %3631 = vst [vmem:[%s399 + $0x208] sm:$0xff] %v3535
        %3632 = vst [vmem:[%s399 + $0x210] sm:$0xff] %v3536
        %3633 = vst [vmem:[%s399 + $0x218] sm:$0xff] %v3537
        %3634 = vst [vmem:[%s399 + $0x220] sm:$0xff] %v3538
        %3635 = vst [vmem:[%s399 + $0x228] sm:$0xff] %v3539
        %3636 = vst [vmem:[%s399 + $0x230] sm:$0xff] %v3540
        %3637 = vst [vmem:[%s399 + $0x238] sm:$0xff] %v3541
        %3638 = vst [vmem:[%s399 + $0x240] sm:$0xff] %v3542
        %3639 = vst [vmem:[%s399 + $0x248] sm:$0xff] %v3543
        %3640 = vst [vmem:[%s399 + $0x250] sm:$0xff] %v3544
        %3641 = vst [vmem:[%s399 + $0x258] sm:$0xff] %v3545
        %3642 = vst [vmem:[%s399 + $0x260] sm:$0xff] %v3546
        %3643 = vst [vmem:[%s399 + $0x268] sm:$0xff] %v3547
        %3644 = vst [vmem:[%s399 + $0x270] sm:$0xff] %v3548
        %3645 = vst [vmem:[%s399 + $0x278] sm:$0xff] %v3549
        %3646 = vst [vmem:[%s399 + $0x280] sm:$0xff] %v3550
        %3647 = vst [vmem:[%s399 + $0x288] sm:$0xff] %v3551
        %3648 = vst [vmem:[%s399 + $0x290] sm:$0xff] %v3552
        %3649 = vst [vmem:[%s399 + $0x298] sm:$0xff] %v3553
        %3650 = vst [vmem:[%s399 + $0x2a0] sm:$0xff] %v3554
        %3651 = vst [vmem:[%s399 + $0x2a8] sm:$0xff] %v3555
        %3652 = vst [vmem:[%s399 + $0x2b0] sm:$0xff] %v3556
        %3653 = vst [vmem:[%s399 + $0x2b8] sm:$0xff] %v3557
        %3654 = vst [vmem:[%s399 + $0x2c0] sm:$0xff] %v3558
        %3655 = vst [vmem:[%s399 + $0x2c8] sm:$0xff] %v3559
        %3656 = vst [vmem:[%s399 + $0x2d0] sm:$0xff] %v3560
        %3657 = vst [vmem:[%s399 + $0x2d8] sm:$0xff] %v3561
        %3658 = vst [vmem:[%s399 + $0x2e0] sm:$0xff] %v3562
        %3659 = vst [vmem:[%s399 + $0x2e8] sm:$0xff] %v3563
        %3660 = vst [vmem:[%s399 + $0x2f0] sm:$0xff] %v3564
        %3661 = vst [vmem:[%s399 + $0x2f8] sm:$0xff] %v3565
        %s3662 = sand.u32 %s172, 1
        %s3663 = scalar_lea.sflag [#allocation4], %s3662
        %s3664 = sand.u32 %s172, 1
        %s3665 = smul.addr %s3664, 768
        %s3666 = scalar_lea.vmem [#allocation10], %s3665
        // Predicated region
        $region61: #{tpu_custom_call.1} parent=39 // pred_check
          %p3667 = pneg %p182
        $region62: #{tpu_custom_call.1} parent=39 // pred_check_branch
          %3669 = sbr.rel (%p3667) target = $region64
        $region63: #{tpu_custom_call.1} parent=39 // pred_region
          %s3670 = smul.u32 32, %s27
          %3672 = vsyncadd %s3663, 0
          %s3673 = smul.addr %s3670, 6
          %s3674 = smul.addr %s28, 384
          %s3675 = sadd.s32 %s3673, %s3674
          %s3676 = smul.addr %s3675, 4
          %s3677 = scalar_lea.hbm %s5, %s3676
          %s3678 = sshll.u32 %s3666, 4
          %s3679 = int_to_ptr.vmem [resolvable:$true] %s3678
          %s3680 = sshll.u32 %s3677, 4
          %s3681 = int_to_ptr.hbm [resolvable:$true] %s3680
          %3686 = dma.vmem_to_hbm [thread:$0]  %s3679, 12288, %s3681, %s3663, 384, 384, 24
        $region64: #{tpu_custom_call.1} parent=39 // pred_fallthru
          _
      $region40: #{tpu_custom_call.1} parent=5 // pred_fallthru
        _
      %p3687 = scmp.le.s32.totalorder 2, %s18
      // Predicated region
      $region65: #{tpu_custom_call.1} parent=5 // pred_check
        %p3688 = pneg %p3687
      $region66: #{tpu_custom_call.1} parent=5 // pred_check_branch
        %3690 = sbr.rel (%p3688) target = $region68
      $region67: #{tpu_custom_call.1} parent=5 // pred_region
        %s3691 = ssub.s32 %s18, 2
        // Predicated region
        $region69: #{tpu_custom_call.1} parent=67 // pred_check
          %p3692 = pneg %p188
        $region70: #{tpu_custom_call.1} parent=67 // pred_check_branch
          %3694 = sbr.rel (%p3692) target = $region72
        $region71: #{tpu_custom_call.1} parent=67 // pred_region
          %s3695 = sand.u32 %s173, 1
          %s3696 = scalar_lea.sflag [#allocation4], %s3695
          %s3697 = sand.u32 %s173, 1
          %s3698 = smul.addr %s3697, 768
          %s3699 = scalar_lea.vmem [#allocation10], %s3698
          %3701 = dma.done %s3696, 12288
        $region72: #{tpu_custom_call.1} parent=67 // pred_fallthru
          _
      $region68: #{tpu_custom_call.1} parent=5 // pred_fallthru
        _
    $region6: #{tpu_custom_call.1} parent=1 // loop_footer
      %s22 = sadd.s32 1, %s18
    $region7: #{tpu_custom_call.1} parent=1 // loop_footer_branch
      %17 = sbr.rel target = $region3
    $region8: #{tpu_custom_call.1} parent=1 // loop_exit
      _
    %3702 = vsyncpa [#allocation3], 1
    %s3703 = scalar_lea.sflag [#allocation3], 1
    %3704 = vsyncpa %s3703, 1
    %3705 = vsyncpa [#allocation6], 1
    %3706 = vsyncpa [#allocation4], 1
    %s3707 = scalar_lea.sflag [#allocation4], 1
    %3708 = vsyncpa %s3707, 1

</llo_original>
